<compile_context>
chip_gen: v7x
topology: tpu7x:2x2x1
jax: 0.10.0
libtpu: 0.0.40
codegen_flags: <defaults>
</compile_context>

<pallas_src>
import math

import jax
import jax.numpy as jnp
from jax.experimental import pallas as pl
from jax.experimental.pallas import tpu as pltpu

# Small synthetic RoBERTa config (roberta-base shrunk down).
B_ = 2       # batch
S_ = 8       # sequence length
D_ = 32      # hidden size
H_ = 4       # attention heads
DH_ = D_ // H_
DFF_ = 64    # intermediate (FFN) size
R_ = 4       # LoRA rank
L_ = 2       # encoder layers
C_ = 3       # num_classes (squad_v2-style head: start / end / no-answer)
CPAD_ = 128  # lane-dense padded classifier width
V_ = 100     # vocab size
PAD_ID = 1   # RoBERTa padding_idx
LN_EPS = 1e-5
NEG_INF = -1e9


# ---------------------------------------------------------------------------
# In-kernel helpers
# ---------------------------------------------------------------------------
def _layernorm(x, g, b):
    mu = jnp.mean(x, axis=-1, keepdims=True)
    var = jnp.mean((x - mu) ** 2, axis=-1, keepdims=True)
    return (x - mu) * jax.lax.rsqrt(var + LN_EPS) * g + b


# ---------------------------------------------------------------------------
# Fused kernel body: one encoder layer per grid step, hidden state in VMEM scratch
# ---------------------------------------------------------------------------
def fused_encoder_kernel(
    # resident inputs (block index constant across the grid)
    emb_ref, mask_ref,                    # (B,S,D) f32 ; (B,1,S) additive mask bias f32
    eg_ref, eb_ref,                       # embedding LayerNorm gamma/beta (1,D)
    # per-layer streamed inputs (leading L dim squeezed away by the BlockSpec)
    wqkv_ref, bqkv_ref,                   # fused QKV: (D,3D) bf16 ; (1,3D) f32
    wo_ref, bo_ref,                       # attention output proj: (D,D) bf16 ; (1,D) f32
    ln1g_ref, ln1b_ref,                   # attn-output LayerNorm (1,D)
    wi_ref, bi_ref, wf_ref, bf_ref,       # FFN: (D,DFF)/(DFF,D) bf16 ; biases f32
    ln2g_ref, ln2b_ref,                   # FFN-output LayerNorm (1,D)
    # resident head params
    hg_ref, hb_ref, hw_ref, hbias_ref,    # head LN (1,D) ; padded classifier (D,128) bf16 / (1,128)
    # output
    out_ref,                              # (B,S,128) f32 lane-dense padded logits
    # scratch
    h_ref,                                # (B*S, D) f32 persistent hidden state
):
    l = pl.program_id(0)
    n_layers = pl.num_programs(0)
    Bc, Sc, D = emb_ref.shape
    M = Bc * Sc
    f32, bf16 = jnp.float32, jnp.bfloat16

    def mm(a_bf16, w_ref):  # bf16 MXU operands, f32 accumulation
        return jnp.dot(a_bf16, w_ref[...], preferred_element_type=f32)

    # --- first grid step: seed the persistent hidden state from the embedding LayerNorm ---
    @pl.when(l == 0)
    def _():
        h_ref[...] = _layernorm(emb_ref[...].reshape(M, D), eg_ref[...], eb_ref[...])

    h = h_ref[...]                               # (M, D) f32
    h_bf = h.astype(bf16)                        # cast once; reused by the fused QKV matmul

    # --- fused Q/K/V projection (LoRA already folded into the weights, wrapper side) ---
    qkv = mm(h_bf, wqkv_ref) + bqkv_ref[...]     # (M, 3D) f32

    def split_heads(t):
        # (M, D) -> (H*B, S, Dh): one reshape + one leading-axis transpose per tensor
        # (no per-head lane-slice stack).  Batch axis is head-major: index = h*B + b.
        return jnp.swapaxes(t.reshape(M, H_, DH_), 0, 1).reshape(H_ * Bc, Sc, DH_)

    q_hb = split_heads(qkv[:, 0 * D:1 * D]).astype(bf16)
    k_hb = split_heads(qkv[:, 1 * D:2 * D]).astype(bf16)
    v_hb = split_heads(qkv[:, 2 * D:3 * D]).astype(bf16)

    # Additive mask broadcast over heads in-kernel (wrapper only ships (B,1,S)).
    mask_hb = jnp.broadcast_to(mask_ref[...][None], (H_, Bc, 1, Sc)).reshape(H_ * Bc, 1, Sc)

    # --- scaled-dot-product attention, batched over (head, batch) ---
    inv_sqrt = 1.0 / math.sqrt(DH_)
    s = jnp.einsum('bqd,bkd->bqk', q_hb, k_hb,
                   preferred_element_type=f32) * inv_sqrt + mask_hb        # (H*B, S, S) f32
    mx = jnp.max(s, axis=-1, keepdims=True)
    e = jnp.exp(s - mx)
    p = e * pl.reciprocal(jnp.sum(e, axis=-1, keepdims=True), approx=True)
    ctx = jnp.einsum('bqk,bkd->bqd', p.astype(bf16), v_hb,
                     preferred_element_type=f32)                           # (H*B, S, Dh) f32

    # --- recombine heads onto the lane axis (one transpose) and run ONE full-K Wo matmul ---
    ctx_m = jnp.swapaxes(ctx.reshape(H_, M, DH_), 0, 1).reshape(M, D)      # (M, D) f32
    attn_out = mm(ctx_m.astype(bf16), wo_ref) + bo_ref[...]                # (M, D) f32

    # RobertaSelfOutput: dense + residual + LayerNorm (dropout identity).
    h1 = _layernorm(attn_out + h, ln1g_ref[...], ln1b_ref[...])

    # RobertaIntermediate / RobertaOutput (FFN); elementwise math kept in f32.
    inter = jax.nn.gelu(mm(h1.astype(bf16), wi_ref) + bi_ref[...], approximate=True)
    ffn = mm(inter.astype(bf16), wf_ref) + bf_ref[...]
    h_new = _layernorm(ffn + h1, ln2g_ref[...], ln2b_ref[...])
    h_ref[...] = h_new

    # --- last grid step: fine_tune_head (LayerNorm -> dropout identity -> padded classifier) ---
    @pl.when(l == n_layers - 1)
    def _():
        hc = _layernorm(h_new, hg_ref[...], hb_ref[...])
        logits = mm(hc.astype(bf16), hw_ref) + hbias_ref[...]              # (M, 128) f32
        out_ref[...] = logits.reshape(Bc, Sc, CPAD_)


# ---------------------------------------------------------------------------
# Parameter init (deterministic, synthetic, mirrors the PyTorch module layout)
# ---------------------------------------------------------------------------
def init_params(key):
    keys = jax.random.split(key, 128)
    it = iter(keys)

    def nrm(shape, scale=0.02):
        return (scale * jax.random.normal(next(it), shape)).astype(jnp.float32)

    max_pos = S_ + 4  # position ids go up to PAD_ID + S_
    params = {
        'word_emb': nrm((V_, D_)),
        'pos_emb': nrm((max_pos, D_)),
        'tok_emb': nrm((1, D_)),                 # token_type vocab size 1
        'emb_ln_g': jnp.ones((1, D_), jnp.float32),
        'emb_ln_b': jnp.zeros((1, D_), jnp.float32),
        'head_ln_g': jnp.ones((1, D_), jnp.float32),
        'head_ln_b': jnp.zeros((1, D_), jnp.float32),
        'head_w': nrm((D_, C_)),
        'head_b': jnp.zeros((1, C_), jnp.float32),
        'layers': [],
    }
    for _ in range(L_):
        lp = {
            'wq': nrm((D_, D_)), 'bq': nrm((1, D_)),
            # LoRA A^T [D, r] (torch: rand), B^T [r, D] (torch init is zeros;
            # small nonzero values here so the LoRA path is numerically exercised).
            'aqT': nrm((D_, R_), 1.0), 'bqT': nrm((R_, D_)),
            'wk': nrm((D_, D_)), 'bk': nrm((1, D_)),
            'akT': nrm((D_, R_), 1.0), 'bkT': nrm((R_, D_)),
            'wo': nrm((D_, D_)), 'bo': nrm((1, D_)),
            'ln1g': jnp.ones((1, D_), jnp.float32),
            'ln1b': jnp.zeros((1, D_), jnp.float32),
            'wi': nrm((D_, DFF_)), 'bi': nrm((1, DFF_)),
            'wf': nrm((DFF_, D_)), 'bf': nrm((1, D_)),
            'ln2g': jnp.ones((1, D_), jnp.float32),
            'ln2b': jnp.zeros((1, D_), jnp.float32),
        }
        params['layers'].append(lp)
    return params


# ---------------------------------------------------------------------------
# One-time inference preparation: fold LoRA, fuse QKV, stack layers, bf16, pad head
# ---------------------------------------------------------------------------
def prepare_inference_params(params):
    f32, bf16 = jnp.float32, jnp.bfloat16
    layers = params['layers']

    def stack(fn, dtype=f32):
        return jnp.stack([fn(lp) for lp in layers], axis=0).astype(dtype)

    prep = {
        'word_emb': params['word_emb'],
        'pos_emb': params['pos_emb'],
        'tok_emb': params['tok_emb'],
        'emb_ln_g': params['emb_ln_g'], 'emb_ln_b': params['emb_ln_b'],
        # Fused QKV with LoRA folded in (x @ W convention, so the LoRA delta is A^T @ B^T).
        # Query: W_q + A_q^T B_q^T.  Key: W_k.  "Value" (module quirk): W_k + A_k^T B_k^T, b_v=b_k.
        'wqkv': stack(lambda lp: jnp.concatenate(
            [lp['wq'] + lp['aqT'] @ lp['bqT'],
             lp['wk'],
             lp['wk'] + lp['akT'] @ lp['bkT']], axis=1), bf16),          # (L, D, 3D)
        'bqkv': stack(lambda lp: jnp.concatenate(
            [lp['bq'], lp['bk'], lp['bk']], axis=1)),                    # (L, 1, 3D)
        'wo': stack(lambda lp: lp['wo'], bf16),                          # (L, D, D) un-split
        'bo': stack(lambda lp: lp['bo']),
        'ln1g': stack(lambda lp: lp['ln1g']), 'ln1b': stack(lambda lp: lp['ln1b']),
        'wi': stack(lambda lp: lp['wi'], bf16), 'bi': stack(lambda lp: lp['bi']),
        'wf': stack(lambda lp: lp['wf'], bf16), 'bf': stack(lambda lp: lp['bf']),
        'ln2g': stack(lambda lp: lp['ln2g']), 'ln2b': stack(lambda lp: lp['ln2b']),
        'head_ln_g': params['head_ln_g'], 'head_ln_b': params['head_ln_b'],
        # Lane-dense padded classifier (first C_ columns are the real logits).
        'head_w': jnp.zeros((D_, CPAD_), f32).at[:, :C_].set(params['head_w']).astype(bf16),
        'head_b': jnp.zeros((1, CPAD_), f32).at[:, :C_].set(params['head_b']),
    }
    return prep


# ---------------------------------------------------------------------------
# Full forward (glue: embedding gathers, mask prep, gridded fused kernel, logit split)
# ---------------------------------------------------------------------------
@jax.jit
def forward(prep, input_ids, attention_mask):
    B, S = input_ids.shape
    M = B * S

    # RoBERTa position ids: cumsum over non-pad tokens, offset by padding_idx.
    nonpad = (input_ids != PAD_ID).astype(jnp.int32)
    position_ids = jnp.cumsum(nonpad, axis=1) * nonpad + PAD_ID

    # Embedding lookups are gathers -> plain JAX glue outside the kernel.
    emb = (prep['word_emb'][input_ids]
           + prep['pos_emb'][position_ids]
           + prep['tok_emb'][0][None, None, :]).astype(jnp.float32)

    # Additive attention mask, (B, 1, S); broadcast over heads happens inside the kernel.
    mask_bias = ((1.0 - attention_mask.astype(jnp.float32)) * NEG_INF)[:, None, :]

    args = (emb, mask_bias,
            prep['emb_ln_g'], prep['emb_ln_b'],
            prep['wqkv'], prep['bqkv'], prep['wo'], prep['bo'],
            prep['ln1g'], prep['ln1b'],
            prep['wi'], prep['bi'], prep['wf'], prep['bf'],
            prep['ln2g'], prep['ln2b'],
            prep['head_ln_g'], prep['head_ln_b'], prep['head_w'], prep['head_b'])

    res2 = lambda l: (0, 0)          # resident 2-D params
    res3 = lambda l: (0, 0, 0)       # resident 3-D tensors
    perl = lambda l: (l, 0, 0)       # per-layer streamed (leading L dim squeezed)

    in_specs = [
        pl.BlockSpec((B, S, D_), res3),              # emb
        pl.BlockSpec((B, 1, S), res3),               # mask bias
        pl.BlockSpec((1, D_), res2),                 # emb LN gamma
        pl.BlockSpec((1, D_), res2),                 # emb LN beta
        pl.BlockSpec((None, D_, 3 * D_), perl),      # wqkv
        pl.BlockSpec((None, 1, 3 * D_), perl),       # bqkv
        pl.BlockSpec((None, D_, D_), perl),          # wo
        pl.BlockSpec((None, 1, D_), perl),           # bo
        pl.BlockSpec((None, 1, D_), perl),           # ln1 gamma
        pl.BlockSpec((None, 1, D_), perl),           # ln1 beta
        pl.BlockSpec((None, D_, DFF_), perl),        # wi
        pl.BlockSpec((None, 1, DFF_), perl),         # bi
        pl.BlockSpec((None, DFF_, D_), perl),        # wf
        pl.BlockSpec((None, 1, D_), perl),           # bf
        pl.BlockSpec((None, 1, D_), perl),           # ln2 gamma
        pl.BlockSpec((None, 1, D_), perl),           # ln2 beta
        pl.BlockSpec((1, D_), res2),                 # head LN gamma
        pl.BlockSpec((1, D_), res2),                 # head LN beta
        pl.BlockSpec((D_, CPAD_), res2),             # padded classifier weight
        pl.BlockSpec((1, CPAD_), res2),              # padded classifier bias
    ]

    grid_spec = pltpu.PrefetchScalarGridSpec(
        num_scalar_prefetch=0,
        grid=(L_,),
        in_specs=in_specs,
        out_specs=pl.BlockSpec((B, S, CPAD_), lambda l: (0, 0, 0)),
        scratch_shapes=[pltpu.VMEM((M, D_), jnp.float32)],   # persistent hidden state
    )

    # Advisory cost estimate for XLA scheduling around the fused call.
    flops_layer = (2 * M * D_ * (3 * D_)          # fused QKV
                   + 4 * H_ * B * S * S * DH_     # attention (scores + context)
                   + 2 * M * D_ * D_              # Wo
                   + 4 * M * D_ * DFF_)           # FFN (wi + wf)
    flops = L_ * flops_layer + 2 * M * D_ * CPAD_
    transcendentals = L_ * (H_ * B * S * S + M * DFF_)
    bytes_accessed = sum(a.size * a.dtype.itemsize for a in args) + M * CPAD_ * 4

    padded_logits = pl.pallas_call(
        fused_encoder_kernel,
        out_shape=jax.ShapeDtypeStruct((B, S, CPAD_), jnp.float32),
        grid_spec=grid_spec,
        compiler_params=pltpu.CompilerParams(
            dimension_semantics=("arbitrary",),          # layer axis carries the hidden state
            vmem_limit_bytes=32 * 1024 * 1024,           # safe on v5e/v6e/v7x; toy buffers are tiny
        ),
        cost_estimate=pl.CostEstimate(
            flops=flops, transcendentals=transcendentals, bytes_accessed=bytes_accessed),
    )(*args)

    logits = padded_logits[..., :C_]          # (B, S, 3)
    start_logits = logits[..., 0]             # (B, S)
    end_logits = logits[..., 1]               # (B, S)
    na_prob_logits = logits[..., 2][:, 0]     # (B,)
    return start_logits, end_logits, na_prob_logits


if __name__ == "__main__":
    root_key = jax.random.PRNGKey(0)
    pkey, ikey = jax.random.split(root_key)
    params = init_params(pkey)
    prep = prepare_inference_params(params)

    input_ids = jax.random.randint(ikey, (B_, S_), 3, V_, dtype=jnp.int32)
    attention_mask = jnp.ones((B_, S_), dtype=jnp.int32)

    start_logits, end_logits, na_prob_logits = forward(prep, input_ids, attention_mask)
    jax.block_until_ready((start_logits, end_logits, na_prob_logits))

    assert start_logits.shape == (B_, S_)
    assert end_logits.shape == (B_, S_)
    assert na_prob_logits.shape == (B_,)
    assert jnp.all(jnp.isfinite(start_logits))
    assert jnp.all(jnp.isfinite(end_logits))
    assert jnp.all(jnp.isfinite(na_prob_logits))
    print("KERNEL_OK")
</pallas_src>

<mosaic_0001>
module attributes {stable_mosaic.version = 11 : i64} {
  func.func @fused_encoder_kernel(%arg0: i32, %arg1: memref<2x8x32xf32, #tpu.memory_space<vmem>>, %arg2: memref<2x1x8xf32, #tpu.memory_space<vmem>>, %arg3: memref<1x32xf32, #tpu.memory_space<vmem>>, %arg4: memref<1x32xf32, #tpu.memory_space<vmem>>, %arg5: memref<1x32x96xbf16, #tpu.memory_space<vmem>>, %arg6: memref<1x1x96xf32, #tpu.memory_space<vmem>>, %arg7: memref<1x32x32xbf16, #tpu.memory_space<vmem>>, %arg8: memref<1x1x32xf32, #tpu.memory_space<vmem>>, %arg9: memref<1x1x32xf32, #tpu.memory_space<vmem>>, %arg10: memref<1x1x32xf32, #tpu.memory_space<vmem>>, %arg11: memref<1x32x64xbf16, #tpu.memory_space<vmem>>, %arg12: memref<1x1x64xf32, #tpu.memory_space<vmem>>, %arg13: memref<1x64x32xbf16, #tpu.memory_space<vmem>>, %arg14: memref<1x1x32xf32, #tpu.memory_space<vmem>>, %arg15: memref<1x1x32xf32, #tpu.memory_space<vmem>>, %arg16: memref<1x1x32xf32, #tpu.memory_space<vmem>>, %arg17: memref<1x32xf32, #tpu.memory_space<vmem>>, %arg18: memref<1x32xf32, #tpu.memory_space<vmem>>, %arg19: memref<32x128xbf16, #tpu.memory_space<vmem>>, %arg20: memref<1x128xf32, #tpu.memory_space<vmem>>, %arg21: memref<2x8x128xf32, #tpu.memory_space<vmem>>, %arg22: memref<16x32xf32, #tpu.memory_space<vmem>>) attributes {dimension_semantics = [#tpu.dimension_semantics<arbitrary>], iteration_bounds = array<i64: 2>, scalar_prefetch = 0 : i64, scratch_operands = 1 : i64, tpu.core_type = #tpu.core_type<tc>, window_params = [{pipeline_mode = #tpu.pipeline_mode<synchronous>, transform_indices = @transform_0, window_bounds = array<i64: 2, 8, 32>}, {pipeline_mode = #tpu.pipeline_mode<synchronous>, transform_indices = @transform_1, window_bounds = array<i64: 2, 1, 8>}, {pipeline_mode = #tpu.pipeline_mode<synchronous>, transform_indices = @transform_2, window_bounds = array<i64: 1, 32>}, {pipeline_mode = #tpu.pipeline_mode<synchronous>, transform_indices = @transform_3, window_bounds = array<i64: 1, 32>}, {transform_indices = @transform_4, window_bounds = array<i64: 1, 32, 96>}, {transform_indices = @transform_5, window_bounds = array<i64: 1, 1, 96>}, {transform_indices = @transform_6, window_bounds = array<i64: 1, 32, 32>}, {transform_indices = @transform_7, window_bounds = array<i64: 1, 1, 32>}, {transform_indices = @transform_8, window_bounds = array<i64: 1, 1, 32>}, {transform_indices = @transform_9, window_bounds = array<i64: 1, 1, 32>}, {transform_indices = @transform_10, window_bounds = array<i64: 1, 32, 64>}, {transform_indices = @transform_11, window_bounds = array<i64: 1, 1, 64>}, {transform_indices = @transform_12, window_bounds = array<i64: 1, 64, 32>}, {transform_indices = @transform_13, window_bounds = array<i64: 1, 1, 32>}, {transform_indices = @transform_14, window_bounds = array<i64: 1, 1, 32>}, {transform_indices = @transform_15, window_bounds = array<i64: 1, 1, 32>}, {pipeline_mode = #tpu.pipeline_mode<synchronous>, transform_indices = @transform_16, window_bounds = array<i64: 1, 32>}, {pipeline_mode = #tpu.pipeline_mode<synchronous>, transform_indices = @transform_17, window_bounds = array<i64: 1, 32>}, {pipeline_mode = #tpu.pipeline_mode<synchronous>, transform_indices = @transform_18, window_bounds = array<i64: 32, 128>}, {pipeline_mode = #tpu.pipeline_mode<synchronous>, transform_indices = @transform_19, window_bounds = array<i64: 1, 128>}, {pipeline_mode = #tpu.pipeline_mode<synchronous>, transform_indices = @transform_20, window_bounds = array<i64: 2, 8, 128>}]} {
    %c0_i32 = arith.constant 0 : i32
    %0 = arith.cmpi eq, %arg0, %c0_i32 : i32
    %1 = arith.extui %0 : i1 to i32
    %c0_i32_0 = arith.constant 0 : i32
    %2 = arith.cmpi ne, %1, %c0_i32_0 : i32
    scf.if %2 {
      %c0_66 = arith.constant 0 : index
      %c0_67 = arith.constant 0 : index
      %c0_68 = arith.constant 0 : index
      %147 = vector.load %arg1[%c0_66, %c0_67, %c0_68] : memref<2x8x32xf32, #tpu.memory_space<vmem>>, vector<2x8x32xf32>
      %148 = vector.shape_cast %147 : vector<2x8x32xf32> to vector<16x32xf32>
      %c0_69 = arith.constant 0 : index
      %c0_70 = arith.constant 0 : index
      %149 = vector.load %arg3[%c0_69, %c0_70] : memref<1x32xf32, #tpu.memory_space<vmem>>, vector<1x32xf32>
      %c0_71 = arith.constant 0 : index
      %c0_72 = arith.constant 0 : index
      %150 = vector.load %arg4[%c0_71, %c0_72] : memref<1x32xf32, #tpu.memory_space<vmem>>, vector<1x32xf32>
      %cst_73 = arith.constant dense<0.000000e+00> : vector<16xf32>
      %151 = vector.multi_reduction <add>, %148, %cst_73 [1] : vector<16x32xf32> to vector<16xf32>
      %152 = vector.shape_cast %151 : vector<16xf32> to vector<16x1xf32>
      %cst_74 = arith.constant 3.200000e+01 : f32
      %153 = vector.broadcast %cst_74 : f32 to vector<16x1xf32>
      %154 = arith.divf %152, %153 : vector<16x1xf32>
      %155 = vector.broadcast %154 : vector<16x1xf32> to vector<16x32xf32>
      %156 = arith.subf %148, %155 : vector<16x32xf32>
      %157 = arith.mulf %156, %156 : vector<16x32xf32>
      %cst_75 = arith.constant dense<0.000000e+00> : vector<16xf32>
      %158 = vector.multi_reduction <add>, %157, %cst_75 [1] : vector<16x32xf32> to vector<16xf32>
      %159 = vector.shape_cast %158 : vector<16xf32> to vector<16x1xf32>
      %cst_76 = arith.constant 3.200000e+01 : f32
      %160 = vector.broadcast %cst_76 : f32 to vector<16x1xf32>
      %161 = arith.divf %159, %160 : vector<16x1xf32>
      %162 = vector.broadcast %154 : vector<16x1xf32> to vector<16x32xf32>
      %163 = arith.subf %148, %162 : vector<16x32xf32>
      %cst_77 = arith.constant 9.99999974E-6 : f32
      %164 = vector.broadcast %cst_77 : f32 to vector<16x1xf32>
      %165 = arith.addf %161, %164 : vector<16x1xf32>
      %166 = math.rsqrt %165 : vector<16x1xf32>
      %167 = vector.broadcast %166 : vector<16x1xf32> to vector<16x32xf32>
      %168 = arith.mulf %163, %167 : vector<16x32xf32>
      %169 = vector.broadcast %149 : vector<1x32xf32> to vector<16x32xf32>
      %170 = arith.mulf %168, %169 : vector<16x32xf32>
      %171 = vector.broadcast %150 : vector<1x32xf32> to vector<16x32xf32>
      %172 = arith.addf %170, %171 : vector<16x32xf32>
      %c0_78 = arith.constant 0 : index
      %c0_79 = arith.constant 0 : index
      %173 = vector.load %arg22[%c0_78, %c0_79] : memref<16x32xf32, #tpu.memory_space<vmem>>, vector<16x32xf32>
      tpu.vector_store %arg22[%c0_78, %c0_79], %172 {strides = array<i32>} : memref<16x32xf32, #tpu.memory_space<vmem>>, vector<16x32xf32>,
    } else {
    }
    %c0 = arith.constant 0 : index
    %c0_1 = arith.constant 0 : index
    %3 = vector.load %arg22[%c0, %c0_1] : memref<16x32xf32, #tpu.memory_space<vmem>>, vector<16x32xf32>
    %4 = arith.truncf %3 : vector<16x32xf32> to vector<16x32xbf16>
    %c0_2 = arith.constant 0 : index
    %c0_3 = arith.constant 0 : index
    %c0_4 = arith.constant 0 : index
    %5 = vector.load %arg5[%c0_2, %c0_3, %c0_4] : memref<1x32x96xbf16, #tpu.memory_space<vmem>>, vector<1x32x96xbf16>
    %6 = vector.shape_cast %5 : vector<1x32x96xbf16> to vector<32x96xbf16>
    %cst = arith.constant dense<0.000000e+00> : vector<16x96xf32>
    %7 = tpu.matmul %4, %6, %cst {dimension_numbers = #tpu.dot_dimension_numbers<[1], [0], [0], [1], [0, 0, 1, 1], [], []>} : vector<16x32xbf16>, vector<32x96xbf16>, vector<16x96xf32> -> vector<16x96xf32>
    %c0_5 = arith.constant 0 : index
    %c0_6 = arith.constant 0 : index
    %c0_7 = arith.constant 0 : index
    %8 = vector.load %arg6[%c0_5, %c0_6, %c0_7] : memref<1x1x96xf32, #tpu.memory_space<vmem>>, vector<1x1x96xf32>
    %9 = vector.shape_cast %8 : vector<1x1x96xf32> to vector<1x96xf32>
    %10 = vector.broadcast %9 : vector<1x96xf32> to vector<16x96xf32>
    %11 = arith.addf %7, %10 : vector<16x96xf32>
    %12 = vector.extract_strided_slice %11 {offsets = [0, 0], sizes = [16, 32], strides = [1, 1]} : vector<16x96xf32> to vector<16x32xf32>
    %13 = vector.shape_cast %12 : vector<16x32xf32> to vector<16x4x8xf32>
    %14 = tpu.transpose %13, [1, 0, 2] : vector<16x4x8xf32> -> vector<4x16x8xf32>
    %15 = vector.shape_cast %14 : vector<4x16x8xf32> to vector<8x8x8xf32>
    %16 = arith.truncf %15 : vector<8x8x8xf32> to vector<8x8x8xbf16>
    %17 = vector.extract_strided_slice %11 {offsets = [0, 32], sizes = [16, 32], strides = [1, 1]} : vector<16x96xf32> to vector<16x32xf32>
    %18 = vector.shape_cast %17 : vector<16x32xf32> to vector<16x4x8xf32>
    %19 = tpu.transpose %18, [1, 0, 2] : vector<16x4x8xf32> -> vector<4x16x8xf32>
    %20 = vector.shape_cast %19 : vector<4x16x8xf32> to vector<8x8x8xf32>
    %21 = arith.truncf %20 : vector<8x8x8xf32> to vector<8x8x8xbf16>
    %22 = vector.extract_strided_slice %11 {offsets = [0, 64], sizes = [16, 32], strides = [1, 1]} : vector<16x96xf32> to vector<16x32xf32>
    %23 = vector.shape_cast %22 : vector<16x32xf32> to vector<16x4x8xf32>
    %24 = tpu.transpose %23, [1, 0, 2] : vector<16x4x8xf32> -> vector<4x16x8xf32>
    %25 = vector.shape_cast %24 : vector<4x16x8xf32> to vector<8x8x8xf32>
    %26 = arith.truncf %25 : vector<8x8x8xf32> to vector<8x8x8xbf16>
    %c0_8 = arith.constant 0 : index
    %c0_9 = arith.constant 0 : index
    %c0_10 = arith.constant 0 : index
    %27 = vector.load %arg2[%c0_8, %c0_9, %c0_10] : memref<2x1x8xf32, #tpu.memory_space<vmem>>, vector<2x1x8xf32>
    %28 = vector.shape_cast %27 : vector<2x1x8xf32> to vector<1x2x1x8xf32>
    %29 = vector.shape_cast %28 : vector<1x2x1x8xf32> to vector<1x2x1x8xf32>
    %30 = vector.broadcast %29 : vector<1x2x1x8xf32> to vector<4x2x1x8xf32>
    %31 = vector.shape_cast %30 : vector<4x2x1x8xf32> to vector<8x1x8xf32>
    "tpu.trace_start"() <{level = 10 : i32, message = "bqd,bkd->bqk"}> : () -> ()
    %cst_11 = arith.constant dense<0.000000e+00> : vector<8x8x8xf32>
    %32 = tpu.matmul %16, %21, %cst_11 {dimension_numbers = #tpu.dot_dimension_numbers<[2], [2], [1], [1], [0, 0, 0, 1, 1, 1], [0], [0]>} : vector<8x8x8xbf16>, vector<8x8x8xbf16>, vector<8x8x8xf32> -> vector<8x8x8xf32>
    "tpu.trace_stop"() : () -> ()
    %cst_12 = arith.constant 0.353553385 : f32
    %33 = vector.broadcast %cst_12 : f32 to vector<8x8x8xf32>
    %34 = arith.mulf %32, %33 : vector<8x8x8xf32>
    %35 = vector.broadcast %31 : vector<8x1x8xf32> to vector<8x8x8xf32>
    %36 = arith.addf %34, %35 : vector<8x8x8xf32>
    %cst_13 = arith.constant dense<0xFF800000> : vector<8x8xf32>
    %37 = vector.multi_reduction <maximumf>, %36, %cst_13 [2] : vector<8x8x8xf32> to vector<8x8xf32>
    %38 = vector.shape_cast %37 : vector<8x8xf32> to vector<8x8x1xf32>
    %39 = vector.broadcast %38 : vector<8x8x1xf32> to vector<8x8x8xf32>
    %40 = arith.subf %36, %39 : vector<8x8x8xf32>
    %41 = math.exp %40 : vector<8x8x8xf32>
    %cst_14 = arith.constant dense<0.000000e+00> : vector<8x8xf32>
    %42 = vector.multi_reduction <add>, %41, %cst_14 [2] : vector<8x8x8xf32> to vector<8x8xf32>
    %43 = vector.shape_cast %42 : vector<8x8xf32> to vector<8x8x1xf32>
    %44 = tpu.reciprocal %43 {approx = true} : vector<8x8x1xf32> -> vector<8x8x1xf32>
    %45 = vector.broadcast %44 : vector<8x8x1xf32> to vector<8x8x8xf32>
    %46 = arith.mulf %41, %45 : vector<8x8x8xf32>
    %47 = arith.truncf %46 : vector<8x8x8xf32> to vector<8x8x8xbf16>
    "tpu.trace_start"() <{level = 10 : i32, message = "bqk,bkd->bqd"}> : () -> ()
    %cst_15 = arith.constant dense<0.000000e+00> : vector<8x8x8xf32>
    %48 = tpu.matmul %47, %26, %cst_15 {dimension_numbers = #tpu.dot_dimension_numbers<[2], [1], [1], [2], [0, 0, 0, 1, 1, 2], [0], [0]>} : vector<8x8x8xbf16>, vector<8x8x8xbf16>, vector<8x8x8xf32> -> vector<8x8x8xf32>
    "tpu.trace_stop"() : () -> ()
    %49 = vector.shape_cast %48 : vector<8x8x8xf32> to vector<4x16x8xf32>
    %50 = tpu.transpose %49, [1, 0, 2] : vector<4x16x8xf32> -> vector<16x4x8xf32>
    %51 = vector.shape_cast %50 : vector<16x4x8xf32> to vector<16x32xf32>
    %52 = arith.truncf %51 : vector<16x32xf32> to vector<16x32xbf16>
    %c0_16 = arith.constant 0 : index
    %c0_17 = arith.constant 0 : index
    %c0_18 = arith.constant 0 : index
    %53 = vector.load %arg7[%c0_16, %c0_17, %c0_18] : memref<1x32x32xbf16, #tpu.memory_space<vmem>>, vector<1x32x32xbf16>
    %54 = vector.shape_cast %53 : vector<1x32x32xbf16> to vector<32x32xbf16>
    %cst_19 = arith.constant dense<0.000000e+00> : vector<16x32xf32>
    %55 = tpu.matmul %52, %54, %cst_19 {dimension_numbers = #tpu.dot_dimension_numbers<[1], [0], [0], [1], [0, 0, 1, 1], [], []>} : vector<16x32xbf16>, vector<32x32xbf16>, vector<16x32xf32> -> vector<16x32xf32>
    %c0_20 = arith.constant 0 : index
    %c0_21 = arith.constant 0 : index
    %c0_22 = arith.constant 0 : index
    %56 = vector.load %arg8[%c0_20, %c0_21, %c0_22] : memref<1x1x32xf32, #tpu.memory_space<vmem>>, vector<1x1x32xf32>
    %57 = vector.shape_cast %56 : vector<1x1x32xf32> to vector<1x32xf32>
    %58 = vector.broadcast %57 : vector<1x32xf32> to vector<16x32xf32>
    %59 = arith.addf %55, %58 : vector<16x32xf32>
    %60 = arith.addf %59, %3 : vector<16x32xf32>
    %c0_23 = arith.constant 0 : index
    %c0_24 = arith.constant 0 : index
    %c0_25 = arith.constant 0 : index
    %61 = vector.load %arg9[%c0_23, %c0_24, %c0_25] : memref<1x1x32xf32, #tpu.memory_space<vmem>>, vector<1x1x32xf32>
    %62 = vector.shape_cast %61 : vector<1x1x32xf32> to vector<1x32xf32>
    %c0_26 = arith.constant 0 : index
    %c0_27 = arith.constant 0 : index
    %c0_28 = arith.constant 0 : index
    %63 = vector.load %arg10[%c0_26, %c0_27, %c0_28] : memref<1x1x32xf32, #tpu.memory_space<vmem>>, vector<1x1x32xf32>
    %64 = vector.shape_cast %63 : vector<1x1x32xf32> to vector<1x32xf32>
    %cst_29 = arith.constant dense<0.000000e+00> : vector<16xf32>
    %65 = vector.multi_reduction <add>, %60, %cst_29 [1] : vector<16x32xf32> to vector<16xf32>
    %66 = vector.shape_cast %65 : vector<16xf32> to vector<16x1xf32>
    %cst_30 = arith.constant 3.200000e+01 : f32
    %67 = vector.broadcast %cst_30 : f32 to vector<16x1xf32>
    %68 = arith.divf %66, %67 : vector<16x1xf32>
    %69 = vector.broadcast %68 : vector<16x1xf32> to vector<16x32xf32>
    %70 = arith.subf %60, %69 : vector<16x32xf32>
    %71 = arith.mulf %70, %70 : vector<16x32xf32>
    %cst_31 = arith.constant dense<0.000000e+00> : vector<16xf32>
    %72 = vector.multi_reduction <add>, %71, %cst_31 [1] : vector<16x32xf32> to vector<16xf32>
    %73 = vector.shape_cast %72 : vector<16xf32> to vector<16x1xf32>
    %cst_32 = arith.constant 3.200000e+01 : f32
    %74 = vector.broadcast %cst_32 : f32 to vector<16x1xf32>
    %75 = arith.divf %73, %74 : vector<16x1xf32>
    %76 = vector.broadcast %68 : vector<16x1xf32> to vector<16x32xf32>
    %77 = arith.subf %60, %76 : vector<16x32xf32>
    %cst_33 = arith.constant 9.99999974E-6 : f32
    %78 = vector.broadcast %cst_33 : f32 to vector<16x1xf32>
    %79 = arith.addf %75, %78 : vector<16x1xf32>
    %80 = math.rsqrt %79 : vector<16x1xf32>
    %81 = vector.broadcast %80 : vector<16x1xf32> to vector<16x32xf32>
    %82 = arith.mulf %77, %81 : vector<16x32xf32>
    %83 = vector.broadcast %62 : vector<1x32xf32> to vector<16x32xf32>
    %84 = arith.mulf %82, %83 : vector<16x32xf32>
    %85 = vector.broadcast %64 : vector<1x32xf32> to vector<16x32xf32>
    %86 = arith.addf %84, %85 : vector<16x32xf32>
    %87 = arith.truncf %86 : vector<16x32xf32> to vector<16x32xbf16>
    %c0_34 = arith.constant 0 : index
    %c0_35 = arith.constant 0 : index
    %c0_36 = arith.constant 0 : index
    %88 = vector.load %arg11[%c0_34, %c0_35, %c0_36] : memref<1x32x64xbf16, #tpu.memory_space<vmem>>, vector<1x32x64xbf16>
    %89 = vector.shape_cast %88 : vector<1x32x64xbf16> to vector<32x64xbf16>
    %cst_37 = arith.constant dense<0.000000e+00> : vector<16x64xf32>
    %90 = tpu.matmul %87, %89, %cst_37 {dimension_numbers = #tpu.dot_dimension_numbers<[1], [0], [0], [1], [0, 0, 1, 1], [], []>} : vector<16x32xbf16>, vector<32x64xbf16>, vector<16x64xf32> -> vector<16x64xf32>
    %c0_38 = arith.constant 0 : index
    %c0_39 = arith.constant 0 : index
    %c0_40 = arith.constant 0 : index
    %91 = vector.load %arg12[%c0_38, %c0_39, %c0_40] : memref<1x1x64xf32, #tpu.memory_space<vmem>>, vector<1x1x64xf32>
    %92 = vector.shape_cast %91 : vector<1x1x64xf32> to vector<1x64xf32>
    %93 = vector.broadcast %92 : vector<1x64xf32> to vector<16x64xf32>
    %94 = arith.addf %90, %93 : vector<16x64xf32>
    %95 = arith.mulf %94, %94 : vector<16x64xf32>
    %96 = arith.mulf %94, %95 : vector<16x64xf32>
    %cst_41 = arith.constant 4.471500e-02 : f32
    %97 = vector.broadcast %cst_41 : f32 to vector<16x64xf32>
    %98 = arith.mulf %97, %96 : vector<16x64xf32>
    %99 = arith.addf %94, %98 : vector<16x64xf32>
    %cst_42 = arith.constant 0.797884583 : f32
    %100 = vector.broadcast %cst_42 : f32 to vector<16x64xf32>
    %101 = arith.mulf %100, %99 : vector<16x64xf32>
    %102 = math.tanh %101 : vector<16x64xf32>
    %cst_43 = arith.constant 1.000000e+00 : f32
    %103 = vector.broadcast %cst_43 : f32 to vector<16x64xf32>
    %104 = arith.addf %103, %102 : vector<16x64xf32>
    %cst_44 = arith.constant 5.000000e-01 : f32
    %105 = vector.broadcast %cst_44 : f32 to vector<16x64xf32>
    %106 = arith.mulf %105, %104 : vector<16x64xf32>
    %107 = arith.mulf %94, %106 : vector<16x64xf32>
    %108 = arith.truncf %107 : vector<16x64xf32> to vector<16x64xbf16>
    %c0_45 = arith.constant 0 : index
    %c0_46 = arith.constant 0 : index
    %c0_47 = arith.constant 0 : index
    %109 = vector.load %arg13[%c0_45, %c0_46, %c0_47] : memref<1x64x32xbf16, #tpu.memory_space<vmem>>, vector<1x64x32xbf16>
    %110 = vector.shape_cast %109 : vector<1x64x32xbf16> to vector<64x32xbf16>
    %cst_48 = arith.constant dense<0.000000e+00> : vector<16x32xf32>
    %111 = tpu.matmul %108, %110, %cst_48 {dimension_numbers = #tpu.dot_dimension_numbers<[1], [0], [0], [1], [0, 0, 1, 1], [], []>} : vector<16x64xbf16>, vector<64x32xbf16>, vector<16x32xf32> -> vector<16x32xf32>
    %c0_49 = arith.constant 0 : index
    %c0_50 = arith.constant 0 : index
    %c0_51 = arith.constant 0 : index
    %112 = vector.load %arg14[%c0_49, %c0_50, %c0_51] : memref<1x1x32xf32, #tpu.memory_space<vmem>>, vector<1x1x32xf32>
    %113 = vector.shape_cast %112 : vector<1x1x32xf32> to vector<1x32xf32>
    %114 = vector.broadcast %113 : vector<1x32xf32> to vector<16x32xf32>
    %115 = arith.addf %111, %114 : vector<16x32xf32>
    %116 = arith.addf %115, %86 : vector<16x32xf32>
    %c0_52 = arith.constant 0 : index
    %c0_53 = arith.constant 0 : index
    %c0_54 = arith.constant 0 : index
    %117 = vector.load %arg15[%c0_52, %c0_53, %c0_54] : memref<1x1x32xf32, #tpu.memory_space<vmem>>, vector<1x1x32xf32>
    %118 = vector.shape_cast %117 : vector<1x1x32xf32> to vector<1x32xf32>
    %c0_55 = arith.constant 0 : index
    %c0_56 = arith.constant 0 : index
    %c0_57 = arith.constant 0 : index
    %119 = vector.load %arg16[%c0_55, %c0_56, %c0_57] : memref<1x1x32xf32, #tpu.memory_space<vmem>>, vector<1x1x32xf32>
    %120 = vector.shape_cast %119 : vector<1x1x32xf32> to vector<1x32xf32>
    %cst_58 = arith.constant dense<0.000000e+00> : vector<16xf32>
    %121 = vector.multi_reduction <add>, %116, %cst_58 [1] : vector<16x32xf32> to vector<16xf32>
    %122 = vector.shape_cast %121 : vector<16xf32> to vector<16x1xf32>
    %cst_59 = arith.constant 3.200000e+01 : f32
    %123 = vector.broadcast %cst_59 : f32 to vector<16x1xf32>
    %124 = arith.divf %122, %123 : vector<16x1xf32>
    %125 = vector.broadcast %124 : vector<16x1xf32> to vector<16x32xf32>
    %126 = arith.subf %116, %125 : vector<16x32xf32>
    %127 = arith.mulf %126, %126 : vector<16x32xf32>
    %cst_60 = arith.constant dense<0.000000e+00> : vector<16xf32>
    %128 = vector.multi_reduction <add>, %127, %cst_60 [1] : vector<16x32xf32> to vector<16xf32>
    %129 = vector.shape_cast %128 : vector<16xf32> to vector<16x1xf32>
    %cst_61 = arith.constant 3.200000e+01 : f32
    %130 = vector.broadcast %cst_61 : f32 to vector<16x1xf32>
    %131 = arith.divf %129, %130 : vector<16x1xf32>
    %132 = vector.broadcast %124 : vector<16x1xf32> to vector<16x32xf32>
    %133 = arith.subf %116, %132 : vector<16x32xf32>
    %cst_62 = arith.constant 9.99999974E-6 : f32
    %134 = vector.broadcast %cst_62 : f32 to vector<16x1xf32>
    %135 = arith.addf %131, %134 : vector<16x1xf32>
    %136 = math.rsqrt %135 : vector<16x1xf32>
    %137 = vector.broadcast %136 : vector<16x1xf32> to vector<16x32xf32>
    %138 = arith.mulf %133, %137 : vector<16x32xf32>
    %139 = vector.broadcast %118 : vector<1x32xf32> to vector<16x32xf32>
    %140 = arith.mulf %138, %139 : vector<16x32xf32>
    %141 = vector.broadcast %120 : vector<1x32xf32> to vector<16x32xf32>
    %142 = arith.addf %140, %141 : vector<16x32xf32>
    %c0_63 = arith.constant 0 : index
    %c0_64 = arith.constant 0 : index
    %143 = vector.load %arg22[%c0_63, %c0_64] : memref<16x32xf32, #tpu.memory_space<vmem>>, vector<16x32xf32>
    tpu.vector_store %arg22[%c0_63, %c0_64], %142 {strides = array<i32>} : memref<16x32xf32, #tpu.memory_space<vmem>>, vector<16x32xf32>,
    %c1_i32 = arith.constant 1 : i32
    %144 = arith.cmpi eq, %arg0, %c1_i32 : i32
    %145 = arith.extui %144 : i1 to i32
    %c0_i32_65 = arith.constant 0 : i32
    %146 = arith.cmpi ne, %145, %c0_i32_65 : i32
    scf.if %146 {
      %c0_66 = arith.constant 0 : index
      %c0_67 = arith.constant 0 : index
      %147 = vector.load %arg17[%c0_66, %c0_67] : memref<1x32xf32, #tpu.memory_space<vmem>>, vector<1x32xf32>
      %c0_68 = arith.constant 0 : index
      %c0_69 = arith.constant 0 : index
      %148 = vector.load %arg18[%c0_68, %c0_69] : memref<1x32xf32, #tpu.memory_space<vmem>>, vector<1x32xf32>
      %cst_70 = arith.constant dense<0.000000e+00> : vector<16xf32>
      %149 = vector.multi_reduction <add>, %142, %cst_70 [1] : vector<16x32xf32> to vector<16xf32>
      %150 = vector.shape_cast %149 : vector<16xf32> to vector<16x1xf32>
      %cst_71 = arith.constant 3.200000e+01 : f32
      %151 = vector.broadcast %cst_71 : f32 to vector<16x1xf32>
      %152 = arith.divf %150, %151 : vector<16x1xf32>
      %153 = vector.broadcast %152 : vector<16x1xf32> to vector<16x32xf32>
      %154 = arith.subf %142, %153 : vector<16x32xf32>
      %155 = arith.mulf %154, %154 : vector<16x32xf32>
      %cst_72 = arith.constant dense<0.000000e+00> : vector<16xf32>
      %156 = vector.multi_reduction <add>, %155, %cst_72 [1] : vector<16x32xf32> to vector<16xf32>
      %157 = vector.shape_cast %156 : vector<16xf32> to vector<16x1xf32>
      %cst_73 = arith.constant 3.200000e+01 : f32
      %158 = vector.broadcast %cst_73 : f32 to vector<16x1xf32>
      %159 = arith.divf %157, %158 : vector<16x1xf32>
      %160 = vector.broadcast %152 : vector<16x1xf32> to vector<16x32xf32>
      %161 = arith.subf %142, %160 : vector<16x32xf32>
      %cst_74 = arith.constant 9.99999974E-6 : f32
      %162 = vector.broadcast %cst_74 : f32 to vector<16x1xf32>
      %163 = arith.addf %159, %162 : vector<16x1xf32>
      %164 = math.rsqrt %163 : vector<16x1xf32>
      %165 = vector.broadcast %164 : vector<16x1xf32> to vector<16x32xf32>
      %166 = arith.mulf %161, %165 : vector<16x32xf32>
      %167 = vector.broadcast %147 : vector<1x32xf32> to vector<16x32xf32>
      %168 = arith.mulf %166, %167 : vector<16x32xf32>
      %169 = vector.broadcast %148 : vector<1x32xf32> to vector<16x32xf32>
      %170 = arith.addf %168, %169 : vector<16x32xf32>
      %171 = arith.truncf %170 : vector<16x32xf32> to vector<16x32xbf16>
      %c0_75 = arith.constant 0 : index
      %c0_76 = arith.constant 0 : index
      %172 = vector.load %arg19[%c0_75, %c0_76] : memref<32x128xbf16, #tpu.memory_space<vmem>>, vector<32x128xbf16>
      %cst_77 = arith.constant dense<0.000000e+00> : vector<16x128xf32>
      %173 = tpu.matmul %171, %172, %cst_77 {dimension_numbers = #tpu.dot_dimension_numbers<[1], [0], [0], [1], [0, 0, 1, 1], [], []>} : vector<16x32xbf16>, vector<32x128xbf16>, vector<16x128xf32> -> vector<16x128xf32>
      %c0_78 = arith.constant 0 : index
      %c0_79 = arith.constant 0 : index
      %174 = vector.load %arg20[%c0_78, %c0_79] : memref<1x128xf32, #tpu.memory_space<vmem>>, vector<1x128xf32>
      %175 = vector.broadcast %174 : vector<1x128xf32> to vector<16x128xf32>
      %176 = arith.addf %173, %175 : vector<16x128xf32>
      %177 = vector.shape_cast %176 : vector<16x128xf32> to vector<2x8x128xf32>
      %c0_80 = arith.constant 0 : index
      %c0_81 = arith.constant 0 : index
      %c0_82 = arith.constant 0 : index
      %178 = vector.load %arg21[%c0_80, %c0_81, %c0_82] : memref<2x8x128xf32, #tpu.memory_space<vmem>>, vector<2x8x128xf32>
      tpu.vector_store %arg21[%c0_80, %c0_81, %c0_82], %177 {strides = array<i32>} : memref<2x8x128xf32, #tpu.memory_space<vmem>>, vector<2x8x128xf32>,
    } else {
    }
    return
  }
  func.func @transform_0(%arg0: i32) -> (i32, i32, i32) {
    %c0_i32 = arith.constant 0 : i32
    %c0_i32_0 = arith.constant 0 : i32
    %c0_i32_1 = arith.constant 0 : i32
    %c0_i32_2 = arith.constant 0 : i32
    return %c0_i32, %c0_i32_0, %c0_i32_1 : i32, i32, i32
  }
  func.func @transform_1(%arg0: i32) -> (i32, i32, i32) {
    %c0_i32 = arith.constant 0 : i32
    %c0_i32_0 = arith.constant 0 : i32
    %c0_i32_1 = arith.constant 0 : i32
    %c0_i32_2 = arith.constant 0 : i32
    return %c0_i32, %c0_i32_0, %c0_i32_1 : i32, i32, i32
  }
  func.func @transform_2(%arg0: i32) -> (i32, i32) {
    %c0_i32 = arith.constant 0 : i32
    %c0_i32_0 = arith.constant 0 : i32
    %c0_i32_1 = arith.constant 0 : i32
    return %c0_i32, %c0_i32_0 : i32, i32
  }
  func.func @transform_3(%arg0: i32) -> (i32, i32) {
    %c0_i32 = arith.constant 0 : i32
    %c0_i32_0 = arith.constant 0 : i32
    %c0_i32_1 = arith.constant 0 : i32
    return %c0_i32, %c0_i32_0 : i32, i32
  }
  func.func @transform_4(%arg0: i32) -> (i32, i32, i32) {
    %c0_i32 = arith.constant 0 : i32
    %c0_i32_0 = arith.constant 0 : i32
    %c0_i32_1 = arith.constant 0 : i32
    return %arg0, %c0_i32, %c0_i32_0 : i32, i32, i32
  }
  func.func @transform_5(%arg0: i32) -> (i32, i32, i32) {
    %c0_i32 = arith.constant 0 : i32
    %c0_i32_0 = arith.constant 0 : i32
    %c0_i32_1 = arith.constant 0 : i32
    return %arg0, %c0_i32, %c0_i32_0 : i32, i32, i32
  }
  func.func @transform_6(%arg0: i32) -> (i32, i32, i32) {
    %c0_i32 = arith.constant 0 : i32
    %c0_i32_0 = arith.constant 0 : i32
    %c0_i32_1 = arith.constant 0 : i32
    return %arg0, %c0_i32, %c0_i32_0 : i32, i32, i32
  }
  func.func @transform_7(%arg0: i32) -> (i32, i32, i32) {
    %c0_i32 = arith.constant 0 : i32
    %c0_i32_0 = arith.constant 0 : i32
    %c0_i32_1 = arith.constant 0 : i32
    return %arg0, %c0_i32, %c0_i32_0 : i32, i32, i32
  }
  func.func @transform_8(%arg0: i32) -> (i32, i32, i32) {
    %c0_i32 = arith.constant 0 : i32
    %c0_i32_0 = arith.constant 0 : i32
    %c0_i32_1 = arith.constant 0 : i32
    return %arg0, %c0_i32, %c0_i32_0 : i32, i32, i32
  }
  func.func @transform_9(%arg0: i32) -> (i32, i32, i32) {
    %c0_i32 = arith.constant 0 : i32
    %c0_i32_0 = arith.constant 0 : i32
    %c0_i32_1 = arith.constant 0 : i32
    return %arg0, %c0_i32, %c0_i32_0 : i32, i32, i32
  }
  func.func @transform_10(%arg0: i32) -> (i32, i32, i32) {
    %c0_i32 = arith.constant 0 : i32
    %c0_i32_0 = arith.constant 0 : i32
    %c0_i32_1 = arith.constant 0 : i32
    return %arg0, %c0_i32, %c0_i32_0 : i32, i32, i32
  }
  func.func @transform_11(%arg0: i32) -> (i32, i32, i32) {
    %c0_i32 = arith.constant 0 : i32
    %c0_i32_0 = arith.constant 0 : i32
    %c0_i32_1 = arith.constant 0 : i32
    return %arg0, %c0_i32, %c0_i32_0 : i32, i32, i32
  }
  func.func @transform_12(%arg0: i32) -> (i32, i32, i32) {
    %c0_i32 = arith.constant 0 : i32
    %c0_i32_0 = arith.constant 0 : i32
    %c0_i32_1 = arith.constant 0 : i32
    return %arg0, %c0_i32, %c0_i32_0 : i32, i32, i32
  }
  func.func @transform_13(%arg0: i32) -> (i32, i32, i32) {
    %c0_i32 = arith.constant 0 : i32
    %c0_i32_0 = arith.constant 0 : i32
    %c0_i32_1 = arith.constant 0 : i32
    return %arg0, %c0_i32, %c0_i32_0 : i32, i32, i32
  }
  func.func @transform_14(%arg0: i32) -> (i32, i32, i32) {
    %c0_i32 = arith.constant 0 : i32
    %c0_i32_0 = arith.constant 0 : i32
    %c0_i32_1 = arith.constant 0 : i32
    return %arg0, %c0_i32, %c0_i32_0 : i32, i32, i32
  }
  func.func @transform_15(%arg0: i32) -> (i32, i32, i32) {
    %c0_i32 = arith.constant 0 : i32
    %c0_i32_0 = arith.constant 0 : i32
    %c0_i32_1 = arith.constant 0 : i32
    return %arg0, %c0_i32, %c0_i32_0 : i32, i32, i32
  }
  func.func @transform_16(%arg0: i32) -> (i32, i32) {
    %c0_i32 = arith.constant 0 : i32
    %c0_i32_0 = arith.constant 0 : i32
    %c0_i32_1 = arith.constant 0 : i32
    return %c0_i32, %c0_i32_0 : i32, i32
  }
  func.func @transform_17(%arg0: i32) -> (i32, i32) {
    %c0_i32 = arith.constant 0 : i32
    %c0_i32_0 = arith.constant 0 : i32
    %c0_i32_1 = arith.constant 0 : i32
    return %c0_i32, %c0_i32_0 : i32, i32
  }
  func.func @transform_18(%arg0: i32) -> (i32, i32) {
    %c0_i32 = arith.constant 0 : i32
    %c0_i32_0 = arith.constant 0 : i32
    %c0_i32_1 = arith.constant 0 : i32
    return %c0_i32, %c0_i32_0 : i32, i32
  }
  func.func @transform_19(%arg0: i32) -> (i32, i32) {
    %c0_i32 = arith.constant 0 : i32
    %c0_i32_0 = arith.constant 0 : i32
    %c0_i32_1 = arith.constant 0 : i32
    return %c0_i32, %c0_i32_0 : i32, i32
  }
  func.func @transform_20(%arg0: i32) -> (i32, i32, i32) {
    %c0_i32 = arith.constant 0 : i32
    %c0_i32_0 = arith.constant 0 : i32
    %c0_i32_1 = arith.constant 0 : i32
    %c0_i32_2 = arith.constant 0 : i32
    return %c0_i32, %c0_i32_0, %c0_i32_1 : i32, i32, i32
  }
}

</mosaic_0001>

<llo_original>
// kernel: forward.1
$region0: #{forward.1}
  #allocation0 [shape = 'u32[]', space=smem, size = 0x4, offset = 0x4, fixed_abs, tag = 'smem constant byte address 0x4 - core index']
  #allocation1 [shape = 'u32[144,128]{1,0:T(1,128)}', space=vmem, size = 0x12000, scoped, tag = 'internal scratch']
  #allocation2 [shape = 'f32[16,32]{1,0:T(8,128)}', space=vmem, size = 0x2000, scoped, tag = 'scratch operand']
  %s0 = inlined_call_operand.vmem [shape: f32[2,8,32], index: 0, kind: input, shape index: {}]
  %s1 = inlined_call_operand.vmem [shape: f32[2,1,8], index: 1, kind: input, shape index: {}]
  %s2 = inlined_call_operand.vmem [shape: f32[1,32], index: 2, kind: input, shape index: {}]
  %s3 = inlined_call_operand.vmem [shape: f32[1,32], index: 3, kind: input, shape index: {}]
  %s4 = inlined_call_operand.vmem [shape: bf16[2,32,96], index: 4, kind: input, shape index: {}]
  %s5 = inlined_call_operand.vmem [shape: f32[2,1,96], index: 5, kind: input, shape index: {}]
  %s6 = inlined_call_operand.vmem [shape: bf16[2,32,32], index: 6, kind: input, shape index: {}]
  %s7 = inlined_call_operand.vmem [shape: f32[2,1,32], index: 7, kind: input, shape index: {}]
  %s8 = inlined_call_operand.vmem [shape: f32[2,1,32], index: 8, kind: input, shape index: {}]
  %s9 = inlined_call_operand.vmem [shape: f32[2,1,32], index: 9, kind: input, shape index: {}]
  %s10 = inlined_call_operand.vmem [shape: bf16[2,32,64], index: 10, kind: input, shape index: {}]
  %s11 = inlined_call_operand.vmem [shape: f32[2,1,64], index: 11, kind: input, shape index: {}]
  %s12 = inlined_call_operand.vmem [shape: bf16[2,64,32], index: 12, kind: input, shape index: {}]
  %s13 = inlined_call_operand.vmem [shape: f32[2,1,32], index: 13, kind: input, shape index: {}]
  %s14 = inlined_call_operand.vmem [shape: f32[2,1,32], index: 14, kind: input, shape index: {}]
  %s15 = inlined_call_operand.vmem [shape: f32[2,1,32], index: 15, kind: input, shape index: {}]
  %s16 = inlined_call_operand.vmem [shape: f32[1,32], index: 16, kind: input, shape index: {}]
  %s17 = inlined_call_operand.vmem [shape: f32[1,32], index: 17, kind: input, shape index: {}]
  %s18 = inlined_call_operand.vmem [shape: bf16[32,128], index: 18, kind: input, shape index: {}]
  %s19 = inlined_call_operand.vmem [shape: f32[1,128], index: 19, kind: input, shape index: {}]
  %s20 = inlined_call_operand.vmem [shape: f32[2,8,128], index: 20, kind: output, shape index: {}]
  %s21 = sld [smem:[#allocation0]]
  $region121: #{forward.1} parent=0
    _
  %s23 = ssub.s32 1, %s21
  %s24 = scalar_select 0, %s23, %s21
  loop: start=0, step=1, limit=4
  $region2: #{forward.1} parent=0 // loop_pre_header
    _
  $region3: #{forward.1} parent=0 // loop_header
    %s26 = sphi 0, %s30
    %p27 = scmp.ge.s32.totalorder %s26, 4
    %s34 = sphi 0, %s34
    %s36 = sphi 0, %s34
    %s37 = sphi 0, %s36
    %s51 = sphi 0, %s37
    %s55 = sphi 0, %s55
    %s57 = sphi 0, %s55
    %s58 = sphi 0, %s57
    %s72 = sphi 0, %s58
    %s76 = sphi 0, %s76
    %s78 = sphi 0, %s76
    %s79 = sphi 0, %s78
    %s93 = sphi 0, %s79
    %s97 = sphi 0, %s97
    %s99 = sphi 0, %s97
    %s100 = sphi 0, %s99
    %s114 = sphi 0, %s100
    %s120 = sphi 0, %s122
    %s123 = sphi 0, %s120
    %s124 = sphi 0, %s123
    %s140 = sphi 0, %s124
    %s146 = sphi 0, %s148
    %s149 = sphi 0, %s146
    %s150 = sphi 0, %s149
    %s166 = sphi 0, %s150
    %s172 = sphi 0, %s174
    %s175 = sphi 0, %s172
    %s176 = sphi 0, %s175
    %s192 = sphi 0, %s176
    %s198 = sphi 0, %s200
    %s201 = sphi 0, %s198
    %s202 = sphi 0, %s201
    %s218 = sphi 0, %s202
    %s224 = sphi 0, %s226
    %s227 = sphi 0, %s224
    %s228 = sphi 0, %s227
    %s244 = sphi 0, %s228
    %s250 = sphi 0, %s252
    %s253 = sphi 0, %s250
    %s254 = sphi 0, %s253
    %s270 = sphi 0, %s254
    %s276 = sphi 0, %s278
    %s279 = sphi 0, %s276
    %s280 = sphi 0, %s279
    %s296 = sphi 0, %s280
    %s302 = sphi 0, %s304
    %s305 = sphi 0, %s302
    %s306 = sphi 0, %s305
    %s322 = sphi 0, %s306
    %s328 = sphi 0, %s330
    %s331 = sphi 0, %s328
    %s332 = sphi 0, %s331
    %s348 = sphi 0, %s332
    %s354 = sphi 0, %s356
    %s357 = sphi 0, %s354
    %s358 = sphi 0, %s357
    %s374 = sphi 0, %s358
    %s380 = sphi 0, %s382
    %s383 = sphi 0, %s380
    %s384 = sphi 0, %s383
    %s400 = sphi 0, %s384
    %s406 = sphi 0, %s408
    %s409 = sphi 0, %s406
    %s410 = sphi 0, %s409
    %s426 = sphi 0, %s410
    %s430 = sphi 0, %s430
    %s432 = sphi 0, %s430
    %s433 = sphi 0, %s432
    %s447 = sphi 0, %s433
    %s451 = sphi 0, %s451
    %s453 = sphi 0, %s451
    %s454 = sphi 0, %s453
    %s468 = sphi 0, %s454
    %s472 = sphi 0, %s472
    %s474 = sphi 0, %s472
    %s475 = sphi 0, %s474
    %s489 = sphi 0, %s475
    %s493 = sphi 0, %s493
    %s495 = sphi 0, %s493
    %s496 = sphi 0, %s495
    %s510 = sphi 0, %s496
    %s514 = sphi 0, %s514
    %s516 = sphi 0, %s514
    %s517 = sphi 0, %s516
    %s531 = sphi 0, %s517
  $region4: #{forward.1} parent=0 // loop_header_branch
    %29 = sbr.rel (%p27) target = $region8
  $region5: #{forward.1} parent=0 // loop_body
    %s31 = ssub.s32 %s26, 1
    %s32 = ssub.s32 %s26, 2
    %s33 = sadd.s32 %s26, 1
    %s35 = sadd.s32 %s34, 1
    %p38 = scmp.eq.s32.totalorder %s26, 1
    %p39 = scmp.ne.s32.totalorder %s34, %s36
    %p40 = scmp.eq.s32.totalorder %s26, 0
    %p41 = por %p39, %p40
    %p42 = scmp.ne.s32.totalorder %s34, %s36
    %p43 = scmp.eq.s32.totalorder %s31, 1
    %p44 = por %p42, %p43
    %p45 = scmp.ne.s32.totalorder %s36, %s37
    %p46 = scmp.eq.s32.totalorder %s31, 0
    %p47 = por %p45, %p46
    %p48 = scmp.ne.s32.totalorder %s36, %s37
    %p49 = scmp.eq.s32.totalorder %s32, 1
    %p50 = por %p48, %p49
    %p52 = scmp.ne.s32.totalorder %s37, %s51
    %p53 = scmp.eq.s32.totalorder %s32, 0
    %p54 = por %p52, %p53
    %s56 = sadd.s32 %s55, 1
    %p59 = scmp.eq.s32.totalorder %s26, 1
    %p60 = scmp.ne.s32.totalorder %s55, %s57
    %p61 = scmp.eq.s32.totalorder %s26, 0
    %p62 = por %p60, %p61
    %p63 = scmp.ne.s32.totalorder %s55, %s57
    %p64 = scmp.eq.s32.totalorder %s31, 1
    %p65 = por %p63, %p64
    %p66 = scmp.ne.s32.totalorder %s57, %s58
    %p67 = scmp.eq.s32.totalorder %s31, 0
    %p68 = por %p66, %p67
    %p69 = scmp.ne.s32.totalorder %s57, %s58
    %p70 = scmp.eq.s32.totalorder %s32, 1
    %p71 = por %p69, %p70
    %p73 = scmp.ne.s32.totalorder %s58, %s72
    %p74 = scmp.eq.s32.totalorder %s32, 0
    %p75 = por %p73, %p74
    %s77 = sadd.s32 %s76, 1
    %p80 = scmp.eq.s32.totalorder %s26, 1
    %p81 = scmp.ne.s32.totalorder %s76, %s78
    %p82 = scmp.eq.s32.totalorder %s26, 0
    %p83 = por %p81, %p82
    %p84 = scmp.ne.s32.totalorder %s76, %s78
    %p85 = scmp.eq.s32.totalorder %s31, 1
    %p86 = por %p84, %p85
    %p87 = scmp.ne.s32.totalorder %s78, %s79
    %p88 = scmp.eq.s32.totalorder %s31, 0
    %p89 = por %p87, %p88
    %p90 = scmp.ne.s32.totalorder %s78, %s79
    %p91 = scmp.eq.s32.totalorder %s32, 1
    %p92 = por %p90, %p91
    %p94 = scmp.ne.s32.totalorder %s79, %s93
    %p95 = scmp.eq.s32.totalorder %s32, 0
    %p96 = por %p94, %p95
    %s98 = sadd.s32 %s97, 1
    %p101 = scmp.eq.s32.totalorder %s26, 1
    %p102 = scmp.ne.s32.totalorder %s97, %s99
    %p103 = scmp.eq.s32.totalorder %s26, 0
    %p104 = por %p102, %p103
    %p105 = scmp.ne.s32.totalorder %s97, %s99
    %p106 = scmp.eq.s32.totalorder %s31, 1
    %p107 = por %p105, %p106
    %p108 = scmp.ne.s32.totalorder %s99, %s100
    %p109 = scmp.eq.s32.totalorder %s31, 0
    %p110 = por %p108, %p109
    %p111 = scmp.ne.s32.totalorder %s99, %s100
    %p112 = scmp.eq.s32.totalorder %s32, 1
    %p113 = por %p111, %p112
    %p115 = scmp.ne.s32.totalorder %s100, %s114
    %p116 = scmp.eq.s32.totalorder %s32, 0
    %p117 = por %p115, %p116
    %s118 = ssub.s32 %s26, %s33
    %p119 = scmp.eq.s32.totalorder %s118, 0
    %s121 = sadd.s32 %s120, 1
    %s122 = scalar_select %p119, %s120, %s121
    %p125 = pneg %p119
    %p126 = scmp.eq.s32.totalorder %s26, 1
    %p127 = por %p125, %p126
    %p128 = scmp.ne.s32.totalorder %s120, %s123
    %p129 = scmp.eq.s32.totalorder %s26, 0
    %p130 = por %p128, %p129
    %p131 = scmp.ne.s32.totalorder %s120, %s123
    %p132 = scmp.eq.s32.totalorder %s31, 1
    %p133 = por %p131, %p132
    %p134 = scmp.ne.s32.totalorder %s123, %s124
    %p135 = scmp.eq.s32.totalorder %s31, 0
    %p136 = por %p134, %p135
    %p137 = scmp.ne.s32.totalorder %s123, %s124
    %p138 = scmp.eq.s32.totalorder %s32, 1
    %p139 = por %p137, %p138
    %p141 = scmp.ne.s32.totalorder %s124, %s140
    %p142 = scmp.eq.s32.totalorder %s32, 0
    %p143 = por %p141, %p142
    %s144 = ssub.s32 %s26, %s33
    %p145 = scmp.eq.s32.totalorder %s144, 0
    %s147 = sadd.s32 %s146, 1
    %s148 = scalar_select %p145, %s146, %s147
    %p151 = pneg %p145
    %p152 = scmp.eq.s32.totalorder %s26, 1
    %p153 = por %p151, %p152
    %p154 = scmp.ne.s32.totalorder %s146, %s149
    %p155 = scmp.eq.s32.totalorder %s26, 0
    %p156 = por %p154, %p155
    %p157 = scmp.ne.s32.totalorder %s146, %s149
    %p158 = scmp.eq.s32.totalorder %s31, 1
    %p159 = por %p157, %p158
    %p160 = scmp.ne.s32.totalorder %s149, %s150
    %p161 = scmp.eq.s32.totalorder %s31, 0
    %p162 = por %p160, %p161
    %p163 = scmp.ne.s32.totalorder %s149, %s150
    %p164 = scmp.eq.s32.totalorder %s32, 1
    %p165 = por %p163, %p164
    %p167 = scmp.ne.s32.totalorder %s150, %s166
    %p168 = scmp.eq.s32.totalorder %s32, 0
    %p169 = por %p167, %p168
    %s170 = ssub.s32 %s26, %s33
    %p171 = scmp.eq.s32.totalorder %s170, 0
    %s173 = sadd.s32 %s172, 1
    %s174 = scalar_select %p171, %s172, %s173
    %p177 = pneg %p171
    %p178 = scmp.eq.s32.totalorder %s26, 1
    %p179 = por %p177, %p178
    %p180 = scmp.ne.s32.totalorder %s172, %s175
    %p181 = scmp.eq.s32.totalorder %s26, 0
    %p182 = por %p180, %p181
    %p183 = scmp.ne.s32.totalorder %s172, %s175
    %p184 = scmp.eq.s32.totalorder %s31, 1
    %p185 = por %p183, %p184
    %p186 = scmp.ne.s32.totalorder %s175, %s176
    %p187 = scmp.eq.s32.totalorder %s31, 0
    %p188 = por %p186, %p187
    %p189 = scmp.ne.s32.totalorder %s175, %s176
    %p190 = scmp.eq.s32.totalorder %s32, 1
    %p191 = por %p189, %p190
    %p193 = scmp.ne.s32.totalorder %s176, %s192
    %p194 = scmp.eq.s32.totalorder %s32, 0
    %p195 = por %p193, %p194
    %s196 = ssub.s32 %s26, %s33
    %p197 = scmp.eq.s32.totalorder %s196, 0
    %s199 = sadd.s32 %s198, 1
    %s200 = scalar_select %p197, %s198, %s199
    %p203 = pneg %p197
    %p204 = scmp.eq.s32.totalorder %s26, 1
    %p205 = por %p203, %p204
    %p206 = scmp.ne.s32.totalorder %s198, %s201
    %p207 = scmp.eq.s32.totalorder %s26, 0
    %p208 = por %p206, %p207
    %p209 = scmp.ne.s32.totalorder %s198, %s201
    %p210 = scmp.eq.s32.totalorder %s31, 1
    %p211 = por %p209, %p210
    %p212 = scmp.ne.s32.totalorder %s201, %s202
    %p213 = scmp.eq.s32.totalorder %s31, 0
    %p214 = por %p212, %p213
    %p215 = scmp.ne.s32.totalorder %s201, %s202
    %p216 = scmp.eq.s32.totalorder %s32, 1
    %p217 = por %p215, %p216
    %p219 = scmp.ne.s32.totalorder %s202, %s218
    %p220 = scmp.eq.s32.totalorder %s32, 0
    %p221 = por %p219, %p220
    %s222 = ssub.s32 %s26, %s33
    %p223 = scmp.eq.s32.totalorder %s222, 0
    %s225 = sadd.s32 %s224, 1
    %s226 = scalar_select %p223, %s224, %s225
    %p229 = pneg %p223
    %p230 = scmp.eq.s32.totalorder %s26, 1
    %p231 = por %p229, %p230
    %p232 = scmp.ne.s32.totalorder %s224, %s227
    %p233 = scmp.eq.s32.totalorder %s26, 0
    %p234 = por %p232, %p233
    %p235 = scmp.ne.s32.totalorder %s224, %s227
    %p236 = scmp.eq.s32.totalorder %s31, 1
    %p237 = por %p235, %p236
    %p238 = scmp.ne.s32.totalorder %s227, %s228
    %p239 = scmp.eq.s32.totalorder %s31, 0
    %p240 = por %p238, %p239
    %p241 = scmp.ne.s32.totalorder %s227, %s228
    %p242 = scmp.eq.s32.totalorder %s32, 1
    %p243 = por %p241, %p242
    %p245 = scmp.ne.s32.totalorder %s228, %s244
    %p246 = scmp.eq.s32.totalorder %s32, 0
    %p247 = por %p245, %p246
    %s248 = ssub.s32 %s26, %s33
    %p249 = scmp.eq.s32.totalorder %s248, 0
    %s251 = sadd.s32 %s250, 1
    %s252 = scalar_select %p249, %s250, %s251
    %p255 = pneg %p249
    %p256 = scmp.eq.s32.totalorder %s26, 1
    %p257 = por %p255, %p256
    %p258 = scmp.ne.s32.totalorder %s250, %s253
    %p259 = scmp.eq.s32.totalorder %s26, 0
    %p260 = por %p258, %p259
    %p261 = scmp.ne.s32.totalorder %s250, %s253
    %p262 = scmp.eq.s32.totalorder %s31, 1
    %p263 = por %p261, %p262
    %p264 = scmp.ne.s32.totalorder %s253, %s254
    %p265 = scmp.eq.s32.totalorder %s31, 0
    %p266 = por %p264, %p265
    %p267 = scmp.ne.s32.totalorder %s253, %s254
    %p268 = scmp.eq.s32.totalorder %s32, 1
    %p269 = por %p267, %p268
    %p271 = scmp.ne.s32.totalorder %s254, %s270
    %p272 = scmp.eq.s32.totalorder %s32, 0
    %p273 = por %p271, %p272
    %s274 = ssub.s32 %s26, %s33
    %p275 = scmp.eq.s32.totalorder %s274, 0
    %s277 = sadd.s32 %s276, 1
    %s278 = scalar_select %p275, %s276, %s277
    %p281 = pneg %p275
    %p282 = scmp.eq.s32.totalorder %s26, 1
    %p283 = por %p281, %p282
    %p284 = scmp.ne.s32.totalorder %s276, %s279
    %p285 = scmp.eq.s32.totalorder %s26, 0
    %p286 = por %p284, %p285
    %p287 = scmp.ne.s32.totalorder %s276, %s279
    %p288 = scmp.eq.s32.totalorder %s31, 1
    %p289 = por %p287, %p288
    %p290 = scmp.ne.s32.totalorder %s279, %s280
    %p291 = scmp.eq.s32.totalorder %s31, 0
    %p292 = por %p290, %p291
    %p293 = scmp.ne.s32.totalorder %s279, %s280
    %p294 = scmp.eq.s32.totalorder %s32, 1
    %p295 = por %p293, %p294
    %p297 = scmp.ne.s32.totalorder %s280, %s296
    %p298 = scmp.eq.s32.totalorder %s32, 0
    %p299 = por %p297, %p298
    %s300 = ssub.s32 %s26, %s33
    %p301 = scmp.eq.s32.totalorder %s300, 0
    %s303 = sadd.s32 %s302, 1
    %s304 = scalar_select %p301, %s302, %s303
    %p307 = pneg %p301
    %p308 = scmp.eq.s32.totalorder %s26, 1
    %p309 = por %p307, %p308
    %p310 = scmp.ne.s32.totalorder %s302, %s305
    %p311 = scmp.eq.s32.totalorder %s26, 0
    %p312 = por %p310, %p311
    %p313 = scmp.ne.s32.totalorder %s302, %s305
    %p314 = scmp.eq.s32.totalorder %s31, 1
    %p315 = por %p313, %p314
    %p316 = scmp.ne.s32.totalorder %s305, %s306
    %p317 = scmp.eq.s32.totalorder %s31, 0
    %p318 = por %p316, %p317
    %p319 = scmp.ne.s32.totalorder %s305, %s306
    %p320 = scmp.eq.s32.totalorder %s32, 1
    %p321 = por %p319, %p320
    %p323 = scmp.ne.s32.totalorder %s306, %s322
    %p324 = scmp.eq.s32.totalorder %s32, 0
    %p325 = por %p323, %p324
    %s326 = ssub.s32 %s26, %s33
    %p327 = scmp.eq.s32.totalorder %s326, 0
    %s329 = sadd.s32 %s328, 1
    %s330 = scalar_select %p327, %s328, %s329
    %p333 = pneg %p327
    %p334 = scmp.eq.s32.totalorder %s26, 1
    %p335 = por %p333, %p334
    %p336 = scmp.ne.s32.totalorder %s328, %s331
    %p337 = scmp.eq.s32.totalorder %s26, 0
    %p338 = por %p336, %p337
    %p339 = scmp.ne.s32.totalorder %s328, %s331
    %p340 = scmp.eq.s32.totalorder %s31, 1
    %p341 = por %p339, %p340
    %p342 = scmp.ne.s32.totalorder %s331, %s332
    %p343 = scmp.eq.s32.totalorder %s31, 0
    %p344 = por %p342, %p343
    %p345 = scmp.ne.s32.totalorder %s331, %s332
    %p346 = scmp.eq.s32.totalorder %s32, 1
    %p347 = por %p345, %p346
    %p349 = scmp.ne.s32.totalorder %s332, %s348
    %p350 = scmp.eq.s32.totalorder %s32, 0
    %p351 = por %p349, %p350
    %s352 = ssub.s32 %s26, %s33
    %p353 = scmp.eq.s32.totalorder %s352, 0
    %s355 = sadd.s32 %s354, 1
    %s356 = scalar_select %p353, %s354, %s355
    %p359 = pneg %p353
    %p360 = scmp.eq.s32.totalorder %s26, 1
    %p361 = por %p359, %p360
    %p362 = scmp.ne.s32.totalorder %s354, %s357
    %p363 = scmp.eq.s32.totalorder %s26, 0
    %p364 = por %p362, %p363
    %p365 = scmp.ne.s32.totalorder %s354, %s357
    %p366 = scmp.eq.s32.totalorder %s31, 1
    %p367 = por %p365, %p366
    %p368 = scmp.ne.s32.totalorder %s357, %s358
    %p369 = scmp.eq.s32.totalorder %s31, 0
    %p370 = por %p368, %p369
    %p371 = scmp.ne.s32.totalorder %s357, %s358
    %p372 = scmp.eq.s32.totalorder %s32, 1
    %p373 = por %p371, %p372
    %p375 = scmp.ne.s32.totalorder %s358, %s374
    %p376 = scmp.eq.s32.totalorder %s32, 0
    %p377 = por %p375, %p376
    %s378 = ssub.s32 %s26, %s33
    %p379 = scmp.eq.s32.totalorder %s378, 0
    %s381 = sadd.s32 %s380, 1
    %s382 = scalar_select %p379, %s380, %s381
    %p385 = pneg %p379
    %p386 = scmp.eq.s32.totalorder %s26, 1
    %p387 = por %p385, %p386
    %p388 = scmp.ne.s32.totalorder %s380, %s383
    %p389 = scmp.eq.s32.totalorder %s26, 0
    %p390 = por %p388, %p389
    %p391 = scmp.ne.s32.totalorder %s380, %s383
    %p392 = scmp.eq.s32.totalorder %s31, 1
    %p393 = por %p391, %p392
    %p394 = scmp.ne.s32.totalorder %s383, %s384
    %p395 = scmp.eq.s32.totalorder %s31, 0
    %p396 = por %p394, %p395
    %p397 = scmp.ne.s32.totalorder %s383, %s384
    %p398 = scmp.eq.s32.totalorder %s32, 1
    %p399 = por %p397, %p398
    %p401 = scmp.ne.s32.totalorder %s384, %s400
    %p402 = scmp.eq.s32.totalorder %s32, 0
    %p403 = por %p401, %p402
    %s404 = ssub.s32 %s26, %s33
    %p405 = scmp.eq.s32.totalorder %s404, 0
    %s407 = sadd.s32 %s406, 1
    %s408 = scalar_select %p405, %s406, %s407
    %p411 = pneg %p405
    %p412 = scmp.eq.s32.totalorder %s26, 1
    %p413 = por %p411, %p412
    %p414 = scmp.ne.s32.totalorder %s406, %s409
    %p415 = scmp.eq.s32.totalorder %s26, 0
    %p416 = por %p414, %p415
    %p417 = scmp.ne.s32.totalorder %s406, %s409
    %p418 = scmp.eq.s32.totalorder %s31, 1
    %p419 = por %p417, %p418
    %p420 = scmp.ne.s32.totalorder %s409, %s410
    %p421 = scmp.eq.s32.totalorder %s31, 0
    %p422 = por %p420, %p421
    %p423 = scmp.ne.s32.totalorder %s409, %s410
    %p424 = scmp.eq.s32.totalorder %s32, 1
    %p425 = por %p423, %p424
    %p427 = scmp.ne.s32.totalorder %s410, %s426
    %p428 = scmp.eq.s32.totalorder %s32, 0
    %p429 = por %p427, %p428
    %s431 = sadd.s32 %s430, 1
    %p434 = scmp.eq.s32.totalorder %s26, 1
    %p435 = scmp.ne.s32.totalorder %s430, %s432
    %p436 = scmp.eq.s32.totalorder %s26, 0
    %p437 = por %p435, %p436
    %p438 = scmp.ne.s32.totalorder %s430, %s432
    %p439 = scmp.eq.s32.totalorder %s31, 1
    %p440 = por %p438, %p439
    %p441 = scmp.ne.s32.totalorder %s432, %s433
    %p442 = scmp.eq.s32.totalorder %s31, 0
    %p443 = por %p441, %p442
    %p444 = scmp.ne.s32.totalorder %s432, %s433
    %p445 = scmp.eq.s32.totalorder %s32, 1
    %p446 = por %p444, %p445
    %p448 = scmp.ne.s32.totalorder %s433, %s447
    %p449 = scmp.eq.s32.totalorder %s32, 0
    %p450 = por %p448, %p449
    %s452 = sadd.s32 %s451, 1
    %p455 = scmp.eq.s32.totalorder %s26, 1
    %p456 = scmp.ne.s32.totalorder %s451, %s453
    %p457 = scmp.eq.s32.totalorder %s26, 0
    %p458 = por %p456, %p457
    %p459 = scmp.ne.s32.totalorder %s451, %s453
    %p460 = scmp.eq.s32.totalorder %s31, 1
    %p461 = por %p459, %p460
    %p462 = scmp.ne.s32.totalorder %s453, %s454
    %p463 = scmp.eq.s32.totalorder %s31, 0
    %p464 = por %p462, %p463
    %p465 = scmp.ne.s32.totalorder %s453, %s454
    %p466 = scmp.eq.s32.totalorder %s32, 1
    %p467 = por %p465, %p466
    %p469 = scmp.ne.s32.totalorder %s454, %s468
    %p470 = scmp.eq.s32.totalorder %s32, 0
    %p471 = por %p469, %p470
    %s473 = sadd.s32 %s472, 1
    %p476 = scmp.eq.s32.totalorder %s26, 1
    %p477 = scmp.ne.s32.totalorder %s472, %s474
    %p478 = scmp.eq.s32.totalorder %s26, 0
    %p479 = por %p477, %p478
    %p480 = scmp.ne.s32.totalorder %s472, %s474
    %p481 = scmp.eq.s32.totalorder %s31, 1
    %p482 = por %p480, %p481
    %p483 = scmp.ne.s32.totalorder %s474, %s475
    %p484 = scmp.eq.s32.totalorder %s31, 0
    %p485 = por %p483, %p484
    %p486 = scmp.ne.s32.totalorder %s474, %s475
    %p487 = scmp.eq.s32.totalorder %s32, 1
    %p488 = por %p486, %p487
    %p490 = scmp.ne.s32.totalorder %s475, %s489
    %p491 = scmp.eq.s32.totalorder %s32, 0
    %p492 = por %p490, %p491
    %s494 = sadd.s32 %s493, 1
    %p497 = scmp.eq.s32.totalorder %s26, 1
    %p498 = scmp.ne.s32.totalorder %s493, %s495
    %p499 = scmp.eq.s32.totalorder %s26, 0
    %p500 = por %p498, %p499
    %p501 = scmp.ne.s32.totalorder %s493, %s495
    %p502 = scmp.eq.s32.totalorder %s31, 1
    %p503 = por %p501, %p502
    %p504 = scmp.ne.s32.totalorder %s495, %s496
    %p505 = scmp.eq.s32.totalorder %s31, 0
    %p506 = por %p504, %p505
    %p507 = scmp.ne.s32.totalorder %s495, %s496
    %p508 = scmp.eq.s32.totalorder %s32, 1
    %p509 = por %p507, %p508
    %p511 = scmp.ne.s32.totalorder %s496, %s510
    %p512 = scmp.eq.s32.totalorder %s32, 0
    %p513 = por %p511, %p512
    %s515 = sadd.s32 %s514, 1
    %p518 = scmp.eq.s32.totalorder %s26, 1
    %p519 = scmp.ne.s32.totalorder %s514, %s516
    %p520 = scmp.eq.s32.totalorder %s26, 0
    %p521 = por %p519, %p520
    %p522 = scmp.ne.s32.totalorder %s514, %s516
    %p523 = scmp.eq.s32.totalorder %s31, 1
    %p524 = por %p522, %p523
    %p525 = scmp.ne.s32.totalorder %s516, %s517
    %p526 = scmp.eq.s32.totalorder %s31, 0
    %p527 = por %p525, %p526
    %p528 = scmp.ne.s32.totalorder %s516, %s517
    %p529 = scmp.eq.s32.totalorder %s32, 1
    %p530 = por %p528, %p529
    %p532 = scmp.ne.s32.totalorder %s517, %s531
    %p533 = scmp.eq.s32.totalorder %s32, 0
    %p534 = por %p532, %p533
    %p535 = scmp.le.s32.totalorder 1, %s26
    %p536 = scmp.lt.s32.totalorder %s26, 3
    %p537 = pnand %p535, %p536
    %p538 = pneg %p537
    // Predicated region
    $region9: #{forward.1} parent=5 // pred_check
      _
    $region10: #{forward.1} parent=5 // pred_check_branch
      %540 = sbr.rel (%p537) target = $region12
    $region11: #{forward.1} parent=5 // pred_region
      %s541 = ssub.s32 %s26, 1
      // Predicated region
      $region13: #{forward.1} parent=11 // pred_check
        %p542 = pneg %p47
      $region14: #{forward.1} parent=11 // pred_check_branch
        %544 = sbr.rel (%p542) target = $region16
      $region15: #{forward.1} parent=11 // pred_region
        _
      $region16: #{forward.1} parent=11 // pred_fallthru
        _
      // Predicated region
      $region17: #{forward.1} parent=11 // pred_check
        %p545 = pneg %p68
      $region18: #{forward.1} parent=11 // pred_check_branch
        %547 = sbr.rel (%p545) target = $region20
      $region19: #{forward.1} parent=11 // pred_region
        _
      $region20: #{forward.1} parent=11 // pred_fallthru
        _
      // Predicated region
      $region21: #{forward.1} parent=11 // pred_check
        %p548 = pneg %p89
      $region22: #{forward.1} parent=11 // pred_check_branch
        %550 = sbr.rel (%p548) target = $region24
      $region23: #{forward.1} parent=11 // pred_region
        _
      $region24: #{forward.1} parent=11 // pred_fallthru
        _
      // Predicated region
      $region25: #{forward.1} parent=11 // pred_check
        %p551 = pneg %p110
      $region26: #{forward.1} parent=11 // pred_check_branch
        %553 = sbr.rel (%p551) target = $region28
      $region27: #{forward.1} parent=11 // pred_region
        _
      $region28: #{forward.1} parent=11 // pred_fallthru
        _
      // Predicated region
      $region29: #{forward.1} parent=11 // pred_check
        %p554 = pneg %p443
      $region30: #{forward.1} parent=11 // pred_check_branch
        %556 = sbr.rel (%p554) target = $region32
      $region31: #{forward.1} parent=11 // pred_region
        _
      $region32: #{forward.1} parent=11 // pred_fallthru
        _
      // Predicated region
      $region33: #{forward.1} parent=11 // pred_check
        %p557 = pneg %p464
      $region34: #{forward.1} parent=11 // pred_check_branch
        %559 = sbr.rel (%p557) target = $region36
      $region35: #{forward.1} parent=11 // pred_region
        _
      $region36: #{forward.1} parent=11 // pred_fallthru
        _
      // Predicated region
      $region37: #{forward.1} parent=11 // pred_check
        %p560 = pneg %p485
      $region38: #{forward.1} parent=11 // pred_check_branch
        %562 = sbr.rel (%p560) target = $region40
      $region39: #{forward.1} parent=11 // pred_region
        _
      $region40: #{forward.1} parent=11 // pred_fallthru
        _
      // Predicated region
      $region41: #{forward.1} parent=11 // pred_check
        %p563 = pneg %p506
      $region42: #{forward.1} parent=11 // pred_check_branch
        %565 = sbr.rel (%p563) target = $region44
      $region43: #{forward.1} parent=11 // pred_region
        _
      $region44: #{forward.1} parent=11 // pred_fallthru
        _
    $region12: #{forward.1} parent=5 // pred_fallthru
      _
    %p566 = scmp.lt.s32.totalorder %s26, 2
    // Predicated region
    $region45: #{forward.1} parent=5 // pred_check
      %p567 = pneg %p566
    $region46: #{forward.1} parent=5 // pred_check_branch
      %569 = sbr.rel (%p567) target = $region48
    $region47: #{forward.1} parent=5 // pred_region
      // Predicated region
      $region49: #{forward.1} parent=47 // pred_check
        %p570 = pneg %p130
      $region50: #{forward.1} parent=47 // pred_check_branch
        %572 = sbr.rel (%p570) target = $region52
      $region51: #{forward.1} parent=47 // pred_region
        %p573 = scmp.lt.s32.totalorder %s26, 1
        %s574 = scalar_select %p573, %s26, 1
        %s575 = smul.addr %s574, 4
        %s576 = smul.addr %s575, 4
        %s577 = scalar_lea.vmem %s4, %s576
      $region52: #{forward.1} parent=47 // pred_fallthru
        _
      // Predicated region
      $region53: #{forward.1} parent=47 // pred_check
        %p578 = pneg %p156
      $region54: #{forward.1} parent=47 // pred_check_branch
        %580 = sbr.rel (%p578) target = $region56
      $region55: #{forward.1} parent=47 // pred_region
        %p581 = scmp.lt.s32.totalorder %s26, 1
        %s582 = scalar_select %p581, %s26, 1
        %s583 = scalar_lea.vmem %s5, %s582
      $region56: #{forward.1} parent=47 // pred_fallthru
        _
      // Predicated region
      $region57: #{forward.1} parent=47 // pred_check
        %p584 = pneg %p182
      $region58: #{forward.1} parent=47 // pred_check_branch
        %586 = sbr.rel (%p584) target = $region60
      $region59: #{forward.1} parent=47 // pred_region
        %p587 = scmp.lt.s32.totalorder %s26, 1
        %s588 = scalar_select %p587, %s26, 1
        %s589 = smul.addr %s588, 4
        %s590 = smul.addr %s589, 4
        %s591 = scalar_lea.vmem %s6, %s590
      $region60: #{forward.1} parent=47 // pred_fallthru
        _
      // Predicated region
      $region61: #{forward.1} parent=47 // pred_check
        %p592 = pneg %p208
      $region62: #{forward.1} parent=47 // pred_check_branch
        %594 = sbr.rel (%p592) target = $region64
      $region63: #{forward.1} parent=47 // pred_region
        %p595 = scmp.lt.s32.totalorder %s26, 1
        %s596 = scalar_select %p595, %s26, 1
        %s597 = scalar_lea.vmem %s7, %s596
      $region64: #{forward.1} parent=47 // pred_fallthru
        _
      // Predicated region
      $region65: #{forward.1} parent=47 // pred_check
        %p598 = pneg %p234
      $region66: #{forward.1} parent=47 // pred_check_branch
        %600 = sbr.rel (%p598) target = $region68
      $region67: #{forward.1} parent=47 // pred_region
        %p601 = scmp.lt.s32.totalorder %s26, 1
        %s602 = scalar_select %p601, %s26, 1
        %s603 = scalar_lea.vmem %s8, %s602
      $region68: #{forward.1} parent=47 // pred_fallthru
        _
      // Predicated region
      $region69: #{forward.1} parent=47 // pred_check
        %p604 = pneg %p260
      $region70: #{forward.1} parent=47 // pred_check_branch
        %606 = sbr.rel (%p604) target = $region72
      $region71: #{forward.1} parent=47 // pred_region
        %p607 = scmp.lt.s32.totalorder %s26, 1
        %s608 = scalar_select %p607, %s26, 1
        %s609 = scalar_lea.vmem %s9, %s608
      $region72: #{forward.1} parent=47 // pred_fallthru
        _
      // Predicated region
      $region73: #{forward.1} parent=47 // pred_check
        %p610 = pneg %p286
      $region74: #{forward.1} parent=47 // pred_check_branch
        %612 = sbr.rel (%p610) target = $region76
      $region75: #{forward.1} parent=47 // pred_region
        %p613 = scmp.lt.s32.totalorder %s26, 1
        %s614 = scalar_select %p613, %s26, 1
        %s615 = smul.addr %s614, 4
        %s616 = smul.addr %s615, 4
        %s617 = scalar_lea.vmem %s10, %s616
      $region76: #{forward.1} parent=47 // pred_fallthru
        _
      // Predicated region
      $region77: #{forward.1} parent=47 // pred_check
        %p618 = pneg %p312
      $region78: #{forward.1} parent=47 // pred_check_branch
        %620 = sbr.rel (%p618) target = $region80
      $region79: #{forward.1} parent=47 // pred_region
        %p621 = scmp.lt.s32.totalorder %s26, 1
        %s622 = scalar_select %p621, %s26, 1
        %s623 = scalar_lea.vmem %s11, %s622
      $region80: #{forward.1} parent=47 // pred_fallthru
        _
      // Predicated region
      $region81: #{forward.1} parent=47 // pred_check
        %p624 = pneg %p338
      $region82: #{forward.1} parent=47 // pred_check_branch
        %626 = sbr.rel (%p624) target = $region84
      $region83: #{forward.1} parent=47 // pred_region
        %p627 = scmp.lt.s32.totalorder %s26, 1
        %s628 = scalar_select %p627, %s26, 1
        %s629 = smul.addr %s628, 8
        %s630 = smul.addr %s629, 4
        %s631 = scalar_lea.vmem %s12, %s630
      $region84: #{forward.1} parent=47 // pred_fallthru
        _
      // Predicated region
      $region85: #{forward.1} parent=47 // pred_check
        %p632 = pneg %p364
      $region86: #{forward.1} parent=47 // pred_check_branch
        %634 = sbr.rel (%p632) target = $region88
      $region87: #{forward.1} parent=47 // pred_region
        %p635 = scmp.lt.s32.totalorder %s26, 1
        %s636 = scalar_select %p635, %s26, 1
        %s637 = scalar_lea.vmem %s13, %s636
      $region88: #{forward.1} parent=47 // pred_fallthru
        _
      // Predicated region
      $region89: #{forward.1} parent=47 // pred_check
        %p638 = pneg %p390
      $region90: #{forward.1} parent=47 // pred_check_branch
        %640 = sbr.rel (%p638) target = $region92
      $region91: #{forward.1} parent=47 // pred_region
        %p641 = scmp.lt.s32.totalorder %s26, 1
        %s642 = scalar_select %p641, %s26, 1
        %s643 = scalar_lea.vmem %s14, %s642
      $region92: #{forward.1} parent=47 // pred_fallthru
        _
      // Predicated region
      $region93: #{forward.1} parent=47 // pred_check
        %p644 = pneg %p416
      $region94: #{forward.1} parent=47 // pred_check_branch
        %646 = sbr.rel (%p644) target = $region96
      $region95: #{forward.1} parent=47 // pred_region
        %p647 = scmp.lt.s32.totalorder %s26, 1
        %s648 = scalar_select %p647, %s26, 1
        %s649 = scalar_lea.vmem %s15, %s648
      $region96: #{forward.1} parent=47 // pred_fallthru
        _
    $region48: #{forward.1} parent=5 // pred_fallthru
      _
    %p650 = scmp.le.s32.totalorder 1, %s26
    %p651 = scmp.lt.s32.totalorder %s26, 3
    %p652 = pnand %p650, %p651
    %p653 = pneg %p652
    // Predicated region
    $region97: #{forward.1} parent=5 // pred_check
      _
    $region98: #{forward.1} parent=5 // pred_check_branch
      %655 = sbr.rel (%p652) target = $region100
    $region99: #{forward.1} parent=5 // pred_region
      %s656 = ssub.s32 %s26, 1
      %p657 = pneg %p47
      %p658 = pneg %p44
      %p659 = pneg %p68
      %p660 = pneg %p65
      %p661 = pneg %p89
      %p662 = pneg %p86
      %p663 = pneg %p110
      %p664 = pneg %p107
      %p665 = scmp.lt.s32.totalorder %s31, 1
      %s666 = scalar_select %p665, %s31, 1
      %s667 = smul.addr %s666, 4
      %s668 = smul.addr %s667, 4
      %s669 = scalar_lea.vmem %s4, %s668
      %p670 = pneg %p136
      %p671 = pneg %p133
      %p672 = scmp.lt.s32.totalorder %s31, 1
      %s673 = scalar_select %p672, %s31, 1
      %s674 = scalar_lea.vmem %s5, %s673
      %p675 = pneg %p162
      %p676 = pneg %p159
      %p677 = scmp.lt.s32.totalorder %s31, 1
      %s678 = scalar_select %p677, %s31, 1
      %s679 = smul.addr %s678, 4
      %s680 = smul.addr %s679, 4
      %s681 = scalar_lea.vmem %s6, %s680
      %p682 = pneg %p188
      %p683 = pneg %p185
      %p684 = scmp.lt.s32.totalorder %s31, 1
      %s685 = scalar_select %p684, %s31, 1
      %s686 = scalar_lea.vmem %s7, %s685
      %p687 = pneg %p214
      %p688 = pneg %p211
      %p689 = scmp.lt.s32.totalorder %s31, 1
      %s690 = scalar_select %p689, %s31, 1
      %s691 = scalar_lea.vmem %s8, %s690
      %p692 = pneg %p240
      %p693 = pneg %p237
      %p694 = scmp.lt.s32.totalorder %s31, 1
      %s695 = scalar_select %p694, %s31, 1
      %s696 = scalar_lea.vmem %s9, %s695
      %p697 = pneg %p266
      %p698 = pneg %p263
      %p699 = scmp.lt.s32.totalorder %s31, 1
      %s700 = scalar_select %p699, %s31, 1
      %s701 = smul.addr %s700, 4
      %s702 = smul.addr %s701, 4
      %s703 = scalar_lea.vmem %s10, %s702
      %p704 = pneg %p292
      %p705 = pneg %p289
      %p706 = scmp.lt.s32.totalorder %s31, 1
      %s707 = scalar_select %p706, %s31, 1
      %s708 = scalar_lea.vmem %s11, %s707
      %p709 = pneg %p318
      %p710 = pneg %p315
      %p711 = scmp.lt.s32.totalorder %s31, 1
      %s712 = scalar_select %p711, %s31, 1
      %s713 = smul.addr %s712, 8
      %s714 = smul.addr %s713, 4
      %s715 = scalar_lea.vmem %s12, %s714
      %p716 = pneg %p344
      %p717 = pneg %p341
      %p718 = scmp.lt.s32.totalorder %s31, 1
      %s719 = scalar_select %p718, %s31, 1
      %s720 = scalar_lea.vmem %s13, %s719
      %p721 = pneg %p370
      %p722 = pneg %p367
      %p723 = scmp.lt.s32.totalorder %s31, 1
      %s724 = scalar_select %p723, %s31, 1
      %s725 = scalar_lea.vmem %s14, %s724
      %p726 = pneg %p396
      %p727 = pneg %p393
      %p728 = scmp.lt.s32.totalorder %s31, 1
      %s729 = scalar_select %p728, %s31, 1
      %s730 = scalar_lea.vmem %s15, %s729
      %p731 = pneg %p422
      %p732 = pneg %p419
      %p733 = pneg %p443
      %p734 = pneg %p440
      %p735 = pneg %p464
      %p736 = pneg %p461
      %p737 = pneg %p485
      %p738 = pneg %p482
      %p739 = pneg %p506
      %p740 = pneg %p503
      %p741 = pneg %p527
      %p742 = pneg %p524
      %p743 = scmp.lt.s32.totalorder %s31, 1
      %s744 = scalar_select %p743, %s31, 1
      %s745 = smul.addr %s744, 4
      %s746 = smul.addr %s745, 4
      %s747 = scalar_lea.vmem %s4, %s746
      %p748 = scmp.lt.s32.totalorder %s31, 1
      %s749 = scalar_select %p748, %s31, 1
      %s750 = scalar_lea.vmem %s5, %s749
      %p751 = scmp.lt.s32.totalorder %s31, 1
      %s752 = scalar_select %p751, %s31, 1
      %s753 = smul.addr %s752, 4
      %s754 = smul.addr %s753, 4
      %s755 = scalar_lea.vmem %s6, %s754
      %p756 = scmp.lt.s32.totalorder %s31, 1
      %s757 = scalar_select %p756, %s31, 1
      %s758 = scalar_lea.vmem %s7, %s757
      %p759 = scmp.lt.s32.totalorder %s31, 1
      %s760 = scalar_select %p759, %s31, 1
      %s761 = scalar_lea.vmem %s8, %s760
      %p762 = scmp.lt.s32.totalorder %s31, 1
      %s763 = scalar_select %p762, %s31, 1
      %s764 = scalar_lea.vmem %s9, %s763
      %p765 = scmp.lt.s32.totalorder %s31, 1
      %s766 = scalar_select %p765, %s31, 1
      %s767 = smul.addr %s766, 4
      %s768 = smul.addr %s767, 4
      %s769 = scalar_lea.vmem %s10, %s768
      %p770 = scmp.lt.s32.totalorder %s31, 1
      %s771 = scalar_select %p770, %s31, 1
      %s772 = scalar_lea.vmem %s11, %s771
      %p773 = scmp.lt.s32.totalorder %s31, 1
      %s774 = scalar_select %p773, %s31, 1
      %s775 = smul.addr %s774, 8
      %s776 = smul.addr %s775, 4
      %s777 = scalar_lea.vmem %s12, %s776
      %p778 = scmp.lt.s32.totalorder %s31, 1
      %s779 = scalar_select %p778, %s31, 1
      %s780 = scalar_lea.vmem %s13, %s779
      %p781 = scmp.lt.s32.totalorder %s31, 1
      %s782 = scalar_select %p781, %s31, 1
      %s783 = scalar_lea.vmem %s14, %s782
      %p784 = scmp.lt.s32.totalorder %s31, 1
      %s785 = scalar_select %p784, %s31, 1
      %s786 = scalar_lea.vmem %s15, %s785
      %p788 = scmp.eq.s32.totalorder %s31, 0
      // Predicated region
      $region101: #{forward.1} parent=99 // pred_check
        %p789 = pneg %p788
      $region102: #{forward.1} parent=99 // pred_check_branch
        %791 = sbr.rel (%p789) target = $region104
      $region103: #{forward.1} parent=99 // pred_region
        %v792 = vld [vmem:[%s0] sm:$0xff]
        %v793 = vld [vmem:[%s0 + $0x8] sm:$0xff]
        %v794 = vld [vmem:[%s2] sm:$0x1]
        %v795 = vld [vmem:[%s3] sm:$0x1]
        %vm796 = vcmask 261120
        %v797 = vsel %vm796, %v792, 0.0
        %798 = vadd.xlane.f32.xlu0 %v797
        %v799 = vpop.xlane.xlu0 %798
        %v800 = vsel %vm796, %v793, 0.0
        %801 = vadd.xlane.f32.xlu0 %v800
        %v802 = vpop.xlane.xlu0 %801
        %v803 = vrcp.pop 32.0
        %v804 = vmul.f32 %v799, %v803
        %v805 = vmul.f32 %v802, %v803
        %v806 = vsub.f32 %v792, %v804
        %v807 = vsub.f32 %v793, %v805
        %v808 = vmul.f32 %v806, %v806
        %v809 = vmul.f32 %v807, %v807
        %v810 = vsel %vm796, %v808, 0.0
        %811 = vadd.xlane.f32.xlu0 %v810
        %v812 = vpop.xlane.xlu0 %811
        %v813 = vsel %vm796, %v809, 0.0
        %814 = vadd.xlane.f32.xlu0 %v813
        %v815 = vpop.xlane.xlu0 %814
        %v816 = vmul.f32 %v812, %v803
        %v817 = vmul.f32 %v815, %v803
        %v818 = vadd.f32 %v816, 1e-05
        %v819 = vadd.f32 %v817, 1e-05
        %v820 = vrsqrt.pop %v818
        %v821 = vrsqrt.pop %v819
        %v822 = vmul.f32 %v806, %v820
        %v823 = vmul.f32 %v807, %v821
        %v825 = vlaneseq
        %v826 = vshrl.u32 %v825, 7
        %v827 = vsub.s32 0, %v826
        %v828 = vrot.slane %v794, %v827
        %v830 = vmul.f32 %v822, %v828
        %v831 = vmul.f32 %v823, %v828
        %v833 = vlaneseq
        %v834 = vshrl.u32 %v833, 7
        %v835 = vsub.s32 0, %v834
        %v836 = vrot.slane %v795, %v835
        %v838 = vadd.f32 %v830, %v836
        %v839 = vadd.f32 %v831, %v836
        %840 = vst.msk [vmem:[#allocation2] sm:$0xff] %vm796, %v838
        %841 = vst.msk [vmem:[#allocation2 + $0x8] sm:$0xff] %vm796, %v839
      $region104: #{forward.1} parent=99 // pred_fallthru
        _
      %v842 = vld [vmem:[#allocation2] sm:$0xff]
      %v843 = vld [vmem:[#allocation2 + $0x8] sm:$0xff]
      %v844 = vpack.c.bf16 %v843, %v842
      %v845 = vld [vmem:[%s747] sm:$0xf]
      %v846 = vld [vmem:[%s747 + $0x4] sm:$0xf]
      %v847 = vld [vmem:[%s747 + $0x8] sm:$0xf]
      %v848 = vld [vmem:[%s747 + $0xc] sm:$0xf]
      %v849 = vld [vmem:[%s750] sm:$0x1]
      %v851 = vlaneseq
      %v852 = vshrl.u32 %v851, 7
      %v853 = vsub.s32 0, %v852
      %v854 = vrot.slane %v849, %v853
      %v860 = vunpack.c.l.b16 %v845
      %v861 = vunpack.c.l.b16 %v846
      %v862 = vunpack.c.l.b16 %v847
      %v863 = vunpack.c.l.b16 %v848
      %v864 = vpack.c.b16 %v861, %v860
      %v865 = vpack.c.b16 %v863, %v862
      %vm868 = vcmask 261120
      %v870 = vsel %vm868, %v844, 0
      %872 = vmatprep.subr.bf16.mxu0 0
      %873 = vmatpush1.bf16.msra.mxu0 %v864
      %874 = vmatprep.subr.bf16.mxu0 0
      %875 = vmatpush1.bf16.msra.mxu0 %v865
      %876 = vmatprep.subr.bf16.mxu0 0
      %877 = vmatpush1.bf16.msra.mxu0 0
      %878 = vmatprep.subr.bf16.mxu0 0
      %879 = vmatpush1.bf16.msra.mxu0 0
      %880 = vmatprep.subr.bf16.mxu0 0
      %881 = vmatpush1.bf16.msra.mxu0 0
      %882 = vmatprep.subr.bf16.mxu0 0
      %883 = vmatpush1.bf16.msra.mxu0 0
      %884 = vmatprep.subr.bf16.mxu0 0
      %885 = vmatpush1.bf16.msra.mxu0 0
      %886 = vmatprep.subr.bf16.mxu0 0
      %887 = vmatpush1.bf16.msra.mxu0 0
      %888 = vmatprep.subr.bf16.mxu0 0
      %889 = vmatpush1.bf16.msra.mxu0 0
      %890 = vmatprep.subr.bf16.mxu0 0
      %891 = vmatpush1.bf16.msra.mxu0 0
      %892 = vmatprep.subr.bf16.mxu0 0
      %893 = vmatpush1.bf16.msra.mxu0 0
      %894 = vmatprep.subr.bf16.mxu0 0
      %895 = vmatpush1.bf16.msra.mxu0 0
      %896 = vmatprep.subr.bf16.mxu0 0
      %897 = vmatpush1.bf16.msra.mxu0 0
      %898 = vmatprep.subr.bf16.mxu0 0
      %899 = vmatpush1.bf16.msra.mxu0 0
      %900 = vmatprep.subr.bf16.mxu0 0
      %901 = vmatpush1.bf16.msra.mxu0 0
      %902 = vmatprep.subr.bf16.mxu0 0
      %903 = vmatpush1.bf16.msra.mxu0 0
      %904 = vmatprep.mubr.bf16.mxu0 0
      %905 = vmatmul.mubr.bf16.gmra.mrb[0].mxu0 %v870
      %v906 = vpop.f32.mrb[0].mxu0
      %v907 = vadd.f32 %v854, %v906
      %v908 = vpop.f32.mrb[0].mxu0
      %v909 = vpop.f32.mrb[0].mxu0
      %v910 = vadd.f32 %v854, %v909
      %v911 = vpop.f32.mrb[0].mxu0
      %912 = vdwg.mxu0
      %915 = vrot.lane.b32.xlu0 %v907, 120
      %v916 = vpop.permute.xlu0 %915
      %917 = vrot.lane.b32.xlu0 %v910, 120
      %v918 = vpop.permute.xlu0 %917
      %921 = vrot.lane.b32.xlu0 %v907, 112
      %v922 = vpop.permute.xlu0 %921
      %923 = vrot.lane.b32.xlu0 %v910, 112
      %v924 = vpop.permute.xlu0 %923
      %927 = vrot.lane.b32.xlu0 %v907, 104
      %v928 = vpop.permute.xlu0 %927
      %929 = vrot.lane.b32.xlu0 %v910, 104
      %v930 = vpop.permute.xlu0 %929
      %v933 = vcombine.low %v907, %v922
      %v934 = vcombine.high %v907, %v922
      %v936 = vunpack.c.l.s4 1983009808
      %v937 = vunpack.c.0.s8 %v936
      %v938 = vlaneseq
      %v939 = vshrl.u32 %v938, 7
      %v940 = vsub.s32 %v937, %v939
      %v941 = vrot.slane %v933, %v940
      %v943 = vunpack.c.l.s4 1983009808
      %v944 = vunpack.c.0.s8 %v943
      %v945 = vlaneseq
      %v946 = vshrl.u32 %v945, 7
      %v947 = vsub.s32 %v944, %v946
      %v948 = vrot.slane %v934, %v947
      %v949 = vcombine.low %v916, %v928
      %v950 = vcombine.high %v916, %v928
      %v952 = vunpack.c.l.s4 1983009808
      %v953 = vunpack.c.0.s8 %v952
      %v954 = vlaneseq
      %v955 = vshrl.u32 %v954, 7
      %v956 = vsub.s32 %v953, %v955
      %v957 = vrot.slane %v949, %v956
      %v959 = vunpack.c.l.s4 1983009808
      %v960 = vunpack.c.0.s8 %v959
      %v961 = vlaneseq
      %v962 = vshrl.u32 %v961, 7
      %v963 = vsub.s32 %v960, %v962
      %v964 = vrot.slane %v950, %v963
      %v965 = vcombine.low %v941, %v957
      %v966 = vcombine.high %v941, %v957
      %v968 = vunpack.c.l.s4 1934713408
      %v969 = vunpack.c.0.s8 %v968
      %v970 = vlaneseq
      %v971 = vshrl.u32 %v970, 7
      %v972 = vsub.s32 %v969, %v971
      %v973 = vrot.slane %v965, %v972
      %v975 = vunpack.c.l.s4 1934713408
      %v976 = vunpack.c.0.s8 %v975
      %v977 = vlaneseq
      %v978 = vshrl.u32 %v977, 7
      %v979 = vsub.s32 %v976, %v978
      %v980 = vrot.slane %v966, %v979
      %v981 = vcombine.low %v948, %v964
      %v982 = vcombine.high %v948, %v964
      %v984 = vunpack.c.l.s4 1934713408
      %v985 = vunpack.c.0.s8 %v984
      %v986 = vlaneseq
      %v987 = vshrl.u32 %v986, 7
      %v988 = vsub.s32 %v985, %v987
      %v989 = vrot.slane %v981, %v988
      %v991 = vunpack.c.l.s4 1934713408
      %v992 = vunpack.c.0.s8 %v991
      %v993 = vlaneseq
      %v994 = vshrl.u32 %v993, 7
      %v995 = vsub.s32 %v992, %v994
      %v996 = vrot.slane %v982, %v995
      %v997 = vcombine.high %v973, 0.0
      %v998 = vcombine.high %v980, 0.0
      %v999 = vcombine.high %v989, 0.0
      %v1000 = vcombine.high %v996, 0.0
      %v1001 = vcombine.low %v910, %v924
      %v1002 = vcombine.high %v910, %v924
      %v1004 = vunpack.c.l.s4 1983009808
      %v1005 = vunpack.c.0.s8 %v1004
      %v1006 = vlaneseq
      %v1007 = vshrl.u32 %v1006, 7
      %v1008 = vsub.s32 %v1005, %v1007
      %v1009 = vrot.slane %v1001, %v1008
      %v1011 = vunpack.c.l.s4 1983009808
      %v1012 = vunpack.c.0.s8 %v1011
      %v1013 = vlaneseq
      %v1014 = vshrl.u32 %v1013, 7
      %v1015 = vsub.s32 %v1012, %v1014
      %v1016 = vrot.slane %v1002, %v1015
      %v1017 = vcombine.low %v918, %v930
      %v1018 = vcombine.high %v918, %v930
      %v1020 = vunpack.c.l.s4 1983009808
      %v1021 = vunpack.c.0.s8 %v1020
      %v1022 = vlaneseq
      %v1023 = vshrl.u32 %v1022, 7
      %v1024 = vsub.s32 %v1021, %v1023
      %v1025 = vrot.slane %v1017, %v1024
      %v1027 = vunpack.c.l.s4 1983009808
      %v1028 = vunpack.c.0.s8 %v1027
      %v1029 = vlaneseq
      %v1030 = vshrl.u32 %v1029, 7
      %v1031 = vsub.s32 %v1028, %v1030
      %v1032 = vrot.slane %v1018, %v1031
      %v1033 = vcombine.low %v1009, %v1025
      %v1034 = vcombine.high %v1009, %v1025
      %v1036 = vunpack.c.l.s4 1934713408
      %v1037 = vunpack.c.0.s8 %v1036
      %v1038 = vlaneseq
      %v1039 = vshrl.u32 %v1038, 7
      %v1040 = vsub.s32 %v1037, %v1039
      %v1041 = vrot.slane %v1033, %v1040
      %v1043 = vunpack.c.l.s4 1934713408
      %v1044 = vunpack.c.0.s8 %v1043
      %v1045 = vlaneseq
      %v1046 = vshrl.u32 %v1045, 7
      %v1047 = vsub.s32 %v1044, %v1046
      %v1048 = vrot.slane %v1034, %v1047
      %v1049 = vcombine.low %v1016, %v1032
      %v1050 = vcombine.high %v1016, %v1032
      %v1052 = vunpack.c.l.s4 1934713408
      %v1053 = vunpack.c.0.s8 %v1052
      %v1054 = vlaneseq
      %v1055 = vshrl.u32 %v1054, 7
      %v1056 = vsub.s32 %v1053, %v1055
      %v1057 = vrot.slane %v1049, %v1056
      %v1059 = vunpack.c.l.s4 1934713408
      %v1060 = vunpack.c.0.s8 %v1059
      %v1061 = vlaneseq
      %v1062 = vshrl.u32 %v1061, 7
      %v1063 = vsub.s32 %v1060, %v1062
      %v1064 = vrot.slane %v1050, %v1063
      %v1065 = vcombine.high %v1041, 0.0
      %v1066 = vcombine.high %v1048, 0.0
      %v1067 = vcombine.high %v1057, 0.0
      %v1068 = vcombine.high %v1064, 0.0
      %v1069 = vcombine.low %v973, %v980
      %v1071 = vunpack.c.l.s4 1983009808
      %v1072 = vunpack.c.0.s8 %v1071
      %v1073 = vlaneseq
      %v1074 = vshrl.u32 %v1073, 7
      %v1075 = vsub.s32 %v1072, %v1074
      %v1076 = vrot.slane %v1069, %v1075
      %v1077 = vcombine.low %v997, %v998
      %v1079 = vunpack.c.l.s4 1983009808
      %v1080 = vunpack.c.0.s8 %v1079
      %v1081 = vlaneseq
      %v1082 = vshrl.u32 %v1081, 7
      %v1083 = vsub.s32 %v1080, %v1082
      %v1084 = vrot.slane %v1077, %v1083
      %v1085 = vcombine.low %v989, %v996
      %v1087 = vunpack.c.l.s4 1983009808
      %v1088 = vunpack.c.0.s8 %v1087
      %v1089 = vlaneseq
      %v1090 = vshrl.u32 %v1089, 7
      %v1091 = vsub.s32 %v1088, %v1090
      %v1092 = vrot.slane %v1085, %v1091
      %v1093 = vcombine.low %v999, %v1000
      %v1095 = vunpack.c.l.s4 1983009808
      %v1096 = vunpack.c.0.s8 %v1095
      %v1097 = vlaneseq
      %v1098 = vshrl.u32 %v1097, 7
      %v1099 = vsub.s32 %v1096, %v1098
      %v1100 = vrot.slane %v1093, %v1099
      %v1101 = vcombine.low %v1076, %v1084
      %v1102 = vcombine.high %v1076, %v1084
      %v1104 = vunpack.c.l.s4 1934713408
      %v1105 = vunpack.c.0.s8 %v1104
      %v1106 = vlaneseq
      %v1107 = vshrl.u32 %v1106, 7
      %v1108 = vsub.s32 %v1105, %v1107
      %v1109 = vrot.slane %v1101, %v1108
      %v1111 = vunpack.c.l.s4 1934713408
      %v1112 = vunpack.c.0.s8 %v1111
      %v1113 = vlaneseq
      %v1114 = vshrl.u32 %v1113, 7
      %v1115 = vsub.s32 %v1112, %v1114
      %v1116 = vrot.slane %v1102, %v1115
      %v1117 = vcombine.low %v1092, %v1100
      %v1118 = vcombine.high %v1092, %v1100
      %v1120 = vunpack.c.l.s4 1934713408
      %v1121 = vunpack.c.0.s8 %v1120
      %v1122 = vlaneseq
      %v1123 = vshrl.u32 %v1122, 7
      %v1124 = vsub.s32 %v1121, %v1123
      %v1125 = vrot.slane %v1117, %v1124
      %v1127 = vunpack.c.l.s4 1934713408
      %v1128 = vunpack.c.0.s8 %v1127
      %v1129 = vlaneseq
      %v1130 = vshrl.u32 %v1129, 7
      %v1131 = vsub.s32 %v1128, %v1130
      %v1132 = vrot.slane %v1118, %v1131
      %v1133 = vcombine.low %v1109, %v1125
      %v1134 = vcombine.high %v1109, %v1125
      %v1135 = vcombine.low %v1116, %v1132
      %v1136 = vcombine.high %v1116, %v1132
      %v1137 = vcombine.low %v1041, %v1048
      %v1139 = vunpack.c.l.s4 1983009808
      %v1140 = vunpack.c.0.s8 %v1139
      %v1141 = vlaneseq
      %v1142 = vshrl.u32 %v1141, 7
      %v1143 = vsub.s32 %v1140, %v1142
      %v1144 = vrot.slane %v1137, %v1143
      %v1145 = vcombine.low %v1065, %v1066
      %v1147 = vunpack.c.l.s4 1983009808
      %v1148 = vunpack.c.0.s8 %v1147
      %v1149 = vlaneseq
      %v1150 = vshrl.u32 %v1149, 7
      %v1151 = vsub.s32 %v1148, %v1150
      %v1152 = vrot.slane %v1145, %v1151
      %v1153 = vcombine.low %v1057, %v1064
      %v1155 = vunpack.c.l.s4 1983009808
      %v1156 = vunpack.c.0.s8 %v1155
      %v1157 = vlaneseq
      %v1158 = vshrl.u32 %v1157, 7
      %v1159 = vsub.s32 %v1156, %v1158
      %v1160 = vrot.slane %v1153, %v1159
      %v1161 = vcombine.low %v1067, %v1068
      %v1163 = vunpack.c.l.s4 1983009808
      %v1164 = vunpack.c.0.s8 %v1163
      %v1165 = vlaneseq
      %v1166 = vshrl.u32 %v1165, 7
      %v1167 = vsub.s32 %v1164, %v1166
      %v1168 = vrot.slane %v1161, %v1167
      %v1169 = vcombine.low %v1144, %v1152
      %v1170 = vcombine.high %v1144, %v1152
      %v1172 = vunpack.c.l.s4 1934713408
      %v1173 = vunpack.c.0.s8 %v1172
      %v1174 = vlaneseq
      %v1175 = vshrl.u32 %v1174, 7
      %v1176 = vsub.s32 %v1173, %v1175
      %v1177 = vrot.slane %v1169, %v1176
      %v1179 = vunpack.c.l.s4 1934713408
      %v1180 = vunpack.c.0.s8 %v1179
      %v1181 = vlaneseq
      %v1182 = vshrl.u32 %v1181, 7
      %v1183 = vsub.s32 %v1180, %v1182
      %v1184 = vrot.slane %v1170, %v1183
      %v1185 = vcombine.low %v1160, %v1168
      %v1186 = vcombine.high %v1160, %v1168
      %v1188 = vunpack.c.l.s4 1934713408
      %v1189 = vunpack.c.0.s8 %v1188
      %v1190 = vlaneseq
      %v1191 = vshrl.u32 %v1190, 7
      %v1192 = vsub.s32 %v1189, %v1191
      %v1193 = vrot.slane %v1185, %v1192
      %v1195 = vunpack.c.l.s4 1934713408
      %v1196 = vunpack.c.0.s8 %v1195
      %v1197 = vlaneseq
      %v1198 = vshrl.u32 %v1197, 7
      %v1199 = vsub.s32 %v1196, %v1198
      %v1200 = vrot.slane %v1186, %v1199
      %v1201 = vcombine.low %v1177, %v1193
      %v1202 = vcombine.high %v1177, %v1193
      %v1203 = vcombine.low %v1184, %v1200
      %v1204 = vcombine.high %v1184, %v1200
      %v1205 = vpack.c.bf16 %v1133, %v1133
      %v1206 = vpack.c.bf16 %v1201, %v1201
      %v1207 = vpack.c.bf16 %v1134, %v1134
      %v1208 = vpack.c.bf16 %v1202, %v1202
      %v1209 = vpack.c.bf16 %v1135, %v1135
      %v1210 = vpack.c.bf16 %v1203, %v1203
      %v1211 = vpack.c.bf16 %v1136, %v1136
      %v1212 = vpack.c.bf16 %v1204, %v1204
      %1213 = vrot.lane.b32.xlu0 %v907, 96
      %v1214 = vpop.permute.xlu0 %1213
      %1215 = vrot.lane.b32.xlu0 %v910, 96
      %v1216 = vpop.permute.xlu0 %1215
      %1217 = vrot.lane.b32.xlu0 %v916, 96
      %v1218 = vpop.permute.xlu0 %1217
      %1219 = vrot.lane.b32.xlu0 %v918, 96
      %v1220 = vpop.permute.xlu0 %1219
      %1221 = vrot.lane.b32.xlu0 %v922, 96
      %v1222 = vpop.permute.xlu0 %1221
      %1223 = vrot.lane.b32.xlu0 %v924, 96
      %v1224 = vpop.permute.xlu0 %1223
      %1225 = vrot.lane.b32.xlu0 %v928, 96
      %v1226 = vpop.permute.xlu0 %1225
      %1227 = vrot.lane.b32.xlu0 %v930, 96
      %v1228 = vpop.permute.xlu0 %1227
      %v1237 = vcombine.low %v1214, %v1222
      %v1238 = vcombine.high %v1214, %v1222
      %v1240 = vunpack.c.l.s4 1983009808
      %v1241 = vunpack.c.0.s8 %v1240
      %v1242 = vlaneseq
      %v1243 = vshrl.u32 %v1242, 7
      %v1244 = vsub.s32 %v1241, %v1243
      %v1245 = vrot.slane %v1237, %v1244
      %v1247 = vunpack.c.l.s4 1983009808
      %v1248 = vunpack.c.0.s8 %v1247
      %v1249 = vlaneseq
      %v1250 = vshrl.u32 %v1249, 7
      %v1251 = vsub.s32 %v1248, %v1250
      %v1252 = vrot.slane %v1238, %v1251
      %v1253 = vcombine.low %v1218, %v1226
      %v1254 = vcombine.high %v1218, %v1226
      %v1256 = vunpack.c.l.s4 1983009808
      %v1257 = vunpack.c.0.s8 %v1256
      %v1258 = vlaneseq
      %v1259 = vshrl.u32 %v1258, 7
      %v1260 = vsub.s32 %v1257, %v1259
      %v1261 = vrot.slane %v1253, %v1260
      %v1263 = vunpack.c.l.s4 1983009808
      %v1264 = vunpack.c.0.s8 %v1263
      %v1265 = vlaneseq
      %v1266 = vshrl.u32 %v1265, 7
      %v1267 = vsub.s32 %v1264, %v1266
      %v1268 = vrot.slane %v1254, %v1267
      %v1269 = vcombine.low %v1245, %v1261
      %v1270 = vcombine.high %v1245, %v1261
      %v1272 = vunpack.c.l.s4 1934713408
      %v1273 = vunpack.c.0.s8 %v1272
      %v1274 = vlaneseq
      %v1275 = vshrl.u32 %v1274, 7
      %v1276 = vsub.s32 %v1273, %v1275
      %v1277 = vrot.slane %v1269, %v1276
      %v1279 = vunpack.c.l.s4 1934713408
      %v1280 = vunpack.c.0.s8 %v1279
      %v1281 = vlaneseq
      %v1282 = vshrl.u32 %v1281, 7
      %v1283 = vsub.s32 %v1280, %v1282
      %v1284 = vrot.slane %v1270, %v1283
      %v1285 = vcombine.low %v1252, %v1268
      %v1286 = vcombine.high %v1252, %v1268
      %v1288 = vunpack.c.l.s4 1934713408
      %v1289 = vunpack.c.0.s8 %v1288
      %v1290 = vlaneseq
      %v1291 = vshrl.u32 %v1290, 7
      %v1292 = vsub.s32 %v1289, %v1291
      %v1293 = vrot.slane %v1285, %v1292
      %v1295 = vunpack.c.l.s4 1934713408
      %v1296 = vunpack.c.0.s8 %v1295
      %v1297 = vlaneseq
      %v1298 = vshrl.u32 %v1297, 7
      %v1299 = vsub.s32 %v1296, %v1298
      %v1300 = vrot.slane %v1286, %v1299
      %v1301 = vcombine.high %v1277, 0.0
      %v1302 = vcombine.high %v1284, 0.0
      %v1303 = vcombine.high %v1293, 0.0
      %v1304 = vcombine.high %v1300, 0.0
      %v1305 = vcombine.low %v1216, %v1224
      %v1306 = vcombine.high %v1216, %v1224
      %v1308 = vunpack.c.l.s4 1983009808
      %v1309 = vunpack.c.0.s8 %v1308
      %v1310 = vlaneseq
      %v1311 = vshrl.u32 %v1310, 7
      %v1312 = vsub.s32 %v1309, %v1311
      %v1313 = vrot.slane %v1305, %v1312
      %v1315 = vunpack.c.l.s4 1983009808
      %v1316 = vunpack.c.0.s8 %v1315
      %v1317 = vlaneseq
      %v1318 = vshrl.u32 %v1317, 7
      %v1319 = vsub.s32 %v1316, %v1318
      %v1320 = vrot.slane %v1306, %v1319
      %v1321 = vcombine.low %v1220, %v1228
      %v1322 = vcombine.high %v1220, %v1228
      %v1324 = vunpack.c.l.s4 1983009808
      %v1325 = vunpack.c.0.s8 %v1324
      %v1326 = vlaneseq
      %v1327 = vshrl.u32 %v1326, 7
      %v1328 = vsub.s32 %v1325, %v1327
      %v1329 = vrot.slane %v1321, %v1328
      %v1331 = vunpack.c.l.s4 1983009808
      %v1332 = vunpack.c.0.s8 %v1331
      %v1333 = vlaneseq
      %v1334 = vshrl.u32 %v1333, 7
      %v1335 = vsub.s32 %v1332, %v1334
      %v1336 = vrot.slane %v1322, %v1335
      %v1337 = vcombine.low %v1313, %v1329
      %v1338 = vcombine.high %v1313, %v1329
      %v1340 = vunpack.c.l.s4 1934713408
      %v1341 = vunpack.c.0.s8 %v1340
      %v1342 = vlaneseq
      %v1343 = vshrl.u32 %v1342, 7
      %v1344 = vsub.s32 %v1341, %v1343
      %v1345 = vrot.slane %v1337, %v1344
      %v1347 = vunpack.c.l.s4 1934713408
      %v1348 = vunpack.c.0.s8 %v1347
      %v1349 = vlaneseq
      %v1350 = vshrl.u32 %v1349, 7
      %v1351 = vsub.s32 %v1348, %v1350
      %v1352 = vrot.slane %v1338, %v1351
      %v1353 = vcombine.low %v1320, %v1336
      %v1354 = vcombine.high %v1320, %v1336
      %v1356 = vunpack.c.l.s4 1934713408
      %v1357 = vunpack.c.0.s8 %v1356
      %v1358 = vlaneseq
      %v1359 = vshrl.u32 %v1358, 7
      %v1360 = vsub.s32 %v1357, %v1359
      %v1361 = vrot.slane %v1353, %v1360
      %v1363 = vunpack.c.l.s4 1934713408
      %v1364 = vunpack.c.0.s8 %v1363
      %v1365 = vlaneseq
      %v1366 = vshrl.u32 %v1365, 7
      %v1367 = vsub.s32 %v1364, %v1366
      %v1368 = vrot.slane %v1354, %v1367
      %v1369 = vcombine.high %v1345, 0.0
      %v1370 = vcombine.high %v1352, 0.0
      %v1371 = vcombine.high %v1361, 0.0
      %v1372 = vcombine.high %v1368, 0.0
      %v1373 = vcombine.low %v1277, %v1284
      %v1375 = vunpack.c.l.s4 1983009808
      %v1376 = vunpack.c.0.s8 %v1375
      %v1377 = vlaneseq
      %v1378 = vshrl.u32 %v1377, 7
      %v1379 = vsub.s32 %v1376, %v1378
      %v1380 = vrot.slane %v1373, %v1379
      %v1381 = vcombine.low %v1301, %v1302
      %v1383 = vunpack.c.l.s4 1983009808
      %v1384 = vunpack.c.0.s8 %v1383
      %v1385 = vlaneseq
      %v1386 = vshrl.u32 %v1385, 7
      %v1387 = vsub.s32 %v1384, %v1386
      %v1388 = vrot.slane %v1381, %v1387
      %v1389 = vcombine.low %v1293, %v1300
      %v1391 = vunpack.c.l.s4 1983009808
      %v1392 = vunpack.c.0.s8 %v1391
      %v1393 = vlaneseq
      %v1394 = vshrl.u32 %v1393, 7
      %v1395 = vsub.s32 %v1392, %v1394
      %v1396 = vrot.slane %v1389, %v1395
      %v1397 = vcombine.low %v1303, %v1304
      %v1399 = vunpack.c.l.s4 1983009808
      %v1400 = vunpack.c.0.s8 %v1399
      %v1401 = vlaneseq
      %v1402 = vshrl.u32 %v1401, 7
      %v1403 = vsub.s32 %v1400, %v1402
      %v1404 = vrot.slane %v1397, %v1403
      %v1405 = vcombine.low %v1380, %v1388
      %v1406 = vcombine.high %v1380, %v1388
      %v1408 = vunpack.c.l.s4 1934713408
      %v1409 = vunpack.c.0.s8 %v1408
      %v1410 = vlaneseq
      %v1411 = vshrl.u32 %v1410, 7
      %v1412 = vsub.s32 %v1409, %v1411
      %v1413 = vrot.slane %v1405, %v1412
      %v1415 = vunpack.c.l.s4 1934713408
      %v1416 = vunpack.c.0.s8 %v1415
      %v1417 = vlaneseq
      %v1418 = vshrl.u32 %v1417, 7
      %v1419 = vsub.s32 %v1416, %v1418
      %v1420 = vrot.slane %v1406, %v1419
      %v1421 = vcombine.low %v1396, %v1404
      %v1422 = vcombine.high %v1396, %v1404
      %v1424 = vunpack.c.l.s4 1934713408
      %v1425 = vunpack.c.0.s8 %v1424
      %v1426 = vlaneseq
      %v1427 = vshrl.u32 %v1426, 7
      %v1428 = vsub.s32 %v1425, %v1427
      %v1429 = vrot.slane %v1421, %v1428
      %v1431 = vunpack.c.l.s4 1934713408
      %v1432 = vunpack.c.0.s8 %v1431
      %v1433 = vlaneseq
      %v1434 = vshrl.u32 %v1433, 7
      %v1435 = vsub.s32 %v1432, %v1434
      %v1436 = vrot.slane %v1422, %v1435
      %v1437 = vcombine.low %v1413, %v1429
      %v1438 = vcombine.high %v1413, %v1429
      %v1439 = vcombine.low %v1420, %v1436
      %v1440 = vcombine.high %v1420, %v1436
      %v1441 = vcombine.low %v1345, %v1352
      %v1443 = vunpack.c.l.s4 1983009808
      %v1444 = vunpack.c.0.s8 %v1443
      %v1445 = vlaneseq
      %v1446 = vshrl.u32 %v1445, 7
      %v1447 = vsub.s32 %v1444, %v1446
      %v1448 = vrot.slane %v1441, %v1447
      %v1449 = vcombine.low %v1369, %v1370
      %v1451 = vunpack.c.l.s4 1983009808
      %v1452 = vunpack.c.0.s8 %v1451
      %v1453 = vlaneseq
      %v1454 = vshrl.u32 %v1453, 7
      %v1455 = vsub.s32 %v1452, %v1454
      %v1456 = vrot.slane %v1449, %v1455
      %v1457 = vcombine.low %v1361, %v1368
      %v1459 = vunpack.c.l.s4 1983009808
      %v1460 = vunpack.c.0.s8 %v1459
      %v1461 = vlaneseq
      %v1462 = vshrl.u32 %v1461, 7
      %v1463 = vsub.s32 %v1460, %v1462
      %v1464 = vrot.slane %v1457, %v1463
      %v1465 = vcombine.low %v1371, %v1372
      %v1467 = vunpack.c.l.s4 1983009808
      %v1468 = vunpack.c.0.s8 %v1467
      %v1469 = vlaneseq
      %v1470 = vshrl.u32 %v1469, 7
      %v1471 = vsub.s32 %v1468, %v1470
      %v1472 = vrot.slane %v1465, %v1471
      %v1473 = vcombine.low %v1448, %v1456
      %v1474 = vcombine.high %v1448, %v1456
      %v1476 = vunpack.c.l.s4 1934713408
      %v1477 = vunpack.c.0.s8 %v1476
      %v1478 = vlaneseq
      %v1479 = vshrl.u32 %v1478, 7
      %v1480 = vsub.s32 %v1477, %v1479
      %v1481 = vrot.slane %v1473, %v1480
      %v1483 = vunpack.c.l.s4 1934713408
      %v1484 = vunpack.c.0.s8 %v1483
      %v1485 = vlaneseq
      %v1486 = vshrl.u32 %v1485, 7
      %v1487 = vsub.s32 %v1484, %v1486
      %v1488 = vrot.slane %v1474, %v1487
      %v1489 = vcombine.low %v1464, %v1472
      %v1490 = vcombine.high %v1464, %v1472
      %v1492 = vunpack.c.l.s4 1934713408
      %v1493 = vunpack.c.0.s8 %v1492
      %v1494 = vlaneseq
      %v1495 = vshrl.u32 %v1494, 7
      %v1496 = vsub.s32 %v1493, %v1495
      %v1497 = vrot.slane %v1489, %v1496
      %v1499 = vunpack.c.l.s4 1934713408
      %v1500 = vunpack.c.0.s8 %v1499
      %v1501 = vlaneseq
      %v1502 = vshrl.u32 %v1501, 7
      %v1503 = vsub.s32 %v1500, %v1502
      %v1504 = vrot.slane %v1490, %v1503
      %v1505 = vcombine.low %v1481, %v1497
      %v1506 = vcombine.high %v1481, %v1497
      %v1507 = vcombine.low %v1488, %v1504
      %v1508 = vcombine.high %v1488, %v1504
      %v1509 = vpack.c.bf16 %v1437, %v1437
      %v1510 = vpack.c.bf16 %v1505, %v1505
      %v1511 = vpack.c.bf16 %v1438, %v1438
      %v1512 = vpack.c.bf16 %v1506, %v1506
      %v1513 = vpack.c.bf16 %v1439, %v1439
      %v1514 = vpack.c.bf16 %v1507, %v1507
      %v1515 = vpack.c.bf16 %v1440, %v1440
      %v1516 = vpack.c.bf16 %v1508, %v1508
      %1517 = vrot.lane.b32.xlu0 %v907, 64
      %v1518 = vpop.permute.xlu0 %1517
      %1519 = vrot.lane.b32.xlu0 %v910, 64
      %v1520 = vpop.permute.xlu0 %1519
      %1521 = vrot.lane.b32.xlu0 %v916, 64
      %v1522 = vpop.permute.xlu0 %1521
      %1523 = vrot.lane.b32.xlu0 %v918, 64
      %v1524 = vpop.permute.xlu0 %1523
      %1525 = vrot.lane.b32.xlu0 %v922, 64
      %v1526 = vpop.permute.xlu0 %1525
      %1527 = vrot.lane.b32.xlu0 %v924, 64
      %v1528 = vpop.permute.xlu0 %1527
      %1529 = vrot.lane.b32.xlu0 %v928, 64
      %v1530 = vpop.permute.xlu0 %1529
      %1531 = vrot.lane.b32.xlu0 %v930, 64
      %v1532 = vpop.permute.xlu0 %1531
      %v1541 = vcombine.low %v1518, %v1526
      %v1542 = vcombine.high %v1518, %v1526
      %v1544 = vunpack.c.l.s4 1983009808
      %v1545 = vunpack.c.0.s8 %v1544
      %v1546 = vlaneseq
      %v1547 = vshrl.u32 %v1546, 7
      %v1548 = vsub.s32 %v1545, %v1547
      %v1549 = vrot.slane %v1541, %v1548
      %v1551 = vunpack.c.l.s4 1983009808
      %v1552 = vunpack.c.0.s8 %v1551
      %v1553 = vlaneseq
      %v1554 = vshrl.u32 %v1553, 7
      %v1555 = vsub.s32 %v1552, %v1554
      %v1556 = vrot.slane %v1542, %v1555
      %v1557 = vcombine.low %v1522, %v1530
      %v1558 = vcombine.high %v1522, %v1530
      %v1560 = vunpack.c.l.s4 1983009808
      %v1561 = vunpack.c.0.s8 %v1560
      %v1562 = vlaneseq
      %v1563 = vshrl.u32 %v1562, 7
      %v1564 = vsub.s32 %v1561, %v1563
      %v1565 = vrot.slane %v1557, %v1564
      %v1567 = vunpack.c.l.s4 1983009808
      %v1568 = vunpack.c.0.s8 %v1567
      %v1569 = vlaneseq
      %v1570 = vshrl.u32 %v1569, 7
      %v1571 = vsub.s32 %v1568, %v1570
      %v1572 = vrot.slane %v1558, %v1571
      %v1573 = vcombine.low %v1549, %v1565
      %v1574 = vcombine.high %v1549, %v1565
      %v1576 = vunpack.c.l.s4 1934713408
      %v1577 = vunpack.c.0.s8 %v1576
      %v1578 = vlaneseq
      %v1579 = vshrl.u32 %v1578, 7
      %v1580 = vsub.s32 %v1577, %v1579
      %v1581 = vrot.slane %v1573, %v1580
      %v1583 = vunpack.c.l.s4 1934713408
      %v1584 = vunpack.c.0.s8 %v1583
      %v1585 = vlaneseq
      %v1586 = vshrl.u32 %v1585, 7
      %v1587 = vsub.s32 %v1584, %v1586
      %v1588 = vrot.slane %v1574, %v1587
      %v1589 = vcombine.low %v1556, %v1572
      %v1590 = vcombine.high %v1556, %v1572
      %v1592 = vunpack.c.l.s4 1934713408
      %v1593 = vunpack.c.0.s8 %v1592
      %v1594 = vlaneseq
      %v1595 = vshrl.u32 %v1594, 7
      %v1596 = vsub.s32 %v1593, %v1595
      %v1597 = vrot.slane %v1589, %v1596
      %v1599 = vunpack.c.l.s4 1934713408
      %v1600 = vunpack.c.0.s8 %v1599
      %v1601 = vlaneseq
      %v1602 = vshrl.u32 %v1601, 7
      %v1603 = vsub.s32 %v1600, %v1602
      %v1604 = vrot.slane %v1590, %v1603
      %v1605 = vcombine.high %v1581, 0.0
      %v1606 = vcombine.high %v1588, 0.0
      %v1607 = vcombine.high %v1597, 0.0
      %v1608 = vcombine.high %v1604, 0.0
      %v1609 = vcombine.low %v1520, %v1528
      %v1610 = vcombine.high %v1520, %v1528
      %v1612 = vunpack.c.l.s4 1983009808
      %v1613 = vunpack.c.0.s8 %v1612
      %v1614 = vlaneseq
      %v1615 = vshrl.u32 %v1614, 7
      %v1616 = vsub.s32 %v1613, %v1615
      %v1617 = vrot.slane %v1609, %v1616
      %v1619 = vunpack.c.l.s4 1983009808
      %v1620 = vunpack.c.0.s8 %v1619
      %v1621 = vlaneseq
      %v1622 = vshrl.u32 %v1621, 7
      %v1623 = vsub.s32 %v1620, %v1622
      %v1624 = vrot.slane %v1610, %v1623
      %v1625 = vcombine.low %v1524, %v1532
      %v1626 = vcombine.high %v1524, %v1532
      %v1628 = vunpack.c.l.s4 1983009808
      %v1629 = vunpack.c.0.s8 %v1628
      %v1630 = vlaneseq
      %v1631 = vshrl.u32 %v1630, 7
      %v1632 = vsub.s32 %v1629, %v1631
      %v1633 = vrot.slane %v1625, %v1632
      %v1635 = vunpack.c.l.s4 1983009808
      %v1636 = vunpack.c.0.s8 %v1635
      %v1637 = vlaneseq
      %v1638 = vshrl.u32 %v1637, 7
      %v1639 = vsub.s32 %v1636, %v1638
      %v1640 = vrot.slane %v1626, %v1639
      %v1641 = vcombine.low %v1617, %v1633
      %v1642 = vcombine.high %v1617, %v1633
      %v1644 = vunpack.c.l.s4 1934713408
      %v1645 = vunpack.c.0.s8 %v1644
      %v1646 = vlaneseq
      %v1647 = vshrl.u32 %v1646, 7
      %v1648 = vsub.s32 %v1645, %v1647
      %v1649 = vrot.slane %v1641, %v1648
      %v1651 = vunpack.c.l.s4 1934713408
      %v1652 = vunpack.c.0.s8 %v1651
      %v1653 = vlaneseq
      %v1654 = vshrl.u32 %v1653, 7
      %v1655 = vsub.s32 %v1652, %v1654
      %v1656 = vrot.slane %v1642, %v1655
      %v1657 = vcombine.low %v1624, %v1640
      %v1658 = vcombine.high %v1624, %v1640
      %v1660 = vunpack.c.l.s4 1934713408
      %v1661 = vunpack.c.0.s8 %v1660
      %v1662 = vlaneseq
      %v1663 = vshrl.u32 %v1662, 7
      %v1664 = vsub.s32 %v1661, %v1663
      %v1665 = vrot.slane %v1657, %v1664
      %v1667 = vunpack.c.l.s4 1934713408
      %v1668 = vunpack.c.0.s8 %v1667
      %v1669 = vlaneseq
      %v1670 = vshrl.u32 %v1669, 7
      %v1671 = vsub.s32 %v1668, %v1670
      %v1672 = vrot.slane %v1658, %v1671
      %v1673 = vcombine.high %v1649, 0.0
      %v1674 = vcombine.high %v1656, 0.0
      %v1675 = vcombine.high %v1665, 0.0
      %v1676 = vcombine.high %v1672, 0.0
      %v1677 = vcombine.low %v1581, %v1588
      %v1679 = vunpack.c.l.s4 1983009808
      %v1680 = vunpack.c.0.s8 %v1679
      %v1681 = vlaneseq
      %v1682 = vshrl.u32 %v1681, 7
      %v1683 = vsub.s32 %v1680, %v1682
      %v1684 = vrot.slane %v1677, %v1683
      %v1685 = vcombine.low %v1605, %v1606
      %v1687 = vunpack.c.l.s4 1983009808
      %v1688 = vunpack.c.0.s8 %v1687
      %v1689 = vlaneseq
      %v1690 = vshrl.u32 %v1689, 7
      %v1691 = vsub.s32 %v1688, %v1690
      %v1692 = vrot.slane %v1685, %v1691
      %v1693 = vcombine.low %v1597, %v1604
      %v1695 = vunpack.c.l.s4 1983009808
      %v1696 = vunpack.c.0.s8 %v1695
      %v1697 = vlaneseq
      %v1698 = vshrl.u32 %v1697, 7
      %v1699 = vsub.s32 %v1696, %v1698
      %v1700 = vrot.slane %v1693, %v1699
      %v1701 = vcombine.low %v1607, %v1608
      %v1703 = vunpack.c.l.s4 1983009808
      %v1704 = vunpack.c.0.s8 %v1703
      %v1705 = vlaneseq
      %v1706 = vshrl.u32 %v1705, 7
      %v1707 = vsub.s32 %v1704, %v1706
      %v1708 = vrot.slane %v1701, %v1707
      %v1709 = vcombine.low %v1684, %v1692
      %v1710 = vcombine.high %v1684, %v1692
      %v1712 = vunpack.c.l.s4 1934713408
      %v1713 = vunpack.c.0.s8 %v1712
      %v1714 = vlaneseq
      %v1715 = vshrl.u32 %v1714, 7
      %v1716 = vsub.s32 %v1713, %v1715
      %v1717 = vrot.slane %v1709, %v1716
      %v1719 = vunpack.c.l.s4 1934713408
      %v1720 = vunpack.c.0.s8 %v1719
      %v1721 = vlaneseq
      %v1722 = vshrl.u32 %v1721, 7
      %v1723 = vsub.s32 %v1720, %v1722
      %v1724 = vrot.slane %v1710, %v1723
      %v1725 = vcombine.low %v1700, %v1708
      %v1726 = vcombine.high %v1700, %v1708
      %v1728 = vunpack.c.l.s4 1934713408
      %v1729 = vunpack.c.0.s8 %v1728
      %v1730 = vlaneseq
      %v1731 = vshrl.u32 %v1730, 7
      %v1732 = vsub.s32 %v1729, %v1731
      %v1733 = vrot.slane %v1725, %v1732
      %v1735 = vunpack.c.l.s4 1934713408
      %v1736 = vunpack.c.0.s8 %v1735
      %v1737 = vlaneseq
      %v1738 = vshrl.u32 %v1737, 7
      %v1739 = vsub.s32 %v1736, %v1738
      %v1740 = vrot.slane %v1726, %v1739
      %v1741 = vcombine.low %v1717, %v1733
      %v1742 = vcombine.high %v1717, %v1733
      %v1743 = vcombine.low %v1724, %v1740
      %v1744 = vcombine.high %v1724, %v1740
      %v1745 = vcombine.low %v1649, %v1656
      %v1747 = vunpack.c.l.s4 1983009808
      %v1748 = vunpack.c.0.s8 %v1747
      %v1749 = vlaneseq
      %v1750 = vshrl.u32 %v1749, 7
      %v1751 = vsub.s32 %v1748, %v1750
      %v1752 = vrot.slane %v1745, %v1751
      %v1753 = vcombine.low %v1673, %v1674
      %v1755 = vunpack.c.l.s4 1983009808
      %v1756 = vunpack.c.0.s8 %v1755
      %v1757 = vlaneseq
      %v1758 = vshrl.u32 %v1757, 7
      %v1759 = vsub.s32 %v1756, %v1758
      %v1760 = vrot.slane %v1753, %v1759
      %v1761 = vcombine.low %v1665, %v1672
      %v1763 = vunpack.c.l.s4 1983009808
      %v1764 = vunpack.c.0.s8 %v1763
      %v1765 = vlaneseq
      %v1766 = vshrl.u32 %v1765, 7
      %v1767 = vsub.s32 %v1764, %v1766
      %v1768 = vrot.slane %v1761, %v1767
      %v1769 = vcombine.low %v1675, %v1676
      %v1771 = vunpack.c.l.s4 1983009808
      %v1772 = vunpack.c.0.s8 %v1771
      %v1773 = vlaneseq
      %v1774 = vshrl.u32 %v1773, 7
      %v1775 = vsub.s32 %v1772, %v1774
      %v1776 = vrot.slane %v1769, %v1775
      %v1777 = vcombine.low %v1752, %v1760
      %v1778 = vcombine.high %v1752, %v1760
      %v1780 = vunpack.c.l.s4 1934713408
      %v1781 = vunpack.c.0.s8 %v1780
      %v1782 = vlaneseq
      %v1783 = vshrl.u32 %v1782, 7
      %v1784 = vsub.s32 %v1781, %v1783
      %v1785 = vrot.slane %v1777, %v1784
      %v1787 = vunpack.c.l.s4 1934713408
      %v1788 = vunpack.c.0.s8 %v1787
      %v1789 = vlaneseq
      %v1790 = vshrl.u32 %v1789, 7
      %v1791 = vsub.s32 %v1788, %v1790
      %v1792 = vrot.slane %v1778, %v1791
      %v1793 = vcombine.low %v1768, %v1776
      %v1794 = vcombine.high %v1768, %v1776
      %v1796 = vunpack.c.l.s4 1934713408
      %v1797 = vunpack.c.0.s8 %v1796
      %v1798 = vlaneseq
      %v1799 = vshrl.u32 %v1798, 7
      %v1800 = vsub.s32 %v1797, %v1799
      %v1801 = vrot.slane %v1793, %v1800
      %v1803 = vunpack.c.l.s4 1934713408
      %v1804 = vunpack.c.0.s8 %v1803
      %v1805 = vlaneseq
      %v1806 = vshrl.u32 %v1805, 7
      %v1807 = vsub.s32 %v1804, %v1806
      %v1808 = vrot.slane %v1794, %v1807
      %v1809 = vcombine.low %v1785, %v1801
      %v1810 = vcombine.high %v1785, %v1801
      %v1811 = vcombine.low %v1792, %v1808
      %v1812 = vcombine.high %v1792, %v1808
      %v1813 = vpack.c.bf16 %v1741, %v1741
      %v1814 = vpack.c.bf16 %v1809, %v1809
      %v1815 = vpack.c.bf16 %v1742, %v1742
      %v1816 = vpack.c.bf16 %v1810, %v1810
      %v1817 = vpack.c.bf16 %v1743, %v1743
      %v1818 = vpack.c.bf16 %v1811, %v1811
      %v1819 = vpack.c.bf16 %v1744, %v1744
      %v1820 = vpack.c.bf16 %v1812, %v1812
      %v1821 = vld [vmem:[%s1] sm:$0x1]
      %v1822 = vld [vmem:[%s1 + $0x1] sm:$0x1]
      %vm1823 = vcmask 64512
      %v1825 = vsel %vm1823, %v1205, 0
      %v1828 = vsel %vm1823, %v1509, 0
      %1830 = vmatprep.subr.bf16.mxu0 0
      %1831 = vmatpush1.bf16.xpose.msra.mxu0 %v1828
      %1832 = vmatprep.subr.bf16.mxu0 0
      %1833 = vmatpush1.bf16.xpose.msra.mxu0 0
      %1834 = vmatprep.subr.bf16.mxu0 0
      %1835 = vmatpush1.bf16.xpose.msra.mxu0 0
      %1836 = vmatprep.subr.bf16.mxu0 0
      %1837 = vmatpush1.bf16.xpose.msra.mxu0 0
      %1838 = vmatprep.subr.bf16.mxu0 0
      %1839 = vmatpush1.bf16.xpose.msra.mxu0 0
      %1840 = vmatprep.subr.bf16.mxu0 0
      %1841 = vmatpush1.bf16.xpose.msra.mxu0 0
      %1842 = vmatprep.subr.bf16.mxu0 0
      %1843 = vmatpush1.bf16.xpose.msra.mxu0 0
      %1844 = vmatprep.subr.bf16.mxu0 0
      %1845 = vmatpush1.bf16.xpose.msra.mxu0 0
      %1846 = vmatprep.subr.bf16.mxu0 0
      %1847 = vmatpush1.bf16.xpose.msra.mxu0 0
      %1848 = vmatprep.subr.bf16.mxu0 0
      %1849 = vmatpush1.bf16.xpose.msra.mxu0 0
      %1850 = vmatprep.subr.bf16.mxu0 0
      %1851 = vmatpush1.bf16.xpose.msra.mxu0 0
      %1852 = vmatprep.subr.bf16.mxu0 0
      %1853 = vmatpush1.bf16.xpose.msra.mxu0 0
      %1854 = vmatprep.subr.bf16.mxu0 0
      %1855 = vmatpush1.bf16.xpose.msra.mxu0 0
      %1856 = vmatprep.subr.bf16.mxu0 0
      %1857 = vmatpush1.bf16.xpose.msra.mxu0 0
      %1858 = vmatprep.subr.bf16.mxu0 0
      %1859 = vmatpush1.bf16.xpose.msra.mxu0 0
      %1860 = vmatprep.subr.bf16.mxu0 0
      %1861 = vmatpush1.bf16.xpose.msra.mxu0 0
      %1862 = vmatprep.mubr.bf16.mxu0 0
      %1863 = vmatmul.mubr.bf16.gmra.mrb[0].mxu0 %v1825
      %v1864 = vpop.f32.mrb[0].mxu0
      %v1865 = vadd.f32 0.0, %v1864
      %v1866 = vpop.f32.mrb[0].mxu0
      %v1867 = vpop.f32.mrb[0].mxu0
      %v1868 = vpop.f32.mrb[0].mxu0
      %1869 = vdwg.mxu0
      %v1871 = vsel %vm1823, %v1206, 0
      %v1874 = vsel %vm1823, %v1510, 0
      %1876 = vmatprep.subr.bf16.mxu0 0
      %1877 = vmatpush1.bf16.xpose.msra.mxu0 %v1874
      %1878 = vmatprep.subr.bf16.mxu0 0
      %1879 = vmatpush1.bf16.xpose.msra.mxu0 0
      %1880 = vmatprep.subr.bf16.mxu0 0
      %1881 = vmatpush1.bf16.xpose.msra.mxu0 0
      %1882 = vmatprep.subr.bf16.mxu0 0
      %1883 = vmatpush1.bf16.xpose.msra.mxu0 0
      %1884 = vmatprep.subr.bf16.mxu0 0
      %1885 = vmatpush1.bf16.xpose.msra.mxu0 0
      %1886 = vmatprep.subr.bf16.mxu0 0
      %1887 = vmatpush1.bf16.xpose.msra.mxu0 0
      %1888 = vmatprep.subr.bf16.mxu0 0
      %1889 = vmatpush1.bf16.xpose.msra.mxu0 0
      %1890 = vmatprep.subr.bf16.mxu0 0
      %1891 = vmatpush1.bf16.xpose.msra.mxu0 0
      %1892 = vmatprep.subr.bf16.mxu0 0
      %1893 = vmatpush1.bf16.xpose.msra.mxu0 0
      %1894 = vmatprep.subr.bf16.mxu0 0
      %1895 = vmatpush1.bf16.xpose.msra.mxu0 0
      %1896 = vmatprep.subr.bf16.mxu0 0
      %1897 = vmatpush1.bf16.xpose.msra.mxu0 0
      %1898 = vmatprep.subr.bf16.mxu0 0
      %1899 = vmatpush1.bf16.xpose.msra.mxu0 0
      %1900 = vmatprep.subr.bf16.mxu0 0
      %1901 = vmatpush1.bf16.xpose.msra.mxu0 0
      %1902 = vmatprep.subr.bf16.mxu0 0
      %1903 = vmatpush1.bf16.xpose.msra.mxu0 0
      %1904 = vmatprep.subr.bf16.mxu0 0
      %1905 = vmatpush1.bf16.xpose.msra.mxu0 0
      %1906 = vmatprep.subr.bf16.mxu0 0
      %1907 = vmatpush1.bf16.xpose.msra.mxu0 0
      %1908 = vmatprep.mubr.bf16.mxu0 0
      %1909 = vmatmul.mubr.bf16.gmra.mrb[0].mxu0 %v1871
      %v1910 = vpop.f32.mrb[0].mxu0
      %v1911 = vadd.f32 0.0, %v1910
      %v1912 = vpop.f32.mrb[0].mxu0
      %v1913 = vpop.f32.mrb[0].mxu0
      %v1914 = vpop.f32.mrb[0].mxu0
      %1915 = vdwg.mxu0
      %v1917 = vsel %vm1823, %v1207, 0
      %v1920 = vsel %vm1823, %v1511, 0
      %1922 = vmatprep.subr.bf16.mxu0 0
      %1923 = vmatpush1.bf16.xpose.msra.mxu0 %v1920
      %1924 = vmatprep.subr.bf16.mxu0 0
      %1925 = vmatpush1.bf16.xpose.msra.mxu0 0
      %1926 = vmatprep.subr.bf16.mxu0 0
      %1927 = vmatpush1.bf16.xpose.msra.mxu0 0
      %1928 = vmatprep.subr.bf16.mxu0 0
      %1929 = vmatpush1.bf16.xpose.msra.mxu0 0
      %1930 = vmatprep.subr.bf16.mxu0 0
      %1931 = vmatpush1.bf16.xpose.msra.mxu0 0
      %1932 = vmatprep.subr.bf16.mxu0 0
      %1933 = vmatpush1.bf16.xpose.msra.mxu0 0
      %1934 = vmatprep.subr.bf16.mxu0 0
      %1935 = vmatpush1.bf16.xpose.msra.mxu0 0
      %1936 = vmatprep.subr.bf16.mxu0 0
      %1937 = vmatpush1.bf16.xpose.msra.mxu0 0
      %1938 = vmatprep.subr.bf16.mxu0 0
      %1939 = vmatpush1.bf16.xpose.msra.mxu0 0
      %1940 = vmatprep.subr.bf16.mxu0 0
      %1941 = vmatpush1.bf16.xpose.msra.mxu0 0
      %1942 = vmatprep.subr.bf16.mxu0 0
      %1943 = vmatpush1.bf16.xpose.msra.mxu0 0
      %1944 = vmatprep.subr.bf16.mxu0 0
      %1945 = vmatpush1.bf16.xpose.msra.mxu0 0
      %1946 = vmatprep.subr.bf16.mxu0 0
      %1947 = vmatpush1.bf16.xpose.msra.mxu0 0
      %1948 = vmatprep.subr.bf16.mxu0 0
      %1949 = vmatpush1.bf16.xpose.msra.mxu0 0
      %1950 = vmatprep.subr.bf16.mxu0 0
      %1951 = vmatpush1.bf16.xpose.msra.mxu0 0
      %1952 = vmatprep.subr.bf16.mxu0 0
      %1953 = vmatpush1.bf16.xpose.msra.mxu0 0
      %1954 = vmatprep.mubr.bf16.mxu0 0
      %1955 = vmatmul.mubr.bf16.gmra.mrb[0].mxu0 %v1917
      %v1956 = vpop.f32.mrb[0].mxu0
      %v1957 = vadd.f32 0.0, %v1956
      %v1958 = vpop.f32.mrb[0].mxu0
      %v1959 = vpop.f32.mrb[0].mxu0
      %v1960 = vpop.f32.mrb[0].mxu0
      %1961 = vdwg.mxu0
      %v1963 = vsel %vm1823, %v1208, 0
      %v1966 = vsel %vm1823, %v1512, 0
      %1968 = vmatprep.subr.bf16.mxu0 0
      %1969 = vmatpush1.bf16.xpose.msra.mxu0 %v1966
      %1970 = vmatprep.subr.bf16.mxu0 0
      %1971 = vmatpush1.bf16.xpose.msra.mxu0 0
      %1972 = vmatprep.subr.bf16.mxu0 0
      %1973 = vmatpush1.bf16.xpose.msra.mxu0 0
      %1974 = vmatprep.subr.bf16.mxu0 0
      %1975 = vmatpush1.bf16.xpose.msra.mxu0 0
      %1976 = vmatprep.subr.bf16.mxu0 0
      %1977 = vmatpush1.bf16.xpose.msra.mxu0 0
      %1978 = vmatprep.subr.bf16.mxu0 0
      %1979 = vmatpush1.bf16.xpose.msra.mxu0 0
      %1980 = vmatprep.subr.bf16.mxu0 0
      %1981 = vmatpush1.bf16.xpose.msra.mxu0 0
      %1982 = vmatprep.subr.bf16.mxu0 0
      %1983 = vmatpush1.bf16.xpose.msra.mxu0 0
      %1984 = vmatprep.subr.bf16.mxu0 0
      %1985 = vmatpush1.bf16.xpose.msra.mxu0 0
      %1986 = vmatprep.subr.bf16.mxu0 0
      %1987 = vmatpush1.bf16.xpose.msra.mxu0 0
      %1988 = vmatprep.subr.bf16.mxu0 0
      %1989 = vmatpush1.bf16.xpose.msra.mxu0 0
      %1990 = vmatprep.subr.bf16.mxu0 0
      %1991 = vmatpush1.bf16.xpose.msra.mxu0 0
      %1992 = vmatprep.subr.bf16.mxu0 0
      %1993 = vmatpush1.bf16.xpose.msra.mxu0 0
      %1994 = vmatprep.subr.bf16.mxu0 0
      %1995 = vmatpush1.bf16.xpose.msra.mxu0 0
      %1996 = vmatprep.subr.bf16.mxu0 0
      %1997 = vmatpush1.bf16.xpose.msra.mxu0 0
      %1998 = vmatprep.subr.bf16.mxu0 0
      %1999 = vmatpush1.bf16.xpose.msra.mxu0 0
      %2000 = vmatprep.mubr.bf16.mxu0 0
      %2001 = vmatmul.mubr.bf16.gmra.mrb[0].mxu0 %v1963
      %v2002 = vpop.f32.mrb[0].mxu0
      %v2003 = vadd.f32 0.0, %v2002
      %v2004 = vpop.f32.mrb[0].mxu0
      %v2005 = vpop.f32.mrb[0].mxu0
      %v2006 = vpop.f32.mrb[0].mxu0
      %2007 = vdwg.mxu0
      %v2009 = vsel %vm1823, %v1209, 0
      %v2012 = vsel %vm1823, %v1513, 0
      %2014 = vmatprep.subr.bf16.mxu0 0
      %2015 = vmatpush1.bf16.xpose.msra.mxu0 %v2012
      %2016 = vmatprep.subr.bf16.mxu0 0
      %2017 = vmatpush1.bf16.xpose.msra.mxu0 0
      %2018 = vmatprep.subr.bf16.mxu0 0
      %2019 = vmatpush1.bf16.xpose.msra.mxu0 0
      %2020 = vmatprep.subr.bf16.mxu0 0
      %2021 = vmatpush1.bf16.xpose.msra.mxu0 0
      %2022 = vmatprep.subr.bf16.mxu0 0
      %2023 = vmatpush1.bf16.xpose.msra.mxu0 0
      %2024 = vmatprep.subr.bf16.mxu0 0
      %2025 = vmatpush1.bf16.xpose.msra.mxu0 0
      %2026 = vmatprep.subr.bf16.mxu0 0
      %2027 = vmatpush1.bf16.xpose.msra.mxu0 0
      %2028 = vmatprep.subr.bf16.mxu0 0
      %2029 = vmatpush1.bf16.xpose.msra.mxu0 0
      %2030 = vmatprep.subr.bf16.mxu0 0
      %2031 = vmatpush1.bf16.xpose.msra.mxu0 0
      %2032 = vmatprep.subr.bf16.mxu0 0
      %2033 = vmatpush1.bf16.xpose.msra.mxu0 0
      %2034 = vmatprep.subr.bf16.mxu0 0
      %2035 = vmatpush1.bf16.xpose.msra.mxu0 0
      %2036 = vmatprep.subr.bf16.mxu0 0
      %2037 = vmatpush1.bf16.xpose.msra.mxu0 0
      %2038 = vmatprep.subr.bf16.mxu0 0
      %2039 = vmatpush1.bf16.xpose.msra.mxu0 0
      %2040 = vmatprep.subr.bf16.mxu0 0
      %2041 = vmatpush1.bf16.xpose.msra.mxu0 0
      %2042 = vmatprep.subr.bf16.mxu0 0
      %2043 = vmatpush1.bf16.xpose.msra.mxu0 0
      %2044 = vmatprep.subr.bf16.mxu0 0
      %2045 = vmatpush1.bf16.xpose.msra.mxu0 0
      %2046 = vmatprep.mubr.bf16.mxu0 0
      %2047 = vmatmul.mubr.bf16.gmra.mrb[0].mxu0 %v2009
      %v2048 = vpop.f32.mrb[0].mxu0
      %v2049 = vadd.f32 0.0, %v2048
      %v2050 = vpop.f32.mrb[0].mxu0
      %v2051 = vpop.f32.mrb[0].mxu0
      %v2052 = vpop.f32.mrb[0].mxu0
      %2053 = vdwg.mxu0
      %v2055 = vsel %vm1823, %v1210, 0
      %v2058 = vsel %vm1823, %v1514, 0
      %2060 = vmatprep.subr.bf16.mxu0 0
      %2061 = vmatpush1.bf16.xpose.msra.mxu0 %v2058
      %2062 = vmatprep.subr.bf16.mxu0 0
      %2063 = vmatpush1.bf16.xpose.msra.mxu0 0
      %2064 = vmatprep.subr.bf16.mxu0 0
      %2065 = vmatpush1.bf16.xpose.msra.mxu0 0
      %2066 = vmatprep.subr.bf16.mxu0 0
      %2067 = vmatpush1.bf16.xpose.msra.mxu0 0
      %2068 = vmatprep.subr.bf16.mxu0 0
      %2069 = vmatpush1.bf16.xpose.msra.mxu0 0
      %2070 = vmatprep.subr.bf16.mxu0 0
      %2071 = vmatpush1.bf16.xpose.msra.mxu0 0
      %2072 = vmatprep.subr.bf16.mxu0 0
      %2073 = vmatpush1.bf16.xpose.msra.mxu0 0
      %2074 = vmatprep.subr.bf16.mxu0 0
      %2075 = vmatpush1.bf16.xpose.msra.mxu0 0
      %2076 = vmatprep.subr.bf16.mxu0 0
      %2077 = vmatpush1.bf16.xpose.msra.mxu0 0
      %2078 = vmatprep.subr.bf16.mxu0 0
      %2079 = vmatpush1.bf16.xpose.msra.mxu0 0
      %2080 = vmatprep.subr.bf16.mxu0 0
      %2081 = vmatpush1.bf16.xpose.msra.mxu0 0
      %2082 = vmatprep.subr.bf16.mxu0 0
      %2083 = vmatpush1.bf16.xpose.msra.mxu0 0
      %2084 = vmatprep.subr.bf16.mxu0 0
      %2085 = vmatpush1.bf16.xpose.msra.mxu0 0
      %2086 = vmatprep.subr.bf16.mxu0 0
      %2087 = vmatpush1.bf16.xpose.msra.mxu0 0
      %2088 = vmatprep.subr.bf16.mxu0 0
      %2089 = vmatpush1.bf16.xpose.msra.mxu0 0
      %2090 = vmatprep.subr.bf16.mxu0 0
      %2091 = vmatpush1.bf16.xpose.msra.mxu0 0
      %2092 = vmatprep.mubr.bf16.mxu0 0
      %2093 = vmatmul.mubr.bf16.gmra.mrb[0].mxu0 %v2055
      %v2094 = vpop.f32.mrb[0].mxu0
      %v2095 = vadd.f32 0.0, %v2094
      %v2096 = vpop.f32.mrb[0].mxu0
      %v2097 = vpop.f32.mrb[0].mxu0
      %v2098 = vpop.f32.mrb[0].mxu0
      %2099 = vdwg.mxu0
      %v2101 = vsel %vm1823, %v1211, 0
      %v2104 = vsel %vm1823, %v1515, 0
      %2106 = vmatprep.subr.bf16.mxu0 0
      %2107 = vmatpush1.bf16.xpose.msra.mxu0 %v2104
      %2108 = vmatprep.subr.bf16.mxu0 0
      %2109 = vmatpush1.bf16.xpose.msra.mxu0 0
      %2110 = vmatprep.subr.bf16.mxu0 0
      %2111 = vmatpush1.bf16.xpose.msra.mxu0 0
      %2112 = vmatprep.subr.bf16.mxu0 0
      %2113 = vmatpush1.bf16.xpose.msra.mxu0 0
      %2114 = vmatprep.subr.bf16.mxu0 0
      %2115 = vmatpush1.bf16.xpose.msra.mxu0 0
      %2116 = vmatprep.subr.bf16.mxu0 0
      %2117 = vmatpush1.bf16.xpose.msra.mxu0 0
      %2118 = vmatprep.subr.bf16.mxu0 0
      %2119 = vmatpush1.bf16.xpose.msra.mxu0 0
      %2120 = vmatprep.subr.bf16.mxu0 0
      %2121 = vmatpush1.bf16.xpose.msra.mxu0 0
      %2122 = vmatprep.subr.bf16.mxu0 0
      %2123 = vmatpush1.bf16.xpose.msra.mxu0 0
      %2124 = vmatprep.subr.bf16.mxu0 0
      %2125 = vmatpush1.bf16.xpose.msra.mxu0 0
      %2126 = vmatprep.subr.bf16.mxu0 0
      %2127 = vmatpush1.bf16.xpose.msra.mxu0 0
      %2128 = vmatprep.subr.bf16.mxu0 0
      %2129 = vmatpush1.bf16.xpose.msra.mxu0 0
      %2130 = vmatprep.subr.bf16.mxu0 0
      %2131 = vmatpush1.bf16.xpose.msra.mxu0 0
      %2132 = vmatprep.subr.bf16.mxu0 0
      %2133 = vmatpush1.bf16.xpose.msra.mxu0 0
      %2134 = vmatprep.subr.bf16.mxu0 0
      %2135 = vmatpush1.bf16.xpose.msra.mxu0 0
      %2136 = vmatprep.subr.bf16.mxu0 0
      %2137 = vmatpush1.bf16.xpose.msra.mxu0 0
      %2138 = vmatprep.mubr.bf16.mxu0 0
      %2139 = vmatmul.mubr.bf16.gmra.mrb[0].mxu0 %v2101
      %v2140 = vpop.f32.mrb[0].mxu0
      %v2141 = vadd.f32 0.0, %v2140
      %v2142 = vpop.f32.mrb[0].mxu0
      %v2143 = vpop.f32.mrb[0].mxu0
      %v2144 = vpop.f32.mrb[0].mxu0
      %2145 = vdwg.mxu0
      %v2147 = vsel %vm1823, %v1212, 0
      %v2150 = vsel %vm1823, %v1516, 0
      %2152 = vmatprep.subr.bf16.mxu0 0
      %2153 = vmatpush1.bf16.xpose.msra.mxu0 %v2150
      %2154 = vmatprep.subr.bf16.mxu0 0
      %2155 = vmatpush1.bf16.xpose.msra.mxu0 0
      %2156 = vmatprep.subr.bf16.mxu0 0
      %2157 = vmatpush1.bf16.xpose.msra.mxu0 0
      %2158 = vmatprep.subr.bf16.mxu0 0
      %2159 = vmatpush1.bf16.xpose.msra.mxu0 0
      %2160 = vmatprep.subr.bf16.mxu0 0
      %2161 = vmatpush1.bf16.xpose.msra.mxu0 0
      %2162 = vmatprep.subr.bf16.mxu0 0
      %2163 = vmatpush1.bf16.xpose.msra.mxu0 0
      %2164 = vmatprep.subr.bf16.mxu0 0
      %2165 = vmatpush1.bf16.xpose.msra.mxu0 0
      %2166 = vmatprep.subr.bf16.mxu0 0
      %2167 = vmatpush1.bf16.xpose.msra.mxu0 0
      %2168 = vmatprep.subr.bf16.mxu0 0
      %2169 = vmatpush1.bf16.xpose.msra.mxu0 0
      %2170 = vmatprep.subr.bf16.mxu0 0
      %2171 = vmatpush1.bf16.xpose.msra.mxu0 0
      %2172 = vmatprep.subr.bf16.mxu0 0
      %2173 = vmatpush1.bf16.xpose.msra.mxu0 0
      %2174 = vmatprep.subr.bf16.mxu0 0
      %2175 = vmatpush1.bf16.xpose.msra.mxu0 0
      %2176 = vmatprep.subr.bf16.mxu0 0
      %2177 = vmatpush1.bf16.xpose.msra.mxu0 0
      %2178 = vmatprep.subr.bf16.mxu0 0
      %2179 = vmatpush1.bf16.xpose.msra.mxu0 0
      %2180 = vmatprep.subr.bf16.mxu0 0
      %2181 = vmatpush1.bf16.xpose.msra.mxu0 0
      %2182 = vmatprep.subr.bf16.mxu0 0
      %2183 = vmatpush1.bf16.xpose.msra.mxu0 0
      %2184 = vmatprep.mubr.bf16.mxu0 0
      %2185 = vmatmul.mubr.bf16.gmra.mrb[0].mxu0 %v2147
      %v2186 = vpop.f32.mrb[0].mxu0
      %v2187 = vadd.f32 0.0, %v2186
      %v2188 = vpop.f32.mrb[0].mxu0
      %v2189 = vpop.f32.mrb[0].mxu0
      %v2190 = vpop.f32.mrb[0].mxu0
      %2191 = vdwg.mxu0
      %v2192 = vmul.f32 %v1865, 0.35355338
      %v2193 = vmul.f32 %v1911, 0.35355338
      %v2194 = vmul.f32 %v1957, 0.35355338
      %v2195 = vmul.f32 %v2003, 0.35355338
      %v2196 = vmul.f32 %v2049, 0.35355338
      %v2197 = vmul.f32 %v2095, 0.35355338
      %v2198 = vmul.f32 %v2141, 0.35355338
      %v2199 = vmul.f32 %v2187, 0.35355338
      %v2202 = vlaneseq
      %v2203 = vshrl.u32 %v2202, 7
      %v2204 = vsub.s32 0, %v2203
      %v2205 = vrot.slane %v1821, %v2204
      %v2206 = vlaneseq
      %v2207 = vshrl.u32 %v2206, 7
      %v2208 = vsub.s32 0, %v2207
      %v2209 = vrot.slane %v1822, %v2208
      %v2212 = vadd.f32 %v2192, %v2205
      %v2213 = vadd.f32 %v2193, %v2209
      %v2214 = vadd.f32 %v2194, %v2205
      %v2215 = vadd.f32 %v2195, %v2209
      %v2216 = vadd.f32 %v2196, %v2205
      %v2217 = vadd.f32 %v2197, %v2209
      %v2218 = vadd.f32 %v2198, %v2205
      %v2219 = vadd.f32 %v2199, %v2209
      %v2220 = vsel %vm1823, %v2212, -inf
      %2221 = vmax.xlane.f32.xlu0 %v2220
      %v2222 = vpop.xlane.xlu0 %2221
      %v2223 = vsel %vm1823, %v2213, -inf
      %2224 = vmax.xlane.f32.xlu0 %v2223
      %v2225 = vpop.xlane.xlu0 %2224
      %v2226 = vsel %vm1823, %v2214, -inf
      %2227 = vmax.xlane.f32.xlu0 %v2226
      %v2228 = vpop.xlane.xlu0 %2227
      %v2229 = vsel %vm1823, %v2215, -inf
      %2230 = vmax.xlane.f32.xlu0 %v2229
      %v2231 = vpop.xlane.xlu0 %2230
      %v2232 = vsel %vm1823, %v2216, -inf
      %2233 = vmax.xlane.f32.xlu0 %v2232
      %v2234 = vpop.xlane.xlu0 %2233
      %v2235 = vsel %vm1823, %v2217, -inf
      %2236 = vmax.xlane.f32.xlu0 %v2235
      %v2237 = vpop.xlane.xlu0 %2236
      %v2238 = vsel %vm1823, %v2218, -inf
      %2239 = vmax.xlane.f32.xlu0 %v2238
      %v2240 = vpop.xlane.xlu0 %2239
      %v2241 = vsel %vm1823, %v2219, -inf
      %2242 = vmax.xlane.f32.xlu0 %v2241
      %v2243 = vpop.xlane.xlu0 %2242
      %v2244 = vsub.f32 %v2212, %v2222
      %v2245 = vsub.f32 %v2213, %v2225
      %v2246 = vsub.f32 %v2214, %v2228
      %v2247 = vsub.f32 %v2215, %v2231
      %v2248 = vsub.f32 %v2216, %v2234
      %v2249 = vsub.f32 %v2217, %v2237
      %v2250 = vsub.f32 %v2218, %v2240
      %v2251 = vsub.f32 %v2219, %v2243
      %v2252 = vmul.f32 %v2244, 1.442695
      %v2253 = vpow.pop %v2252
      %v2254 = vmul.f32 %v2245, 1.442695
      %v2255 = vpow.pop %v2254
      %v2256 = vmul.f32 %v2246, 1.442695
      %v2257 = vpow.pop %v2256
      %v2258 = vmul.f32 %v2247, 1.442695
      %v2259 = vpow.pop %v2258
      %v2260 = vmul.f32 %v2248, 1.442695
      %v2261 = vpow.pop %v2260
      %v2262 = vmul.f32 %v2249, 1.442695
      %v2263 = vpow.pop %v2262
      %v2264 = vmul.f32 %v2250, 1.442695
      %v2265 = vpow.pop %v2264
      %v2266 = vmul.f32 %v2251, 1.442695
      %v2267 = vpow.pop %v2266
      %v2268 = vsel %vm1823, %v2253, 0.0
      %2269 = vadd.xlane.f32.xlu0 %v2268
      %v2270 = vpop.xlane.xlu0 %2269
      %v2271 = vsel %vm1823, %v2255, 0.0
      %2272 = vadd.xlane.f32.xlu0 %v2271
      %v2273 = vpop.xlane.xlu0 %2272
      %v2274 = vsel %vm1823, %v2257, 0.0
      %2275 = vadd.xlane.f32.xlu0 %v2274
      %v2276 = vpop.xlane.xlu0 %2275
      %v2277 = vsel %vm1823, %v2259, 0.0
      %2278 = vadd.xlane.f32.xlu0 %v2277
      %v2279 = vpop.xlane.xlu0 %2278
      %v2280 = vsel %vm1823, %v2261, 0.0
      %2281 = vadd.xlane.f32.xlu0 %v2280
      %v2282 = vpop.xlane.xlu0 %2281
      %v2283 = vsel %vm1823, %v2263, 0.0
      %2284 = vadd.xlane.f32.xlu0 %v2283
      %v2285 = vpop.xlane.xlu0 %2284
      %v2286 = vsel %vm1823, %v2265, 0.0
      %2287 = vadd.xlane.f32.xlu0 %v2286
      %v2288 = vpop.xlane.xlu0 %2287
      %v2289 = vsel %vm1823, %v2267, 0.0
      %2290 = vadd.xlane.f32.xlu0 %v2289
      %v2291 = vpop.xlane.xlu0 %2290
      %v2292 = vrcp.pop %v2270
      %v2293 = vrcp.pop %v2273
      %v2294 = vrcp.pop %v2276
      %v2295 = vrcp.pop %v2279
      %v2296 = vrcp.pop %v2282
      %v2297 = vrcp.pop %v2285
      %v2298 = vrcp.pop %v2288
      %v2299 = vrcp.pop %v2291
      %v2300 = vmul.f32 %v2253, %v2292
      %v2301 = vmul.f32 %v2255, %v2293
      %v2302 = vmul.f32 %v2257, %v2294
      %v2303 = vmul.f32 %v2259, %v2295
      %v2304 = vmul.f32 %v2261, %v2296
      %v2305 = vmul.f32 %v2263, %v2297
      %v2306 = vmul.f32 %v2265, %v2298
      %v2307 = vmul.f32 %v2267, %v2299
      %v2308 = vpack.c.bf16 %v2300, %v2300
      %v2309 = vpack.c.bf16 %v2301, %v2301
      %v2310 = vpack.c.bf16 %v2302, %v2302
      %v2311 = vpack.c.bf16 %v2303, %v2303
      %v2312 = vpack.c.bf16 %v2304, %v2304
      %v2313 = vpack.c.bf16 %v2305, %v2305
      %v2314 = vpack.c.bf16 %v2306, %v2306
      %v2315 = vpack.c.bf16 %v2307, %v2307
      %v2317 = vsel %vm1823, %v2308, 0
      %vm2319 = vcmask 1043456
      %v2321 = vsel %vm2319, %v1813, 0
      %2323 = vmatprep.subr.bf16.mxu0 0
      %2324 = vmatpush1.bf16.msra.mxu0 %v2321
      %2325 = vmatprep.subr.bf16.mxu0 0
      %2326 = vmatpush1.bf16.msra.mxu0 0
      %2327 = vmatprep.subr.bf16.mxu0 0
      %2328 = vmatpush1.bf16.msra.mxu0 0
      %2329 = vmatprep.subr.bf16.mxu0 0
      %2330 = vmatpush1.bf16.msra.mxu0 0
      %2331 = vmatprep.subr.bf16.mxu0 0
      %2332 = vmatpush1.bf16.msra.mxu0 0
      %2333 = vmatprep.subr.bf16.mxu0 0
      %2334 = vmatpush1.bf16.msra.mxu0 0
      %2335 = vmatprep.subr.bf16.mxu0 0
      %2336 = vmatpush1.bf16.msra.mxu0 0
      %2337 = vmatprep.subr.bf16.mxu0 0
      %2338 = vmatpush1.bf16.msra.mxu0 0
      %2339 = vmatprep.subr.bf16.mxu0 0
      %2340 = vmatpush1.bf16.msra.mxu0 0
      %2341 = vmatprep.subr.bf16.mxu0 0
      %2342 = vmatpush1.bf16.msra.mxu0 0
      %2343 = vmatprep.subr.bf16.mxu0 0
      %2344 = vmatpush1.bf16.msra.mxu0 0
      %2345 = vmatprep.subr.bf16.mxu0 0
      %2346 = vmatpush1.bf16.msra.mxu0 0
      %2347 = vmatprep.subr.bf16.mxu0 0
      %2348 = vmatpush1.bf16.msra.mxu0 0
      %2349 = vmatprep.subr.bf16.mxu0 0
      %2350 = vmatpush1.bf16.msra.mxu0 0
      %2351 = vmatprep.subr.bf16.mxu0 0
      %2352 = vmatpush1.bf16.msra.mxu0 0
      %2353 = vmatprep.subr.bf16.mxu0 0
      %2354 = vmatpush1.bf16.msra.mxu0 0
      %2355 = vmatprep.mubr.bf16.mxu0 0
      %2356 = vmatmul.mubr.bf16.gmra.mrb[0].mxu0 %v2317
      %v2357 = vpop.f32.mrb[0].mxu0
      %v2358 = vadd.f32 0.0, %v2357
      %v2359 = vpop.f32.mrb[0].mxu0
      %v2360 = vpop.f32.mrb[0].mxu0
      %v2361 = vpop.f32.mrb[0].mxu0
      %2362 = vdwg.mxu0
      %v2364 = vsel %vm1823, %v2309, 0
      %v2367 = vsel %vm2319, %v1814, 0
      %2369 = vmatprep.subr.bf16.mxu0 0
      %2370 = vmatpush1.bf16.msra.mxu0 %v2367
      %2371 = vmatprep.subr.bf16.mxu0 0
      %2372 = vmatpush1.bf16.msra.mxu0 0
      %2373 = vmatprep.subr.bf16.mxu0 0
      %2374 = vmatpush1.bf16.msra.mxu0 0
      %2375 = vmatprep.subr.bf16.mxu0 0
      %2376 = vmatpush1.bf16.msra.mxu0 0
      %2377 = vmatprep.subr.bf16.mxu0 0
      %2378 = vmatpush1.bf16.msra.mxu0 0
      %2379 = vmatprep.subr.bf16.mxu0 0
      %2380 = vmatpush1.bf16.msra.mxu0 0
      %2381 = vmatprep.subr.bf16.mxu0 0
      %2382 = vmatpush1.bf16.msra.mxu0 0
      %2383 = vmatprep.subr.bf16.mxu0 0
      %2384 = vmatpush1.bf16.msra.mxu0 0
      %2385 = vmatprep.subr.bf16.mxu0 0
      %2386 = vmatpush1.bf16.msra.mxu0 0
      %2387 = vmatprep.subr.bf16.mxu0 0
      %2388 = vmatpush1.bf16.msra.mxu0 0
      %2389 = vmatprep.subr.bf16.mxu0 0
      %2390 = vmatpush1.bf16.msra.mxu0 0
      %2391 = vmatprep.subr.bf16.mxu0 0
      %2392 = vmatpush1.bf16.msra.mxu0 0
      %2393 = vmatprep.subr.bf16.mxu0 0
      %2394 = vmatpush1.bf16.msra.mxu0 0
      %2395 = vmatprep.subr.bf16.mxu0 0
      %2396 = vmatpush1.bf16.msra.mxu0 0
      %2397 = vmatprep.subr.bf16.mxu0 0
      %2398 = vmatpush1.bf16.msra.mxu0 0
      %2399 = vmatprep.subr.bf16.mxu0 0
      %2400 = vmatpush1.bf16.msra.mxu0 0
      %2401 = vmatprep.mubr.bf16.mxu0 0
      %2402 = vmatmul.mubr.bf16.gmra.mrb[0].mxu0 %v2364
      %v2403 = vpop.f32.mrb[0].mxu0
      %v2404 = vadd.f32 0.0, %v2403
      %v2405 = vpop.f32.mrb[0].mxu0
      %v2406 = vpop.f32.mrb[0].mxu0
      %v2407 = vpop.f32.mrb[0].mxu0
      %2408 = vdwg.mxu0
      %v2410 = vsel %vm1823, %v2310, 0
      %v2413 = vsel %vm2319, %v1815, 0
      %2415 = vmatprep.subr.bf16.mxu0 0
      %2416 = vmatpush1.bf16.msra.mxu0 %v2413
      %2417 = vmatprep.subr.bf16.mxu0 0
      %2418 = vmatpush1.bf16.msra.mxu0 0
      %2419 = vmatprep.subr.bf16.mxu0 0
      %2420 = vmatpush1.bf16.msra.mxu0 0
      %2421 = vmatprep.subr.bf16.mxu0 0
      %2422 = vmatpush1.bf16.msra.mxu0 0
      %2423 = vmatprep.subr.bf16.mxu0 0
      %2424 = vmatpush1.bf16.msra.mxu0 0
      %2425 = vmatprep.subr.bf16.mxu0 0
      %2426 = vmatpush1.bf16.msra.mxu0 0
      %2427 = vmatprep.subr.bf16.mxu0 0
      %2428 = vmatpush1.bf16.msra.mxu0 0
      %2429 = vmatprep.subr.bf16.mxu0 0
      %2430 = vmatpush1.bf16.msra.mxu0 0
      %2431 = vmatprep.subr.bf16.mxu0 0
      %2432 = vmatpush1.bf16.msra.mxu0 0
      %2433 = vmatprep.subr.bf16.mxu0 0
      %2434 = vmatpush1.bf16.msra.mxu0 0
      %2435 = vmatprep.subr.bf16.mxu0 0
      %2436 = vmatpush1.bf16.msra.mxu0 0
      %2437 = vmatprep.subr.bf16.mxu0 0
      %2438 = vmatpush1.bf16.msra.mxu0 0
      %2439 = vmatprep.subr.bf16.mxu0 0
      %2440 = vmatpush1.bf16.msra.mxu0 0
      %2441 = vmatprep.subr.bf16.mxu0 0
      %2442 = vmatpush1.bf16.msra.mxu0 0
      %2443 = vmatprep.subr.bf16.mxu0 0
      %2444 = vmatpush1.bf16.msra.mxu0 0
      %2445 = vmatprep.subr.bf16.mxu0 0
      %2446 = vmatpush1.bf16.msra.mxu0 0
      %2447 = vmatprep.mubr.bf16.mxu0 0
      %2448 = vmatmul.mubr.bf16.gmra.mrb[0].mxu0 %v2410
      %v2449 = vpop.f32.mrb[0].mxu0
      %v2450 = vadd.f32 0.0, %v2449
      %v2451 = vpop.f32.mrb[0].mxu0
      %v2452 = vpop.f32.mrb[0].mxu0
      %v2453 = vpop.f32.mrb[0].mxu0
      %2454 = vdwg.mxu0
      %v2456 = vsel %vm1823, %v2311, 0
      %v2459 = vsel %vm2319, %v1816, 0
      %2461 = vmatprep.subr.bf16.mxu0 0
      %2462 = vmatpush1.bf16.msra.mxu0 %v2459
      %2463 = vmatprep.subr.bf16.mxu0 0
      %2464 = vmatpush1.bf16.msra.mxu0 0
      %2465 = vmatprep.subr.bf16.mxu0 0
      %2466 = vmatpush1.bf16.msra.mxu0 0
      %2467 = vmatprep.subr.bf16.mxu0 0
      %2468 = vmatpush1.bf16.msra.mxu0 0
      %2469 = vmatprep.subr.bf16.mxu0 0
      %2470 = vmatpush1.bf16.msra.mxu0 0
      %2471 = vmatprep.subr.bf16.mxu0 0
      %2472 = vmatpush1.bf16.msra.mxu0 0
      %2473 = vmatprep.subr.bf16.mxu0 0
      %2474 = vmatpush1.bf16.msra.mxu0 0
      %2475 = vmatprep.subr.bf16.mxu0 0
      %2476 = vmatpush1.bf16.msra.mxu0 0
      %2477 = vmatprep.subr.bf16.mxu0 0
      %2478 = vmatpush1.bf16.msra.mxu0 0
      %2479 = vmatprep.subr.bf16.mxu0 0
      %2480 = vmatpush1.bf16.msra.mxu0 0
      %2481 = vmatprep.subr.bf16.mxu0 0
      %2482 = vmatpush1.bf16.msra.mxu0 0
      %2483 = vmatprep.subr.bf16.mxu0 0
      %2484 = vmatpush1.bf16.msra.mxu0 0
      %2485 = vmatprep.subr.bf16.mxu0 0
      %2486 = vmatpush1.bf16.msra.mxu0 0
      %2487 = vmatprep.subr.bf16.mxu0 0
      %2488 = vmatpush1.bf16.msra.mxu0 0
      %2489 = vmatprep.subr.bf16.mxu0 0
      %2490 = vmatpush1.bf16.msra.mxu0 0
      %2491 = vmatprep.subr.bf16.mxu0 0
      %2492 = vmatpush1.bf16.msra.mxu0 0
      %2493 = vmatprep.mubr.bf16.mxu0 0
      %2494 = vmatmul.mubr.bf16.gmra.mrb[0].mxu0 %v2456
      %v2495 = vpop.f32.mrb[0].mxu0
      %v2496 = vadd.f32 0.0, %v2495
      %v2497 = vpop.f32.mrb[0].mxu0
      %v2498 = vpop.f32.mrb[0].mxu0
      %v2499 = vpop.f32.mrb[0].mxu0
      %2500 = vdwg.mxu0
      %v2502 = vsel %vm1823, %v2312, 0
      %v2505 = vsel %vm2319, %v1817, 0
      %2507 = vmatprep.subr.bf16.mxu0 0
      %2508 = vmatpush1.bf16.msra.mxu0 %v2505
      %2509 = vmatprep.subr.bf16.mxu0 0
      %2510 = vmatpush1.bf16.msra.mxu0 0
      %2511 = vmatprep.subr.bf16.mxu0 0
      %2512 = vmatpush1.bf16.msra.mxu0 0
      %2513 = vmatprep.subr.bf16.mxu0 0
      %2514 = vmatpush1.bf16.msra.mxu0 0
      %2515 = vmatprep.subr.bf16.mxu0 0
      %2516 = vmatpush1.bf16.msra.mxu0 0
      %2517 = vmatprep.subr.bf16.mxu0 0
      %2518 = vmatpush1.bf16.msra.mxu0 0
      %2519 = vmatprep.subr.bf16.mxu0 0
      %2520 = vmatpush1.bf16.msra.mxu0 0
      %2521 = vmatprep.subr.bf16.mxu0 0
      %2522 = vmatpush1.bf16.msra.mxu0 0
      %2523 = vmatprep.subr.bf16.mxu0 0
      %2524 = vmatpush1.bf16.msra.mxu0 0
      %2525 = vmatprep.subr.bf16.mxu0 0
      %2526 = vmatpush1.bf16.msra.mxu0 0
      %2527 = vmatprep.subr.bf16.mxu0 0
      %2528 = vmatpush1.bf16.msra.mxu0 0
      %2529 = vmatprep.subr.bf16.mxu0 0
      %2530 = vmatpush1.bf16.msra.mxu0 0
      %2531 = vmatprep.subr.bf16.mxu0 0
      %2532 = vmatpush1.bf16.msra.mxu0 0
      %2533 = vmatprep.subr.bf16.mxu0 0
      %2534 = vmatpush1.bf16.msra.mxu0 0
      %2535 = vmatprep.subr.bf16.mxu0 0
      %2536 = vmatpush1.bf16.msra.mxu0 0
      %2537 = vmatprep.subr.bf16.mxu0 0
      %2538 = vmatpush1.bf16.msra.mxu0 0
      %2539 = vmatprep.mubr.bf16.mxu0 0
      %2540 = vmatmul.mubr.bf16.gmra.mrb[0].mxu0 %v2502
      %v2541 = vpop.f32.mrb[0].mxu0
      %v2542 = vadd.f32 0.0, %v2541
      %v2543 = vpop.f32.mrb[0].mxu0
      %v2544 = vpop.f32.mrb[0].mxu0
      %v2545 = vpop.f32.mrb[0].mxu0
      %2546 = vdwg.mxu0
      %v2548 = vsel %vm1823, %v2313, 0
      %v2551 = vsel %vm2319, %v1818, 0
      %2553 = vmatprep.subr.bf16.mxu0 0
      %2554 = vmatpush1.bf16.msra.mxu0 %v2551
      %2555 = vmatprep.subr.bf16.mxu0 0
      %2556 = vmatpush1.bf16.msra.mxu0 0
      %2557 = vmatprep.subr.bf16.mxu0 0
      %2558 = vmatpush1.bf16.msra.mxu0 0
      %2559 = vmatprep.subr.bf16.mxu0 0
      %2560 = vmatpush1.bf16.msra.mxu0 0
      %2561 = vmatprep.subr.bf16.mxu0 0
      %2562 = vmatpush1.bf16.msra.mxu0 0
      %2563 = vmatprep.subr.bf16.mxu0 0
      %2564 = vmatpush1.bf16.msra.mxu0 0
      %2565 = vmatprep.subr.bf16.mxu0 0
      %2566 = vmatpush1.bf16.msra.mxu0 0
      %2567 = vmatprep.subr.bf16.mxu0 0
      %2568 = vmatpush1.bf16.msra.mxu0 0
      %2569 = vmatprep.subr.bf16.mxu0 0
      %2570 = vmatpush1.bf16.msra.mxu0 0
      %2571 = vmatprep.subr.bf16.mxu0 0
      %2572 = vmatpush1.bf16.msra.mxu0 0
      %2573 = vmatprep.subr.bf16.mxu0 0
      %2574 = vmatpush1.bf16.msra.mxu0 0
      %2575 = vmatprep.subr.bf16.mxu0 0
      %2576 = vmatpush1.bf16.msra.mxu0 0
      %2577 = vmatprep.subr.bf16.mxu0 0
      %2578 = vmatpush1.bf16.msra.mxu0 0
      %2579 = vmatprep.subr.bf16.mxu0 0
      %2580 = vmatpush1.bf16.msra.mxu0 0
      %2581 = vmatprep.subr.bf16.mxu0 0
      %2582 = vmatpush1.bf16.msra.mxu0 0
      %2583 = vmatprep.subr.bf16.mxu0 0
      %2584 = vmatpush1.bf16.msra.mxu0 0
      %2585 = vmatprep.mubr.bf16.mxu0 0
      %2586 = vmatmul.mubr.bf16.gmra.mrb[0].mxu0 %v2548
      %v2587 = vpop.f32.mrb[0].mxu0
      %v2588 = vadd.f32 0.0, %v2587
      %v2589 = vpop.f32.mrb[0].mxu0
      %v2590 = vpop.f32.mrb[0].mxu0
      %v2591 = vpop.f32.mrb[0].mxu0
      %2592 = vdwg.mxu0
      %v2594 = vsel %vm1823, %v2314, 0
      %v2597 = vsel %vm2319, %v1819, 0
      %2599 = vmatprep.subr.bf16.mxu0 0
      %2600 = vmatpush1.bf16.msra.mxu0 %v2597
      %2601 = vmatprep.subr.bf16.mxu0 0
      %2602 = vmatpush1.bf16.msra.mxu0 0
      %2603 = vmatprep.subr.bf16.mxu0 0
      %2604 = vmatpush1.bf16.msra.mxu0 0
      %2605 = vmatprep.subr.bf16.mxu0 0
      %2606 = vmatpush1.bf16.msra.mxu0 0
      %2607 = vmatprep.subr.bf16.mxu0 0
      %2608 = vmatpush1.bf16.msra.mxu0 0
      %2609 = vmatprep.subr.bf16.mxu0 0
      %2610 = vmatpush1.bf16.msra.mxu0 0
      %2611 = vmatprep.subr.bf16.mxu0 0
      %2612 = vmatpush1.bf16.msra.mxu0 0
      %2613 = vmatprep.subr.bf16.mxu0 0
      %2614 = vmatpush1.bf16.msra.mxu0 0
      %2615 = vmatprep.subr.bf16.mxu0 0
      %2616 = vmatpush1.bf16.msra.mxu0 0
      %2617 = vmatprep.subr.bf16.mxu0 0
      %2618 = vmatpush1.bf16.msra.mxu0 0
      %2619 = vmatprep.subr.bf16.mxu0 0
      %2620 = vmatpush1.bf16.msra.mxu0 0
      %2621 = vmatprep.subr.bf16.mxu0 0
      %2622 = vmatpush1.bf16.msra.mxu0 0
      %2623 = vmatprep.subr.bf16.mxu0 0
      %2624 = vmatpush1.bf16.msra.mxu0 0
      %2625 = vmatprep.subr.bf16.mxu0 0
      %2626 = vmatpush1.bf16.msra.mxu0 0
      %2627 = vmatprep.subr.bf16.mxu0 0
      %2628 = vmatpush1.bf16.msra.mxu0 0
      %2629 = vmatprep.subr.bf16.mxu0 0
      %2630 = vmatpush1.bf16.msra.mxu0 0
      %2631 = vmatprep.mubr.bf16.mxu0 0
      %2632 = vmatmul.mubr.bf16.gmra.mrb[0].mxu0 %v2594
      %v2633 = vpop.f32.mrb[0].mxu0
      %v2634 = vadd.f32 0.0, %v2633
      %v2635 = vpop.f32.mrb[0].mxu0
      %v2636 = vpop.f32.mrb[0].mxu0
      %v2637 = vpop.f32.mrb[0].mxu0
      %2638 = vdwg.mxu0
      %v2640 = vsel %vm1823, %v2315, 0
      %v2643 = vsel %vm2319, %v1820, 0
      %2645 = vmatprep.subr.bf16.mxu0 0
      %2646 = vmatpush1.bf16.msra.mxu0 %v2643
      %2647 = vmatprep.subr.bf16.mxu0 0
      %2648 = vmatpush1.bf16.msra.mxu0 0
      %2649 = vmatprep.subr.bf16.mxu0 0
      %2650 = vmatpush1.bf16.msra.mxu0 0
      %2651 = vmatprep.subr.bf16.mxu0 0
      %2652 = vmatpush1.bf16.msra.mxu0 0
      %2653 = vmatprep.subr.bf16.mxu0 0
      %2654 = vmatpush1.bf16.msra.mxu0 0
      %2655 = vmatprep.subr.bf16.mxu0 0
      %2656 = vmatpush1.bf16.msra.mxu0 0
      %2657 = vmatprep.subr.bf16.mxu0 0
      %2658 = vmatpush1.bf16.msra.mxu0 0
      %2659 = vmatprep.subr.bf16.mxu0 0
      %2660 = vmatpush1.bf16.msra.mxu0 0
      %2661 = vmatprep.subr.bf16.mxu0 0
      %2662 = vmatpush1.bf16.msra.mxu0 0
      %2663 = vmatprep.subr.bf16.mxu0 0
      %2664 = vmatpush1.bf16.msra.mxu0 0
      %2665 = vmatprep.subr.bf16.mxu0 0
      %2666 = vmatpush1.bf16.msra.mxu0 0
      %2667 = vmatprep.subr.bf16.mxu0 0
      %2668 = vmatpush1.bf16.msra.mxu0 0
      %2669 = vmatprep.subr.bf16.mxu0 0
      %2670 = vmatpush1.bf16.msra.mxu0 0
      %2671 = vmatprep.subr.bf16.mxu0 0
      %2672 = vmatpush1.bf16.msra.mxu0 0
      %2673 = vmatprep.subr.bf16.mxu0 0
      %2674 = vmatpush1.bf16.msra.mxu0 0
      %2675 = vmatprep.subr.bf16.mxu0 0
      %2676 = vmatpush1.bf16.msra.mxu0 0
      %2677 = vmatprep.mubr.bf16.mxu0 0
      %2678 = vmatmul.mubr.bf16.gmra.mrb[0].mxu0 %v2640
      %v2679 = vpop.f32.mrb[0].mxu0
      %v2680 = vadd.f32 0.0, %v2679
      %v2681 = vpop.f32.mrb[0].mxu0
      %v2682 = vpop.f32.mrb[0].mxu0
      %v2683 = vpop.f32.mrb[0].mxu0
      %2684 = vdwg.mxu0
      %v2685 = vcombine.low %v2358, %v2542
      %v2686 = vcombine.high %v2358, %v2542
      %v2688 = vunpack.c.l.s4 1983009808
      %v2689 = vunpack.c.0.s8 %v2688
      %v2690 = vlaneseq
      %v2691 = vshrl.u32 %v2690, 7
      %v2692 = vsub.s32 %v2689, %v2691
      %v2693 = vrot.slane %v2685, %v2692
      %v2695 = vunpack.c.l.s4 1983009808
      %v2696 = vunpack.c.0.s8 %v2695
      %v2697 = vlaneseq
      %v2698 = vshrl.u32 %v2697, 7
      %v2699 = vsub.s32 %v2696, %v2698
      %v2700 = vrot.slane %v2686, %v2699
      %v2701 = vcombine.low %v2450, %v2634
      %v2702 = vcombine.high %v2450, %v2634
      %v2704 = vunpack.c.l.s4 1983009808
      %v2705 = vunpack.c.0.s8 %v2704
      %v2706 = vlaneseq
      %v2707 = vshrl.u32 %v2706, 7
      %v2708 = vsub.s32 %v2705, %v2707
      %v2709 = vrot.slane %v2701, %v2708
      %v2711 = vunpack.c.l.s4 1983009808
      %v2712 = vunpack.c.0.s8 %v2711
      %v2713 = vlaneseq
      %v2714 = vshrl.u32 %v2713, 7
      %v2715 = vsub.s32 %v2712, %v2714
      %v2716 = vrot.slane %v2702, %v2715
      %v2717 = vcombine.low %v2693, %v2709
      %v2718 = vcombine.high %v2693, %v2709
      %v2720 = vunpack.c.l.s4 1934713408
      %v2721 = vunpack.c.0.s8 %v2720
      %v2722 = vlaneseq
      %v2723 = vshrl.u32 %v2722, 7
      %v2724 = vsub.s32 %v2721, %v2723
      %v2725 = vrot.slane %v2717, %v2724
      %v2727 = vunpack.c.l.s4 1934713408
      %v2728 = vunpack.c.0.s8 %v2727
      %v2729 = vlaneseq
      %v2730 = vshrl.u32 %v2729, 7
      %v2731 = vsub.s32 %v2728, %v2730
      %v2732 = vrot.slane %v2718, %v2731
      %v2733 = vcombine.low %v2700, %v2716
      %v2734 = vcombine.high %v2700, %v2716
      %v2736 = vunpack.c.l.s4 1934713408
      %v2737 = vunpack.c.0.s8 %v2736
      %v2738 = vlaneseq
      %v2739 = vshrl.u32 %v2738, 7
      %v2740 = vsub.s32 %v2737, %v2739
      %v2741 = vrot.slane %v2733, %v2740
      %v2743 = vunpack.c.l.s4 1934713408
      %v2744 = vunpack.c.0.s8 %v2743
      %v2745 = vlaneseq
      %v2746 = vshrl.u32 %v2745, 7
      %v2747 = vsub.s32 %v2744, %v2746
      %v2748 = vrot.slane %v2734, %v2747
      %v2749 = vcombine.high %v2725, 0.0
      %v2750 = vcombine.high %v2732, 0.0
      %v2751 = vcombine.high %v2741, 0.0
      %v2752 = vcombine.high %v2748, 0.0
      %v2753 = vcombine.low %v2404, %v2588
      %v2754 = vcombine.high %v2404, %v2588
      %v2756 = vunpack.c.l.s4 1983009808
      %v2757 = vunpack.c.0.s8 %v2756
      %v2758 = vlaneseq
      %v2759 = vshrl.u32 %v2758, 7
      %v2760 = vsub.s32 %v2757, %v2759
      %v2761 = vrot.slane %v2753, %v2760
      %v2763 = vunpack.c.l.s4 1983009808
      %v2764 = vunpack.c.0.s8 %v2763
      %v2765 = vlaneseq
      %v2766 = vshrl.u32 %v2765, 7
      %v2767 = vsub.s32 %v2764, %v2766
      %v2768 = vrot.slane %v2754, %v2767
      %v2769 = vcombine.low %v2496, %v2680
      %v2770 = vcombine.high %v2496, %v2680
      %v2772 = vunpack.c.l.s4 1983009808
      %v2773 = vunpack.c.0.s8 %v2772
      %v2774 = vlaneseq
      %v2775 = vshrl.u32 %v2774, 7
      %v2776 = vsub.s32 %v2773, %v2775
      %v2777 = vrot.slane %v2769, %v2776
      %v2779 = vunpack.c.l.s4 1983009808
      %v2780 = vunpack.c.0.s8 %v2779
      %v2781 = vlaneseq
      %v2782 = vshrl.u32 %v2781, 7
      %v2783 = vsub.s32 %v2780, %v2782
      %v2784 = vrot.slane %v2770, %v2783
      %v2785 = vcombine.low %v2761, %v2777
      %v2786 = vcombine.high %v2761, %v2777
      %v2788 = vunpack.c.l.s4 1934713408
      %v2789 = vunpack.c.0.s8 %v2788
      %v2790 = vlaneseq
      %v2791 = vshrl.u32 %v2790, 7
      %v2792 = vsub.s32 %v2789, %v2791
      %v2793 = vrot.slane %v2785, %v2792
      %v2795 = vunpack.c.l.s4 1934713408
      %v2796 = vunpack.c.0.s8 %v2795
      %v2797 = vlaneseq
      %v2798 = vshrl.u32 %v2797, 7
      %v2799 = vsub.s32 %v2796, %v2798
      %v2800 = vrot.slane %v2786, %v2799
      %v2801 = vcombine.low %v2768, %v2784
      %v2802 = vcombine.high %v2768, %v2784
      %v2804 = vunpack.c.l.s4 1934713408
      %v2805 = vunpack.c.0.s8 %v2804
      %v2806 = vlaneseq
      %v2807 = vshrl.u32 %v2806, 7
      %v2808 = vsub.s32 %v2805, %v2807
      %v2809 = vrot.slane %v2801, %v2808
      %v2811 = vunpack.c.l.s4 1934713408
      %v2812 = vunpack.c.0.s8 %v2811
      %v2813 = vlaneseq
      %v2814 = vshrl.u32 %v2813, 7
      %v2815 = vsub.s32 %v2812, %v2814
      %v2816 = vrot.slane %v2802, %v2815
      %v2817 = vcombine.high %v2793, 0.0
      %v2818 = vcombine.high %v2800, 0.0
      %v2819 = vcombine.high %v2809, 0.0
      %v2820 = vcombine.high %v2816, 0.0
      %v2821 = vcombine.low %v2725, %v2732
      %v2823 = vunpack.c.l.s4 1983009808
      %v2824 = vunpack.c.0.s8 %v2823
      %v2825 = vlaneseq
      %v2826 = vshrl.u32 %v2825, 7
      %v2827 = vsub.s32 %v2824, %v2826
      %v2828 = vrot.slane %v2821, %v2827
      %v2829 = vcombine.low %v2749, %v2750
      %v2831 = vunpack.c.l.s4 1983009808
      %v2832 = vunpack.c.0.s8 %v2831
      %v2833 = vlaneseq
      %v2834 = vshrl.u32 %v2833, 7
      %v2835 = vsub.s32 %v2832, %v2834
      %v2836 = vrot.slane %v2829, %v2835
      %v2837 = vcombine.low %v2741, %v2748
      %v2839 = vunpack.c.l.s4 1983009808
      %v2840 = vunpack.c.0.s8 %v2839
      %v2841 = vlaneseq
      %v2842 = vshrl.u32 %v2841, 7
      %v2843 = vsub.s32 %v2840, %v2842
      %v2844 = vrot.slane %v2837, %v2843
      %v2845 = vcombine.low %v2751, %v2752
      %v2847 = vunpack.c.l.s4 1983009808
      %v2848 = vunpack.c.0.s8 %v2847
      %v2849 = vlaneseq
      %v2850 = vshrl.u32 %v2849, 7
      %v2851 = vsub.s32 %v2848, %v2850
      %v2852 = vrot.slane %v2845, %v2851
      %v2853 = vcombine.low %v2828, %v2836
      %v2854 = vcombine.high %v2828, %v2836
      %v2856 = vunpack.c.l.s4 1934713408
      %v2857 = vunpack.c.0.s8 %v2856
      %v2858 = vlaneseq
      %v2859 = vshrl.u32 %v2858, 7
      %v2860 = vsub.s32 %v2857, %v2859
      %v2861 = vrot.slane %v2853, %v2860
      %v2863 = vunpack.c.l.s4 1934713408
      %v2864 = vunpack.c.0.s8 %v2863
      %v2865 = vlaneseq
      %v2866 = vshrl.u32 %v2865, 7
      %v2867 = vsub.s32 %v2864, %v2866
      %v2868 = vrot.slane %v2854, %v2867
      %v2869 = vcombine.low %v2844, %v2852
      %v2870 = vcombine.high %v2844, %v2852
      %v2872 = vunpack.c.l.s4 1934713408
      %v2873 = vunpack.c.0.s8 %v2872
      %v2874 = vlaneseq
      %v2875 = vshrl.u32 %v2874, 7
      %v2876 = vsub.s32 %v2873, %v2875
      %v2877 = vrot.slane %v2869, %v2876
      %v2879 = vunpack.c.l.s4 1934713408
      %v2880 = vunpack.c.0.s8 %v2879
      %v2881 = vlaneseq
      %v2882 = vshrl.u32 %v2881, 7
      %v2883 = vsub.s32 %v2880, %v2882
      %v2884 = vrot.slane %v2870, %v2883
      %v2885 = vcombine.low %v2861, %v2877
      %v2886 = vcombine.high %v2861, %v2877
      %v2887 = vcombine.low %v2868, %v2884
      %v2888 = vcombine.high %v2868, %v2884
      %v2889 = vcombine.low %v2793, %v2800
      %v2891 = vunpack.c.l.s4 1983009808
      %v2892 = vunpack.c.0.s8 %v2891
      %v2893 = vlaneseq
      %v2894 = vshrl.u32 %v2893, 7
      %v2895 = vsub.s32 %v2892, %v2894
      %v2896 = vrot.slane %v2889, %v2895
      %v2897 = vcombine.low %v2817, %v2818
      %v2899 = vunpack.c.l.s4 1983009808
      %v2900 = vunpack.c.0.s8 %v2899
      %v2901 = vlaneseq
      %v2902 = vshrl.u32 %v2901, 7
      %v2903 = vsub.s32 %v2900, %v2902
      %v2904 = vrot.slane %v2897, %v2903
      %v2905 = vcombine.low %v2809, %v2816
      %v2907 = vunpack.c.l.s4 1983009808
      %v2908 = vunpack.c.0.s8 %v2907
      %v2909 = vlaneseq
      %v2910 = vshrl.u32 %v2909, 7
      %v2911 = vsub.s32 %v2908, %v2910
      %v2912 = vrot.slane %v2905, %v2911
      %v2913 = vcombine.low %v2819, %v2820
      %v2915 = vunpack.c.l.s4 1983009808
      %v2916 = vunpack.c.0.s8 %v2915
      %v2917 = vlaneseq
      %v2918 = vshrl.u32 %v2917, 7
      %v2919 = vsub.s32 %v2916, %v2918
      %v2920 = vrot.slane %v2913, %v2919
      %v2921 = vcombine.low %v2896, %v2904
      %v2922 = vcombine.high %v2896, %v2904
      %v2924 = vunpack.c.l.s4 1934713408
      %v2925 = vunpack.c.0.s8 %v2924
      %v2926 = vlaneseq
      %v2927 = vshrl.u32 %v2926, 7
      %v2928 = vsub.s32 %v2925, %v2927
      %v2929 = vrot.slane %v2921, %v2928
      %v2931 = vunpack.c.l.s4 1934713408
      %v2932 = vunpack.c.0.s8 %v2931
      %v2933 = vlaneseq
      %v2934 = vshrl.u32 %v2933, 7
      %v2935 = vsub.s32 %v2932, %v2934
      %v2936 = vrot.slane %v2922, %v2935
      %v2937 = vcombine.low %v2912, %v2920
      %v2938 = vcombine.high %v2912, %v2920
      %v2940 = vunpack.c.l.s4 1934713408
      %v2941 = vunpack.c.0.s8 %v2940
      %v2942 = vlaneseq
      %v2943 = vshrl.u32 %v2942, 7
      %v2944 = vsub.s32 %v2941, %v2943
      %v2945 = vrot.slane %v2937, %v2944
      %v2947 = vunpack.c.l.s4 1934713408
      %v2948 = vunpack.c.0.s8 %v2947
      %v2949 = vlaneseq
      %v2950 = vshrl.u32 %v2949, 7
      %v2951 = vsub.s32 %v2948, %v2950
      %v2952 = vrot.slane %v2938, %v2951
      %v2953 = vcombine.low %v2929, %v2945
      %v2954 = vcombine.high %v2929, %v2945
      %v2955 = vcombine.low %v2936, %v2952
      %v2956 = vcombine.high %v2936, %v2952
      %2959 = vrot.lane.b32.xlu0 %v2886, 8
      %v2960 = vpop.permute.xlu0 %2959
      %2961 = vrot.lane.b32.xlu0 %v2954, 8
      %v2962 = vpop.permute.xlu0 %2961
      %2967 = vrot.lane.b32.xlu0 %v2887, 16
      %v2968 = vpop.permute.xlu0 %2967
      %2969 = vrot.lane.b32.xlu0 %v2955, 16
      %v2970 = vpop.permute.xlu0 %2969
      %2975 = vrot.lane.b32.xlu0 %v2888, 24
      %v2976 = vpop.permute.xlu0 %2975
      %2977 = vrot.lane.b32.xlu0 %v2956, 24
      %v2978 = vpop.permute.xlu0 %2977
      %v2981 = vsel %vm1823, %v2885, %v2960
      %v2982 = vsel %vm1823, %v2953, %v2962
      %vm2983 = vcmask 130048
      %v2984 = vsel %vm2983, %v2981, %v2968
      %v2985 = vsel %vm2983, %v2982, %v2970
      %vm2986 = vcmask 195584
      %v2987 = vsel %vm2986, %v2984, %v2976
      %v2988 = vsel %vm2986, %v2985, %v2978
      %v2989 = vpack.c.bf16 %v2988, %v2987
      %v2990 = vld [vmem:[%s755] sm:$0xf]
      %v2991 = vld [vmem:[%s755 + $0x4] sm:$0xf]
      %v2992 = vld [vmem:[%s755 + $0x8] sm:$0xf]
      %v2993 = vld [vmem:[%s755 + $0xc] sm:$0xf]
      %v2994 = vld [vmem:[%s758] sm:$0x1]
      %v2996 = vlaneseq
      %v2997 = vshrl.u32 %v2996, 7
      %v2998 = vsub.s32 0, %v2997
      %v2999 = vrot.slane %v2994, %v2998
      %v3005 = vunpack.c.l.b16 %v2990
      %v3006 = vunpack.c.l.b16 %v2991
      %v3007 = vunpack.c.l.b16 %v2992
      %v3008 = vunpack.c.l.b16 %v2993
      %v3009 = vpack.c.b16 %v3006, %v3005
      %v3010 = vpack.c.b16 %v3008, %v3007
      %v3014 = vsel %vm868, %v2989, 0
      %3016 = vmatprep.subr.bf16.mxu0 0
      %3017 = vmatpush1.bf16.msra.mxu0 %v3009
      %3018 = vmatprep.subr.bf16.mxu0 0
      %3019 = vmatpush1.bf16.msra.mxu0 %v3010
      %3020 = vmatprep.subr.bf16.mxu0 0
      %3021 = vmatpush1.bf16.msra.mxu0 0
      %3022 = vmatprep.subr.bf16.mxu0 0
      %3023 = vmatpush1.bf16.msra.mxu0 0
      %3024 = vmatprep.subr.bf16.mxu0 0
      %3025 = vmatpush1.bf16.msra.mxu0 0
      %3026 = vmatprep.subr.bf16.mxu0 0
      %3027 = vmatpush1.bf16.msra.mxu0 0
      %3028 = vmatprep.subr.bf16.mxu0 0
      %3029 = vmatpush1.bf16.msra.mxu0 0
      %3030 = vmatprep.subr.bf16.mxu0 0
      %3031 = vmatpush1.bf16.msra.mxu0 0
      %3032 = vmatprep.subr.bf16.mxu0 0
      %3033 = vmatpush1.bf16.msra.mxu0 0
      %3034 = vmatprep.subr.bf16.mxu0 0
      %3035 = vmatpush1.bf16.msra.mxu0 0
      %3036 = vmatprep.subr.bf16.mxu0 0
      %3037 = vmatpush1.bf16.msra.mxu0 0
      %3038 = vmatprep.subr.bf16.mxu0 0
      %3039 = vmatpush1.bf16.msra.mxu0 0
      %3040 = vmatprep.subr.bf16.mxu0 0
      %3041 = vmatpush1.bf16.msra.mxu0 0
      %3042 = vmatprep.subr.bf16.mxu0 0
      %3043 = vmatpush1.bf16.msra.mxu0 0
      %3044 = vmatprep.subr.bf16.mxu0 0
      %3045 = vmatpush1.bf16.msra.mxu0 0
      %3046 = vmatprep.subr.bf16.mxu0 0
      %3047 = vmatpush1.bf16.msra.mxu0 0
      %3048 = vmatprep.mubr.bf16.mxu0 0
      %3049 = vmatmul.mubr.bf16.gmra.mrb[0].mxu0 %v3014
      %v3050 = vpop.f32.mrb[0].mxu0
      %v3051 = vadd.f32 %v2999, %v3050
      %v3052 = vpop.f32.mrb[0].mxu0
      %v3053 = vpop.f32.mrb[0].mxu0
      %v3054 = vadd.f32 %v2999, %v3053
      %v3055 = vpop.f32.mrb[0].mxu0
      %3056 = vdwg.mxu0
      %v3057 = vadd.f32 %v3051, %v842
      %v3058 = vadd.f32 %v3054, %v843
      %v3059 = vld [vmem:[%s761] sm:$0x1]
      %v3060 = vld [vmem:[%s764] sm:$0x1]
      %v3061 = vsel %vm868, %v3057, 0.0
      %3062 = vadd.xlane.f32.xlu0 %v3061
      %v3063 = vpop.xlane.xlu0 %3062
      %v3064 = vsel %vm868, %v3058, 0.0
      %3065 = vadd.xlane.f32.xlu0 %v3064
      %v3066 = vpop.xlane.xlu0 %3065
      %v3067 = vrcp.pop 32.0
      %v3068 = vmul.f32 %v3063, %v3067
      %v3069 = vmul.f32 %v3066, %v3067
      %v3070 = vsub.f32 %v3057, %v3068
      %v3071 = vsub.f32 %v3058, %v3069
      %v3072 = vmul.f32 %v3070, %v3070
      %v3073 = vmul.f32 %v3071, %v3071
      %v3074 = vsel %vm868, %v3072, 0.0
      %3075 = vadd.xlane.f32.xlu0 %v3074
      %v3076 = vpop.xlane.xlu0 %3075
      %v3077 = vsel %vm868, %v3073, 0.0
      %3078 = vadd.xlane.f32.xlu0 %v3077
      %v3079 = vpop.xlane.xlu0 %3078
      %v3080 = vmul.f32 %v3076, %v3067
      %v3081 = vmul.f32 %v3079, %v3067
      %v3082 = vadd.f32 %v3080, 1e-05
      %v3083 = vadd.f32 %v3081, 1e-05
      %v3084 = vrsqrt.pop %v3082
      %v3085 = vrsqrt.pop %v3083
      %v3086 = vmul.f32 %v3070, %v3084
      %v3087 = vmul.f32 %v3071, %v3085
      %v3089 = vlaneseq
      %v3090 = vshrl.u32 %v3089, 7
      %v3091 = vsub.s32 0, %v3090
      %v3092 = vrot.slane %v3059, %v3091
      %v3094 = vmul.f32 %v3086, %v3092
      %v3095 = vmul.f32 %v3087, %v3092
      %v3097 = vlaneseq
      %v3098 = vshrl.u32 %v3097, 7
      %v3099 = vsub.s32 0, %v3098
      %v3100 = vrot.slane %v3060, %v3099
      %v3102 = vadd.f32 %v3094, %v3100
      %v3103 = vadd.f32 %v3095, %v3100
      %v3104 = vpack.c.bf16 %v3103, %v3102
      %v3105 = vld [vmem:[%s769] sm:$0xf]
      %v3106 = vld [vmem:[%s769 + $0x4] sm:$0xf]
      %v3107 = vld [vmem:[%s769 + $0x8] sm:$0xf]
      %v3108 = vld [vmem:[%s769 + $0xc] sm:$0xf]
      %v3109 = vld [vmem:[%s772] sm:$0x1]
      %v3111 = vlaneseq
      %v3112 = vshrl.u32 %v3111, 7
      %v3113 = vsub.s32 0, %v3112
      %v3114 = vrot.slane %v3109, %v3113
      %v3120 = vunpack.c.l.b16 %v3105
      %v3121 = vunpack.c.l.b16 %v3106
      %v3122 = vunpack.c.l.b16 %v3107
      %v3123 = vunpack.c.l.b16 %v3108
      %v3124 = vpack.c.b16 %v3121, %v3120
      %v3125 = vpack.c.b16 %v3123, %v3122
      %v3129 = vsel %vm868, %v3104, 0
      %3131 = vmatprep.subr.bf16.mxu0 0
      %3132 = vmatpush1.bf16.msra.mxu0 %v3124
      %3133 = vmatprep.subr.bf16.mxu0 0
      %3134 = vmatpush1.bf16.msra.mxu0 %v3125
      %3135 = vmatprep.subr.bf16.mxu0 0
      %3136 = vmatpush1.bf16.msra.mxu0 0
      %3137 = vmatprep.subr.bf16.mxu0 0
      %3138 = vmatpush1.bf16.msra.mxu0 0
      %3139 = vmatprep.subr.bf16.mxu0 0
      %3140 = vmatpush1.bf16.msra.mxu0 0
      %3141 = vmatprep.subr.bf16.mxu0 0
      %3142 = vmatpush1.bf16.msra.mxu0 0
      %3143 = vmatprep.subr.bf16.mxu0 0
      %3144 = vmatpush1.bf16.msra.mxu0 0
      %3145 = vmatprep.subr.bf16.mxu0 0
      %3146 = vmatpush1.bf16.msra.mxu0 0
      %3147 = vmatprep.subr.bf16.mxu0 0
      %3148 = vmatpush1.bf16.msra.mxu0 0
      %3149 = vmatprep.subr.bf16.mxu0 0
      %3150 = vmatpush1.bf16.msra.mxu0 0
      %3151 = vmatprep.subr.bf16.mxu0 0
      %3152 = vmatpush1.bf16.msra.mxu0 0
      %3153 = vmatprep.subr.bf16.mxu0 0
      %3154 = vmatpush1.bf16.msra.mxu0 0
      %3155 = vmatprep.subr.bf16.mxu0 0
      %3156 = vmatpush1.bf16.msra.mxu0 0
      %3157 = vmatprep.subr.bf16.mxu0 0
      %3158 = vmatpush1.bf16.msra.mxu0 0
      %3159 = vmatprep.subr.bf16.mxu0 0
      %3160 = vmatpush1.bf16.msra.mxu0 0
      %3161 = vmatprep.subr.bf16.mxu0 0
      %3162 = vmatpush1.bf16.msra.mxu0 0
      %3163 = vmatprep.mubr.bf16.mxu0 0
      %3164 = vmatmul.mubr.bf16.gmra.mrb[0].mxu0 %v3129
      %v3165 = vpop.f32.mrb[0].mxu0
      %v3166 = vadd.f32 %v3114, %v3165
      %v3167 = vpop.f32.mrb[0].mxu0
      %v3168 = vpop.f32.mrb[0].mxu0
      %v3169 = vadd.f32 %v3114, %v3168
      %v3170 = vpop.f32.mrb[0].mxu0
      %3171 = vdwg.mxu0
      %v3172 = vmul.f32 %v3166, %v3166
      %v3173 = vmul.f32 %v3169, %v3169
      %v3174 = vmul.f32 %v3166, %v3172
      %v3175 = vmul.f32 %v3169, %v3173
      %v3176 = vmul.f32 %v3174, 0.044715
      %v3177 = vmul.f32 %v3175, 0.044715
      %v3178 = vadd.f32 %v3166, %v3176
      %v3179 = vadd.f32 %v3169, %v3177
      %v3180 = vmul.f32 %v3178, 0.7978846
      %v3181 = vmul.f32 %v3179, 0.7978846
      %v3182 = vtanh.pop %v3180
      %v3183 = vtanh.pop %v3181
      %v3184 = vadd.f32 %v3182, 1.0
      %v3185 = vadd.f32 %v3183, 1.0
      %v3186 = vmul.f32 %v3184, 0.5
      %v3187 = vmul.f32 %v3185, 0.5
      %v3188 = vmul.f32 %v3166, %v3186
      %v3189 = vmul.f32 %v3169, %v3187
      %v3190 = vpack.c.bf16 %v3189, %v3188
      %v3191 = vld [vmem:[%s777] sm:$0xf]
      %v3192 = vld [vmem:[%s777 + $0x4] sm:$0xf]
      %v3193 = vld [vmem:[%s777 + $0x8] sm:$0xf]
      %v3194 = vld [vmem:[%s777 + $0xc] sm:$0xf]
      %v3195 = vld [vmem:[%s777 + $0x10] sm:$0xf]
      %v3196 = vld [vmem:[%s777 + $0x14] sm:$0xf]
      %v3197 = vld [vmem:[%s777 + $0x18] sm:$0xf]
      %v3198 = vld [vmem:[%s777 + $0x1c] sm:$0xf]
      %v3199 = vld [vmem:[%s780] sm:$0x1]
      %v3201 = vlaneseq
      %v3202 = vshrl.u32 %v3201, 7
      %v3203 = vsub.s32 0, %v3202
      %v3204 = vrot.slane %v3199, %v3203
      %v3214 = vunpack.c.l.b16 %v3191
      %v3215 = vunpack.c.l.b16 %v3192
      %v3216 = vunpack.c.l.b16 %v3193
      %v3217 = vunpack.c.l.b16 %v3194
      %v3218 = vunpack.c.l.b16 %v3195
      %v3219 = vunpack.c.l.b16 %v3196
      %v3220 = vunpack.c.l.b16 %v3197
      %v3221 = vunpack.c.l.b16 %v3198
      %v3222 = vpack.c.b16 %v3215, %v3214
      %v3223 = vpack.c.b16 %v3217, %v3216
      %v3224 = vpack.c.b16 %v3219, %v3218
      %v3225 = vpack.c.b16 %v3221, %v3220
      %vm3230 = vcmask 523264
      %v3232 = vsel %vm3230, %v3190, 0
      %3234 = vmatprep.subr.bf16.mxu0 0
      %3235 = vmatpush1.bf16.msra.mxu0 %v3222
      %3236 = vmatprep.subr.bf16.mxu0 0
      %3237 = vmatpush1.bf16.msra.mxu0 %v3223
      %3238 = vmatprep.subr.bf16.mxu0 0
      %3239 = vmatpush1.bf16.msra.mxu0 %v3224
      %3240 = vmatprep.subr.bf16.mxu0 0
      %3241 = vmatpush1.bf16.msra.mxu0 %v3225
      %3242 = vmatprep.subr.bf16.mxu0 0
      %3243 = vmatpush1.bf16.msra.mxu0 0
      %3244 = vmatprep.subr.bf16.mxu0 0
      %3245 = vmatpush1.bf16.msra.mxu0 0
      %3246 = vmatprep.subr.bf16.mxu0 0
      %3247 = vmatpush1.bf16.msra.mxu0 0
      %3248 = vmatprep.subr.bf16.mxu0 0
      %3249 = vmatpush1.bf16.msra.mxu0 0
      %3250 = vmatprep.subr.bf16.mxu0 0
      %3251 = vmatpush1.bf16.msra.mxu0 0
      %3252 = vmatprep.subr.bf16.mxu0 0
      %3253 = vmatpush1.bf16.msra.mxu0 0
      %3254 = vmatprep.subr.bf16.mxu0 0
      %3255 = vmatpush1.bf16.msra.mxu0 0
      %3256 = vmatprep.subr.bf16.mxu0 0
      %3257 = vmatpush1.bf16.msra.mxu0 0
      %3258 = vmatprep.subr.bf16.mxu0 0
      %3259 = vmatpush1.bf16.msra.mxu0 0
      %3260 = vmatprep.subr.bf16.mxu0 0
      %3261 = vmatpush1.bf16.msra.mxu0 0
      %3262 = vmatprep.subr.bf16.mxu0 0
      %3263 = vmatpush1.bf16.msra.mxu0 0
      %3264 = vmatprep.subr.bf16.mxu0 0
      %3265 = vmatpush1.bf16.msra.mxu0 0
      %3266 = vmatprep.mubr.bf16.mxu0 0
      %3267 = vmatmul.mubr.bf16.gmra.mrb[0].mxu0 %v3232
      %v3268 = vpop.f32.mrb[0].mxu0
      %v3269 = vadd.f32 %v3204, %v3268
      %v3270 = vpop.f32.mrb[0].mxu0
      %v3271 = vpop.f32.mrb[0].mxu0
      %v3272 = vadd.f32 %v3204, %v3271
      %v3273 = vpop.f32.mrb[0].mxu0
      %3274 = vdwg.mxu0
      %v3275 = vadd.f32 %v3269, %v3102
      %v3276 = vadd.f32 %v3272, %v3103
      %v3277 = vld [vmem:[%s783] sm:$0x1]
      %v3278 = vld [vmem:[%s786] sm:$0x1]
      %v3279 = vsel %vm868, %v3275, 0.0
      %3280 = vadd.xlane.f32.xlu0 %v3279
      %v3281 = vpop.xlane.xlu0 %3280
      %v3282 = vsel %vm868, %v3276, 0.0
      %3283 = vadd.xlane.f32.xlu0 %v3282
      %v3284 = vpop.xlane.xlu0 %3283
      %v3285 = vmul.f32 %v3281, %v3067
      %v3286 = vmul.f32 %v3284, %v3067
      %v3287 = vsub.f32 %v3275, %v3285
      %v3288 = vsub.f32 %v3276, %v3286
      %v3289 = vmul.f32 %v3287, %v3287
      %v3290 = vmul.f32 %v3288, %v3288
      %v3291 = vsel %vm868, %v3289, 0.0
      %3292 = vadd.xlane.f32.xlu0 %v3291
      %v3293 = vpop.xlane.xlu0 %3292
      %v3294 = vsel %vm868, %v3290, 0.0
      %3295 = vadd.xlane.f32.xlu0 %v3294
      %v3296 = vpop.xlane.xlu0 %3295
      %v3297 = vmul.f32 %v3293, %v3067
      %v3298 = vmul.f32 %v3296, %v3067
      %v3299 = vadd.f32 %v3297, 1e-05
      %v3300 = vadd.f32 %v3298, 1e-05
      %v3301 = vrsqrt.pop %v3299
      %v3302 = vrsqrt.pop %v3300
      %v3303 = vmul.f32 %v3287, %v3301
      %v3304 = vmul.f32 %v3288, %v3302
      %v3306 = vlaneseq
      %v3307 = vshrl.u32 %v3306, 7
      %v3308 = vsub.s32 0, %v3307
      %v3309 = vrot.slane %v3277, %v3308
      %v3311 = vmul.f32 %v3303, %v3309
      %v3312 = vmul.f32 %v3304, %v3309
      %v3314 = vlaneseq
      %v3315 = vshrl.u32 %v3314, 7
      %v3316 = vsub.s32 0, %v3315
      %v3317 = vrot.slane %v3278, %v3316
      %v3319 = vadd.f32 %v3311, %v3317
      %v3320 = vadd.f32 %v3312, %v3317
      %3321 = vst.msk [vmem:[#allocation2] sm:$0xff] %vm868, %v3319
      %3322 = vst.msk [vmem:[#allocation2 + $0x8] sm:$0xff] %vm868, %v3320
      %p3323 = scmp.eq.s32.totalorder %s31, 1
      // Predicated region
      $region105: #{forward.1} parent=99 // pred_check
        %p3324 = pneg %p3323
      $region106: #{forward.1} parent=99 // pred_check_branch
        %3326 = sbr.rel (%p3324) target = $region108
      $region107: #{forward.1} parent=99 // pred_region
        %v3327 = vld [vmem:[%s16] sm:$0x1]
        %v3328 = vld [vmem:[%s17] sm:$0x1]
        %v3329 = vsel %vm868, %v3319, 0.0
        %3330 = vadd.xlane.f32.xlu0 %v3329
        %v3331 = vpop.xlane.xlu0 %3330
        %v3332 = vsel %vm868, %v3320, 0.0
        %3333 = vadd.xlane.f32.xlu0 %v3332
        %v3334 = vpop.xlane.xlu0 %3333
        %v3335 = vmul.f32 %v3331, %v3067
        %v3336 = vmul.f32 %v3334, %v3067
        %v3337 = vsub.f32 %v3319, %v3335
        %v3338 = vsub.f32 %v3320, %v3336
        %v3339 = vmul.f32 %v3337, %v3337
        %v3340 = vmul.f32 %v3338, %v3338
        %v3341 = vsel %vm868, %v3339, 0.0
        %3342 = vadd.xlane.f32.xlu0 %v3341
        %v3343 = vpop.xlane.xlu0 %3342
        %v3344 = vsel %vm868, %v3340, 0.0
        %3345 = vadd.xlane.f32.xlu0 %v3344
        %v3346 = vpop.xlane.xlu0 %3345
        %v3347 = vmul.f32 %v3343, %v3067
        %v3348 = vmul.f32 %v3346, %v3067
        %v3349 = vadd.f32 %v3347, 1e-05
        %v3350 = vadd.f32 %v3348, 1e-05
        %v3351 = vrsqrt.pop %v3349
        %v3352 = vrsqrt.pop %v3350
        %v3353 = vmul.f32 %v3337, %v3351
        %v3354 = vmul.f32 %v3338, %v3352
        %v3356 = vlaneseq
        %v3357 = vshrl.u32 %v3356, 7
        %v3358 = vsub.s32 0, %v3357
        %v3359 = vrot.slane %v3327, %v3358
        %v3361 = vmul.f32 %v3353, %v3359
        %v3362 = vmul.f32 %v3354, %v3359
        %v3364 = vlaneseq
        %v3365 = vshrl.u32 %v3364, 7
        %v3366 = vsub.s32 0, %v3365
        %v3367 = vrot.slane %v3328, %v3366
        %v3369 = vadd.f32 %v3361, %v3367
        %v3370 = vadd.f32 %v3362, %v3367
        %v3371 = vpack.c.bf16 %v3370, %v3369
        %v3372 = vld [vmem:[%s18] sm:$0xf]
        %v3373 = vld [vmem:[%s18 + $0x4] sm:$0xf]
        %v3374 = vld [vmem:[%s18 + $0x8] sm:$0xf]
        %v3375 = vld [vmem:[%s18 + $0xc] sm:$0xf]
        %v3376 = vld [vmem:[%s19] sm:$0x1]
        %v3378 = vlaneseq
        %v3379 = vshrl.u32 %v3378, 7
        %v3380 = vsub.s32 0, %v3379
        %v3381 = vrot.slane %v3376, %v3380
        %v3387 = vunpack.c.l.b16 %v3372
        %v3388 = vunpack.c.l.b16 %v3373
        %v3389 = vunpack.c.l.b16 %v3374
        %v3390 = vunpack.c.l.b16 %v3375
        %v3391 = vpack.c.b16 %v3388, %v3387
        %v3392 = vpack.c.b16 %v3390, %v3389
        %v3396 = vsel %vm868, %v3371, 0
        %3398 = vmatprep.subr.bf16.mxu0 0
        %3399 = vmatpush1.bf16.msra.mxu0 %v3391
        %3400 = vmatprep.subr.bf16.mxu0 0
        %3401 = vmatpush1.bf16.msra.mxu0 %v3392
        %3402 = vmatprep.subr.bf16.mxu0 0
        %3403 = vmatpush1.bf16.msra.mxu0 0
        %3404 = vmatprep.subr.bf16.mxu0 0
        %3405 = vmatpush1.bf16.msra.mxu0 0
        %3406 = vmatprep.subr.bf16.mxu0 0
        %3407 = vmatpush1.bf16.msra.mxu0 0
        %3408 = vmatprep.subr.bf16.mxu0 0
        %3409 = vmatpush1.bf16.msra.mxu0 0
        %3410 = vmatprep.subr.bf16.mxu0 0
        %3411 = vmatpush1.bf16.msra.mxu0 0
        %3412 = vmatprep.subr.bf16.mxu0 0
        %3413 = vmatpush1.bf16.msra.mxu0 0
        %3414 = vmatprep.subr.bf16.mxu0 0
        %3415 = vmatpush1.bf16.msra.mxu0 0
        %3416 = vmatprep.subr.bf16.mxu0 0
        %3417 = vmatpush1.bf16.msra.mxu0 0
        %3418 = vmatprep.subr.bf16.mxu0 0
        %3419 = vmatpush1.bf16.msra.mxu0 0
        %3420 = vmatprep.subr.bf16.mxu0 0
        %3421 = vmatpush1.bf16.msra.mxu0 0
        %3422 = vmatprep.subr.bf16.mxu0 0
        %3423 = vmatpush1.bf16.msra.mxu0 0
        %3424 = vmatprep.subr.bf16.mxu0 0
        %3425 = vmatpush1.bf16.msra.mxu0 0
        %3426 = vmatprep.subr.bf16.mxu0 0
        %3427 = vmatpush1.bf16.msra.mxu0 0
        %3428 = vmatprep.subr.bf16.mxu0 0
        %3429 = vmatpush1.bf16.msra.mxu0 0
        %3430 = vmatprep.mubr.bf16.mxu0 0
        %3431 = vmatmul.mubr.bf16.gmra.mrb[0].mxu0 %v3396
        %v3432 = vpop.f32.mrb[0].mxu0
        %v3433 = vadd.f32 %v3381, %v3432
        %v3434 = vpop.f32.mrb[0].mxu0
        %v3435 = vpop.f32.mrb[0].mxu0
        %v3436 = vadd.f32 %v3381, %v3435
        %v3437 = vpop.f32.mrb[0].mxu0
        %3438 = vdwg.mxu0
        %3439 = vst [vmem:[%s20] sm:$0xff] %v3433
        %3440 = vst [vmem:[%s20 + $0x8] sm:$0xff] %v3436
      $region108: #{forward.1} parent=99 // pred_fallthru
        _
      // Predicated region
      $region109: #{forward.1} parent=99 // pred_check
        %p3441 = pneg %p524
      $region110: #{forward.1} parent=99 // pred_check_branch
        %3443 = sbr.rel (%p3441) target = $region112
      $region111: #{forward.1} parent=99 // pred_region
        _
      $region112: #{forward.1} parent=99 // pred_fallthru
        _
      // Predicated region
      $region113: #{forward.1} parent=99 // pred_check
        %p3444 = pneg %p524
      $region114: #{forward.1} parent=99 // pred_check_branch
        %3446 = sbr.rel (%p3444) target = $region116
      $region115: #{forward.1} parent=99 // pred_region
        _
      $region116: #{forward.1} parent=99 // pred_fallthru
        _
    $region100: #{forward.1} parent=5 // pred_fallthru
      _
    %p3447 = scmp.le.s32.totalorder 2, %s26
    // Predicated region
    $region117: #{forward.1} parent=5 // pred_check
      %p3448 = pneg %p3447
    $region118: #{forward.1} parent=5 // pred_check_branch
      %3450 = sbr.rel (%p3448) target = $region120
    $region119: #{forward.1} parent=5 // pred_region
      %s3451 = ssub.s32 %s26, 2
    $region120: #{forward.1} parent=5 // pred_fallthru
      _
  $region6: #{forward.1} parent=0 // loop_footer
    %s30 = sadd.s32 1, %s26
  $region7: #{forward.1} parent=0 // loop_footer_branch
    %25 = sbr.rel target = $region3
  $region8: #{forward.1} parent=0 // loop_exit
    _

</llo_original>
